<compile_context>
chip_gen: v6e
topology: v6e:2x2x1
jax: 0.10.0
libtpu: 0.0.40
codegen_flags: <defaults>
</compile_context>

<pallas_src>
import numpy as np
import jax
import jax.numpy as jnp
from jax.experimental import pallas as pl
from jax.experimental.pallas import tpu as pltpu


# ----------------------------------------------------------------------------
# Pallas kernel: fused  (sum_i x_i @ W1_i) + b1 -> ReLU -> @ W2 + b2 -> ReLU -> @ W3 + b3
# Weights are streamed from HBM inside the body, overlapped with compute.
# ----------------------------------------------------------------------------
def _make_mlp_kernel(n_inputs):
    n = n_inputs

    def kernel(*refs):
        # ---- inputs ----
        xs = refs[:n]                                   # each (B, D_i) f32, VMEM
        b1_ref, b2_ref, b3_ref = refs[n:n + 3]          # (1,H1)/(1,H2)/(1,OUTP) f32, VMEM
        w1_hbm = refs[n + 3:2 * n + 3]                  # each (D_i, H1) bf16, HBM (ANY)
        w2_hbm = refs[2 * n + 3]                        # (H1, H2) bf16, HBM
        w3_hbm = refs[2 * n + 4]                        # (H2, OUTP) bf16, HBM
        o_ref = refs[2 * n + 5]                         # (B, OUTP) f32, VMEM
        # ---- scratch ----
        w1_bufs = refs[2 * n + 6:3 * n + 6]             # VMEM staging for W1 parts
        w2_buf = refs[3 * n + 6]
        w3_buf = refs[3 * n + 7]
        sem = refs[3 * n + 8]                           # DMA semaphores, shape (n+2,)

        # Kick off every weight stream up front; each layer's matmul waits only on
        # the weights it needs, so MXU/VPU work overlaps the remaining HBM traffic.
        w1_cps = [pltpu.make_async_copy(w1_hbm[i], w1_bufs[i], sem.at[i])
                  for i in range(n)]
        w2_cp = pltpu.make_async_copy(w2_hbm, w2_buf, sem.at[n])
        w3_cp = pltpu.make_async_copy(w3_hbm, w3_buf, sem.at[n + 1])
        for cp in w1_cps:
            cp.start()
        w2_cp.start()
        w3_cp.start()

        # Layer 1: sum of per-input partial matmuls over the split K dim
        # (== concat(xs) @ W1).  Bias-first accumulation, f32 accumulator.
        h1 = b1_ref[...]                                # (1, H1) f32, broadcasts over B
        for i in range(n):
            w1_cps[i].wait()
            h1 = h1 + jnp.dot(xs[i][...].astype(jnp.bfloat16), w1_bufs[i][...],
                              preferred_element_type=jnp.float32)
        h1 = jnp.maximum(h1, 0.0)                       # ReLU in f32

        # Layer 2
        w2_cp.wait()
        h2 = jnp.dot(h1.astype(jnp.bfloat16), w2_buf[...],
                     preferred_element_type=jnp.float32) + b2_ref[...]
        h2 = jnp.maximum(h2, 0.0)

        # Output layer (lane-padded to 128 -> unmasked vector stores), stored f32.
        w3_cp.wait()
        o_ref[...] = jnp.dot(h2.astype(jnp.bfloat16), w3_buf[...],
                             preferred_element_type=jnp.float32) + b3_ref[...]

    return kernel


def _fc_forward_pallas(xs_flat, kparams):
    """xs_flat: list of (B, D_i) f32 arrays.  kparams: kernel-ready params."""
    B = xs_flat[0].shape[0]
    n = len(xs_flat)
    w1_parts = kparams["W1_parts"]
    H1 = w1_parts[0].shape[1]
    H2 = kparams["W2"].shape[1]
    out_padded = kparams["W3"].shape[1]

    vmem = pl.BlockSpec(memory_space=pltpu.MemorySpace.VMEM)
    hbm = pl.BlockSpec(memory_space=pl.ANY)

    args = (list(xs_flat)
            + [kparams["b1"], kparams["b2"], kparams["b3"]]
            + list(w1_parts)
            + [kparams["W2"], kparams["W3"]])
    in_specs = [vmem] * (n + 3) + [hbm] * (n + 2)

    scratch_shapes = ([pltpu.VMEM(w.shape, jnp.bfloat16) for w in w1_parts]
                      + [pltpu.VMEM((H1, H2), jnp.bfloat16),
                         pltpu.VMEM((H2, out_padded), jnp.bfloat16),
                         pltpu.SemaphoreType.DMA((n + 2,))])

    return pl.pallas_call(
        _make_mlp_kernel(n),
        out_shape=jax.ShapeDtypeStruct((B, out_padded), jnp.float32),
        in_specs=in_specs,
        out_specs=vmem,
        scratch_shapes=scratch_shapes,
    )(*args)


# ----------------------------------------------------------------------------
# MultiInputNetwork forward
# ----------------------------------------------------------------------------
def multi_input_network_forward(inputs, kparams):
    """inputs: list of arrays, each (B, ...).  Flatten each row-major (same as
    torch .view(B, -1)) and feed the pieces directly into the fused MLP kernel.
    Only the output lane-padding is sliced away; no batch pad/slice."""
    B = inputs[0].shape[0]
    xs = [jnp.reshape(x, (B, -1)) for x in inputs]      # f32; bf16 cast happens in-kernel
    out_padded = _fc_forward_pallas(xs, kparams)
    return out_padded[:, :kparams["dim_out"]]


# ----------------------------------------------------------------------------
# Parameter init (PyTorch nn.Linear-style uniform(-1/sqrt(fan_in), ...)) and
# one-time conversion into kernel-ready form (bf16 weights, split W1, padded W3/b3).
# ----------------------------------------------------------------------------
def init_params(key, dim_in, layers, dim_out):
    dims = [dim_in] + list(layers) + [dim_out]
    params = {}
    for i in range(len(dims) - 1):
        fan_in, fan_out = dims[i], dims[i + 1]
        key, kw, kb = jax.random.split(key, 3)
        bound = 1.0 / np.sqrt(float(fan_in))
        params[f"W{i+1}"] = jax.random.uniform(kw, (fan_in, fan_out), jnp.float32, -bound, bound)
        params[f"b{i+1}"] = jax.random.uniform(kb, (1, fan_out), jnp.float32, -bound, bound)
    return params


def prepare_kernel_params(params, input_dims, lane=128):
    """Cast weights to bf16, split W1 per input, zero-pad the output layer to a
    lane-dense width.  Call once; reuse for every forward."""
    dim_out = params["W3"].shape[1]
    pad = (-dim_out) % lane
    W3p = jnp.pad(params["W3"], ((0, 0), (0, pad)))
    b3p = jnp.pad(params["b3"], ((0, 0), (0, pad)))
    split_pts = list(np.cumsum(np.array(input_dims))[:-1])
    W1_parts = tuple(w.astype(jnp.bfloat16)
                     for w in jnp.split(params["W1"], split_pts, axis=0))
    return {
        "W1_parts": W1_parts,
        "b1": params["b1"],                              # biases stay f32 (tiny)
        "W2": params["W2"].astype(jnp.bfloat16),
        "b2": params["b2"],
        "W3": W3p.astype(jnp.bfloat16),
        "b3": b3p,
        "dim_out": dim_out,
    }


if __name__ == "__main__":
    key = jax.random.PRNGKey(0)

    # Two image-like inputs (state + goal in GCSL), NCHW.
    B = 2
    input_shapes = [(4, 16, 16), (4, 16, 16)]
    dim_out = 10
    layers = [512, 512]

    k1, k2, kp = jax.random.split(key, 3)
    x1 = jax.random.normal(k1, (B,) + input_shapes[0], jnp.float32)
    x2 = jax.random.normal(k2, (B,) + input_shapes[1], jnp.float32)

    input_dims = [int(np.prod(s)) for s in input_shapes]        # [1024, 1024]
    dim_in = sum(input_dims)                                    # 2048
    params = init_params(kp, dim_in, layers, dim_out)
    kparams = prepare_kernel_params(params, input_dims)

    out = multi_input_network_forward([x1, x2], kparams)
    out = jax.block_until_ready(out)

    # Pure-JAX reference emulating the kernel's bf16 weight/activation casts
    # (f32 accumulation, f32 bias/ReLU) for a tight correctness check.
    def as_bf16_f32(a):
        return a.astype(jnp.bfloat16).astype(jnp.float32)

    embed = jnp.concatenate([x1.reshape(B, -1), x2.reshape(B, -1)], axis=1)
    hp = jax.lax.Precision.HIGHEST
    h = as_bf16_f32(embed)
    h = jnp.maximum(jnp.dot(h, as_bf16_f32(params["W1"]), precision=hp) + params["b1"], 0.0)
    h = as_bf16_f32(h)
    h = jnp.maximum(jnp.dot(h, as_bf16_f32(params["W2"]), precision=hp) + params["b2"], 0.0)
    h = as_bf16_f32(h)
    ref = jnp.dot(h, as_bf16_f32(params["W3"]), precision=hp) + params["b3"]

    assert out.shape == (B, dim_out)
    assert jnp.allclose(out, ref, atol=1e-4, rtol=1e-4)

    print("KERNEL_OK")
</pallas_src>

<mosaic_0001>
module attributes {stable_mosaic.version = 11 : i64} {
  func.func @kernel(%arg0: memref<2x1024xf32, #tpu.memory_space<vmem>>, %arg1: memref<2x1024xf32, #tpu.memory_space<vmem>>, %arg2: memref<1x512xf32, #tpu.memory_space<vmem>>, %arg3: memref<1x512xf32, #tpu.memory_space<vmem>>, %arg4: memref<1x128xf32, #tpu.memory_space<vmem>>, %arg5: memref<1024x512xbf16, #tpu.memory_space<any>>, %arg6: memref<1024x512xbf16, #tpu.memory_space<any>>, %arg7: memref<512x512xbf16, #tpu.memory_space<any>>, %arg8: memref<512x128xbf16, #tpu.memory_space<any>>, %arg9: memref<2x128xf32, #tpu.memory_space<vmem>>, %arg10: memref<1024x512xbf16, #tpu.memory_space<vmem>>, %arg11: memref<1024x512xbf16, #tpu.memory_space<vmem>>, %arg12: memref<512x512xbf16, #tpu.memory_space<vmem>>, %arg13: memref<512x128xbf16, #tpu.memory_space<vmem>>, %arg14: memref<4x!tpu.dma_semaphore, #tpu.memory_space<semaphore_mem>>) attributes {dimension_semantics = [], scalar_prefetch = 0 : i64, scratch_operands = 5 : i64, tpu.core_type = #tpu.core_type<tc>} {
    %c0_i32 = arith.constant 0 : i32
    %0 = tpu.memref_slice %arg14[%c0_i32] : memref<4x!tpu.dma_semaphore, #tpu.memory_space<semaphore_mem>> -> memref<1x!tpu.dma_semaphore, #tpu.memory_space<semaphore_mem>>
    %1 = tpu.memref_squeeze %0 : memref<1x!tpu.dma_semaphore, #tpu.memory_space<semaphore_mem>> -> memref<!tpu.dma_semaphore, #tpu.memory_space<semaphore_mem>>
    tpu.enqueue_dma source(%arg5 : memref<1024x512xbf16, #tpu.memory_space<any>>) target(%arg10 : memref<1024x512xbf16, #tpu.memory_space<vmem>>) target_semaphore(%1 : memref<!tpu.dma_semaphore, #tpu.memory_space<semaphore_mem>>)
    %c1_i32 = arith.constant 1 : i32
    %2 = tpu.memref_slice %arg14[%c1_i32] : memref<4x!tpu.dma_semaphore, #tpu.memory_space<semaphore_mem>> -> memref<1x!tpu.dma_semaphore, #tpu.memory_space<semaphore_mem>>
    %3 = tpu.memref_squeeze %2 : memref<1x!tpu.dma_semaphore, #tpu.memory_space<semaphore_mem>> -> memref<!tpu.dma_semaphore, #tpu.memory_space<semaphore_mem>>
    tpu.enqueue_dma source(%arg6 : memref<1024x512xbf16, #tpu.memory_space<any>>) target(%arg11 : memref<1024x512xbf16, #tpu.memory_space<vmem>>) target_semaphore(%3 : memref<!tpu.dma_semaphore, #tpu.memory_space<semaphore_mem>>)
    %c2_i32 = arith.constant 2 : i32
    %4 = tpu.memref_slice %arg14[%c2_i32] : memref<4x!tpu.dma_semaphore, #tpu.memory_space<semaphore_mem>> -> memref<1x!tpu.dma_semaphore, #tpu.memory_space<semaphore_mem>>
    %5 = tpu.memref_squeeze %4 : memref<1x!tpu.dma_semaphore, #tpu.memory_space<semaphore_mem>> -> memref<!tpu.dma_semaphore, #tpu.memory_space<semaphore_mem>>
    tpu.enqueue_dma source(%arg7 : memref<512x512xbf16, #tpu.memory_space<any>>) target(%arg12 : memref<512x512xbf16, #tpu.memory_space<vmem>>) target_semaphore(%5 : memref<!tpu.dma_semaphore, #tpu.memory_space<semaphore_mem>>)
    %c3_i32 = arith.constant 3 : i32
    %6 = tpu.memref_slice %arg14[%c3_i32] : memref<4x!tpu.dma_semaphore, #tpu.memory_space<semaphore_mem>> -> memref<1x!tpu.dma_semaphore, #tpu.memory_space<semaphore_mem>>
    %7 = tpu.memref_squeeze %6 : memref<1x!tpu.dma_semaphore, #tpu.memory_space<semaphore_mem>> -> memref<!tpu.dma_semaphore, #tpu.memory_space<semaphore_mem>>
    tpu.enqueue_dma source(%arg8 : memref<512x128xbf16, #tpu.memory_space<any>>) target(%arg13 : memref<512x128xbf16, #tpu.memory_space<vmem>>) target_semaphore(%7 : memref<!tpu.dma_semaphore, #tpu.memory_space<semaphore_mem>>)
    %c0 = arith.constant 0 : index
    %c0_0 = arith.constant 0 : index
    %8 = vector.load %arg2[%c0, %c0_0] : memref<1x512xf32, #tpu.memory_space<vmem>>, vector<1x512xf32>
    %c0_i32_1 = arith.constant 0 : i32
    %9 = tpu.memref_slice %arg14[%c0_i32_1] : memref<4x!tpu.dma_semaphore, #tpu.memory_space<semaphore_mem>> -> memref<1x!tpu.dma_semaphore, #tpu.memory_space<semaphore_mem>>
    %10 = tpu.memref_squeeze %9 : memref<1x!tpu.dma_semaphore, #tpu.memory_space<semaphore_mem>> -> memref<!tpu.dma_semaphore, #tpu.memory_space<semaphore_mem>>
    tpu.wait_dma2 semaphore(%10 : memref<!tpu.dma_semaphore, #tpu.memory_space<semaphore_mem>>) src(%arg5 : memref<1024x512xbf16, #tpu.memory_space<any>>) dst(%arg10 : memref<1024x512xbf16, #tpu.memory_space<vmem>>)
    %c0_2 = arith.constant 0 : index
    %c0_3 = arith.constant 0 : index
    %11 = vector.load %arg0[%c0_2, %c0_3] : memref<2x1024xf32, #tpu.memory_space<vmem>>, vector<2x1024xf32>
    %12 = arith.truncf %11 : vector<2x1024xf32> to vector<2x1024xbf16>
    %c0_4 = arith.constant 0 : index
    %c0_5 = arith.constant 0 : index
    %13 = vector.load %arg10[%c0_4, %c0_5] : memref<1024x512xbf16, #tpu.memory_space<vmem>>, vector<1024x512xbf16>
    %cst = arith.constant dense<0.000000e+00> : vector<2x512xf32>
    %14 = tpu.matmul %12, %13, %cst {dimension_numbers = #tpu.dot_dimension_numbers<[1], [0], [0], [1], [0, 0, 1, 1], [], []>} : vector<2x1024xbf16>, vector<1024x512xbf16>, vector<2x512xf32> -> vector<2x512xf32>
    %15 = vector.broadcast %8 : vector<1x512xf32> to vector<2x512xf32>
    %16 = arith.addf %15, %14 : vector<2x512xf32>
    %c1_i32_6 = arith.constant 1 : i32
    %17 = tpu.memref_slice %arg14[%c1_i32_6] : memref<4x!tpu.dma_semaphore, #tpu.memory_space<semaphore_mem>> -> memref<1x!tpu.dma_semaphore, #tpu.memory_space<semaphore_mem>>
    %18 = tpu.memref_squeeze %17 : memref<1x!tpu.dma_semaphore, #tpu.memory_space<semaphore_mem>> -> memref<!tpu.dma_semaphore, #tpu.memory_space<semaphore_mem>>
    tpu.wait_dma2 semaphore(%18 : memref<!tpu.dma_semaphore, #tpu.memory_space<semaphore_mem>>) src(%arg6 : memref<1024x512xbf16, #tpu.memory_space<any>>) dst(%arg11 : memref<1024x512xbf16, #tpu.memory_space<vmem>>)
    %c0_7 = arith.constant 0 : index
    %c0_8 = arith.constant 0 : index
    %19 = vector.load %arg1[%c0_7, %c0_8] : memref<2x1024xf32, #tpu.memory_space<vmem>>, vector<2x1024xf32>
    %20 = arith.truncf %19 : vector<2x1024xf32> to vector<2x1024xbf16>
    %c0_9 = arith.constant 0 : index
    %c0_10 = arith.constant 0 : index
    %21 = vector.load %arg11[%c0_9, %c0_10] : memref<1024x512xbf16, #tpu.memory_space<vmem>>, vector<1024x512xbf16>
    %cst_11 = arith.constant dense<0.000000e+00> : vector<2x512xf32>
    %22 = tpu.matmul %20, %21, %cst_11 {dimension_numbers = #tpu.dot_dimension_numbers<[1], [0], [0], [1], [0, 0, 1, 1], [], []>} : vector<2x1024xbf16>, vector<1024x512xbf16>, vector<2x512xf32> -> vector<2x512xf32>
    %23 = arith.addf %16, %22 : vector<2x512xf32>
    %cst_12 = arith.constant 0.000000e+00 : f32
    %24 = vector.broadcast %cst_12 : f32 to vector<2x512xf32>
    %25 = arith.maximumf %23, %24 : vector<2x512xf32>
    %c2_i32_13 = arith.constant 2 : i32
    %26 = tpu.memref_slice %arg14[%c2_i32_13] : memref<4x!tpu.dma_semaphore, #tpu.memory_space<semaphore_mem>> -> memref<1x!tpu.dma_semaphore, #tpu.memory_space<semaphore_mem>>
    %27 = tpu.memref_squeeze %26 : memref<1x!tpu.dma_semaphore, #tpu.memory_space<semaphore_mem>> -> memref<!tpu.dma_semaphore, #tpu.memory_space<semaphore_mem>>
    tpu.wait_dma2 semaphore(%27 : memref<!tpu.dma_semaphore, #tpu.memory_space<semaphore_mem>>) src(%arg7 : memref<512x512xbf16, #tpu.memory_space<any>>) dst(%arg12 : memref<512x512xbf16, #tpu.memory_space<vmem>>)
    %28 = arith.truncf %25 : vector<2x512xf32> to vector<2x512xbf16>
    %c0_14 = arith.constant 0 : index
    %c0_15 = arith.constant 0 : index
    %29 = vector.load %arg12[%c0_14, %c0_15] : memref<512x512xbf16, #tpu.memory_space<vmem>>, vector<512x512xbf16>
    %cst_16 = arith.constant dense<0.000000e+00> : vector<2x512xf32>
    %30 = tpu.matmul %28, %29, %cst_16 {dimension_numbers = #tpu.dot_dimension_numbers<[1], [0], [0], [1], [0, 0, 1, 1], [], []>} : vector<2x512xbf16>, vector<512x512xbf16>, vector<2x512xf32> -> vector<2x512xf32>
    %c0_17 = arith.constant 0 : index
    %c0_18 = arith.constant 0 : index
    %31 = vector.load %arg3[%c0_17, %c0_18] : memref<1x512xf32, #tpu.memory_space<vmem>>, vector<1x512xf32>
    %32 = vector.broadcast %31 : vector<1x512xf32> to vector<2x512xf32>
    %33 = arith.addf %30, %32 : vector<2x512xf32>
    %cst_19 = arith.constant 0.000000e+00 : f32
    %34 = vector.broadcast %cst_19 : f32 to vector<2x512xf32>
    %35 = arith.maximumf %33, %34 : vector<2x512xf32>
    %c3_i32_20 = arith.constant 3 : i32
    %36 = tpu.memref_slice %arg14[%c3_i32_20] : memref<4x!tpu.dma_semaphore, #tpu.memory_space<semaphore_mem>> -> memref<1x!tpu.dma_semaphore, #tpu.memory_space<semaphore_mem>>
    %37 = tpu.memref_squeeze %36 : memref<1x!tpu.dma_semaphore, #tpu.memory_space<semaphore_mem>> -> memref<!tpu.dma_semaphore, #tpu.memory_space<semaphore_mem>>
    tpu.wait_dma2 semaphore(%37 : memref<!tpu.dma_semaphore, #tpu.memory_space<semaphore_mem>>) src(%arg8 : memref<512x128xbf16, #tpu.memory_space<any>>) dst(%arg13 : memref<512x128xbf16, #tpu.memory_space<vmem>>)
    %38 = arith.truncf %35 : vector<2x512xf32> to vector<2x512xbf16>
    %c0_21 = arith.constant 0 : index
    %c0_22 = arith.constant 0 : index
    %39 = vector.load %arg13[%c0_21, %c0_22] : memref<512x128xbf16, #tpu.memory_space<vmem>>, vector<512x128xbf16>
    %cst_23 = arith.constant dense<0.000000e+00> : vector<2x128xf32>
    %40 = tpu.matmul %38, %39, %cst_23 {dimension_numbers = #tpu.dot_dimension_numbers<[1], [0], [0], [1], [0, 0, 1, 1], [], []>} : vector<2x512xbf16>, vector<512x128xbf16>, vector<2x128xf32> -> vector<2x128xf32>
    %c0_24 = arith.constant 0 : index
    %c0_25 = arith.constant 0 : index
    %41 = vector.load %arg4[%c0_24, %c0_25] : memref<1x128xf32, #tpu.memory_space<vmem>>, vector<1x128xf32>
    %42 = vector.broadcast %41 : vector<1x128xf32> to vector<2x128xf32>
    %43 = arith.addf %40, %42 : vector<2x128xf32>
    %c0_26 = arith.constant 0 : index
    %c0_27 = arith.constant 0 : index
    %44 = vector.load %arg9[%c0_26, %c0_27] : memref<2x128xf32, #tpu.memory_space<vmem>>, vector<2x128xf32>
    tpu.vector_store %arg9[%c0_26, %c0_27], %43 {strides = array<i32>} : memref<2x128xf32, #tpu.memory_space<vmem>>, vector<2x128xf32>,
    return
  }
}

</mosaic_0001>

<llo_original>
// kernel: tpu_custom_call.1
$region0: #{tpu_custom_call.1}
  #allocation0 [shape = 'u32[]', space=smem, size = 0x4, offset = 0x4, fixed_abs, tag = 'smem constant byte address 0x4 - core index']
  #allocation1 [shape = 'u32[144,128]{1,0:T(1,128)}', space=vmem, size = 0x12000, scoped, tag = 'internal scratch']
  #allocation2 [shape = 'bf16[1024,512]{1,0:T(8,128)(2,1)}', space=vmem, size = 0x100000, scoped, tag = 'scratch operand']
  #allocation3 [shape = 'bf16[1024,512]{1,0:T(8,128)(2,1)}', space=vmem, size = 0x100000, scoped, tag = 'scratch operand']
  #allocation4 [shape = 'bf16[512,512]{1,0:T(8,128)(2,1)}', space=vmem, size = 0x80000, scoped, tag = 'scratch operand']
  #allocation5 [shape = 'bf16[512,128]{1,0:T(8,128)(2,1)}', space=vmem, size = 0x20000, scoped, tag = 'scratch operand']
  #allocation6 [shape = 's32[4]{0}', space=sflag, size = 0x10, scoped, tag = 'scratch operand']
  #allocation14 [shape = 's32[]', space=sflag, size = 0x4, offset = 0, fixed_abs, tag = 'sflag constant byte address 0x0 - dummy sync flag']
  #allocation15 [shape = 's32[]', space=sflag, size = 0x4, offset = 0, fixed_abs, tag = 'sflag constant byte address 0x0 - dummy sync flag']
  #allocation16 [shape = 'u32[]', space=smem, size = 0x4, offset = 0x44, fixed_abs, tag = 'smem constant byte address 0x44 - assertion arg 0']
  #allocation17 [shape = 'u32[]', space=smem, size = 0x4, offset = 0x48, fixed_abs, tag = 'smem constant byte address 0x48 - assertion arg 1']
  #allocation18 [shape = 's32[]', space=sflag, size = 0x4, offset = 0, fixed_abs, tag = 'sflag constant byte address 0x0 - dummy sync flag']
  #allocation19 [shape = 's32[]', space=sflag, size = 0x4, offset = 0, fixed_abs, tag = 'sflag constant byte address 0x0 - dummy sync flag']
  #allocation20 [shape = 's32[]', space=sflag, size = 0x4, offset = 0, fixed_abs, tag = 'sflag constant byte address 0x0 - dummy sync flag']
  #allocation21 [shape = 's32[]', space=sflag, size = 0x4, offset = 0, fixed_abs, tag = 'sflag constant byte address 0x0 - dummy sync flag']
  #allocation22 [shape = 's32[]', space=sflag, size = 0x4, offset = 0, fixed_abs, tag = 'sflag constant byte address 0x0 - dummy sync flag']
  #allocation23 [shape = 's32[]', space=sflag, size = 0x4, offset = 0, fixed_abs, tag = 'sflag constant byte address 0x0 - dummy sync flag']
  %s0 = inlined_call_operand.hbm [shape: f32[2,1024], index: 0, kind: input, shape index: {}]
  %s1 = inlined_call_operand.hbm [shape: f32[2,1024], index: 1, kind: input, shape index: {}]
  %s2 = inlined_call_operand.hbm [shape: f32[1,512], index: 2, kind: input, shape index: {}]
  %s3 = inlined_call_operand.vmem [shape: f32[1,512], index: 3, kind: input, shape index: {}]
  %s4 = inlined_call_operand.vmem [shape: f32[1,128], index: 4, kind: input, shape index: {}]
  %s5 = inlined_call_operand.hbm [shape: bf16[1024,512], index: 5, kind: input, shape index: {}]
  %s6 = inlined_call_operand.hbm [shape: bf16[1024,512], index: 6, kind: input, shape index: {}]
  %s7 = inlined_call_operand.hbm [shape: bf16[512,512], index: 7, kind: input, shape index: {}]
  %s8 = inlined_call_operand.hbm [shape: bf16[512,128], index: 8, kind: input, shape index: {}]
  %s9 = inlined_call_operand.hbm [shape: f32[2,128], index: 9, kind: output, shape index: {}]
  %s10 = sld [smem:[#allocation0]]
  $region58: #{tpu_custom_call.1} parent=0
    _
  %s12 = ssub.s32 1, %s10
  %s13 = scalar_select 0, %s12, %s10
  $region1: #{tpu_custom_call.1} parent=0
    #allocation7 [shape = 'u8[8192]{0}', space=vmem, size = 0x2000, scoped, tag = 'input window, operand 0, single buffered']
    #allocation8 [shape = 's32[1]{0}', space=sflag, size = 0x4, scoped, tag = 'scoped memory for tpu_custom_call.1']
    #allocation9 [shape = 's32[1]{0}', space=sflag, size = 0x4, scoped, tag = 'scoped memory for tpu_custom_call.1']
    #allocation10 [shape = 'u8[8192]{0}', space=vmem, size = 0x2000, scoped, tag = 'input window, operand 1, single buffered']
    #allocation11 [shape = 's32[1]{0}', space=sflag, size = 0x4, scoped, tag = 'scoped memory for tpu_custom_call.1']
    #allocation12 [shape = 'u8[2048]{0}', space=vmem, size = 0x800, scoped, tag = 'input window, operand 2, single buffered']
    #allocation13 [shape = 'u8[1024]{0}', space=vmem, size = 0x400, scoped, tag = 'output window, operand 0, single buffered']
    %14 = vsyncpa [#allocation8], 0
    %15 = vsyncpa [#allocation11], 0
    %16 = vsyncpa [#allocation9], 0
    // Predicated region
    $region2: #{tpu_custom_call.1} parent=1 // pred_check
      _
    $region3: #{tpu_custom_call.1} parent=1 // pred_check_branch
      %18 = sbr.rel (0) target = $region5
    $region4: #{tpu_custom_call.1} parent=1 // pred_region
      %s20 = ssub.s32 256, 256
      %21 = vsyncadd [#allocation8], %s20
      %s23 = sshll.u32 [#allocation7], 4
      %s24 = int_to_ptr.vmem [resolvable:$true] %s23
      %26 = dma.hbm_to_vmem [thread:$0]  %s0, 256, %s24, [#allocation8]
    $region5: #{tpu_custom_call.1} parent=1 // pred_fallthru
      _
    // Predicated region
    $region6: #{tpu_custom_call.1} parent=1 // pred_check
      _
    $region7: #{tpu_custom_call.1} parent=1 // pred_check_branch
      %28 = sbr.rel (0) target = $region9
    $region8: #{tpu_custom_call.1} parent=1 // pred_region
      %s30 = ssub.s32 256, 256
      %31 = vsyncadd [#allocation11], %s30
      %s33 = sshll.u32 [#allocation10], 4
      %s34 = int_to_ptr.vmem [resolvable:$true] %s33
      %36 = dma.hbm_to_vmem [thread:$0]  %s1, 256, %s34, [#allocation11]
    $region9: #{tpu_custom_call.1} parent=1 // pred_fallthru
      _
    // Predicated region
    $region10: #{tpu_custom_call.1} parent=1 // pred_check
      _
    $region11: #{tpu_custom_call.1} parent=1 // pred_check_branch
      %38 = sbr.rel (0) target = $region13
    $region12: #{tpu_custom_call.1} parent=1 // pred_region
      %s40 = ssub.s32 64, 64
      %41 = vsyncadd [#allocation11], %s40
      %s43 = sshll.u32 [#allocation12], 4
      %s44 = int_to_ptr.vmem [resolvable:$true] %s43
      %46 = dma.hbm_to_vmem [thread:$0]  %s2, 64, %s44, [#allocation11]
    $region13: #{tpu_custom_call.1} parent=1 // pred_fallthru
      _
    // Predicated region
    $region14: #{tpu_custom_call.1} parent=1 // pred_check
      _
    $region15: #{tpu_custom_call.1} parent=1 // pred_check_branch
      %48 = sbr.rel (0) target = $region17
    $region16: #{tpu_custom_call.1} parent=1 // pred_region
      _
    $region17: #{tpu_custom_call.1} parent=1 // pred_fallthru
      _
    // Predicated region
    $region18: #{tpu_custom_call.1} parent=1 // pred_check
      _
    $region19: #{tpu_custom_call.1} parent=1 // pred_check_branch
      %50 = sbr.rel (0) target = $region21
    $region20: #{tpu_custom_call.1} parent=1 // pred_region
      _
    $region21: #{tpu_custom_call.1} parent=1 // pred_fallthru
      _
    // Predicated region
    $region22: #{tpu_custom_call.1} parent=1 // pred_check
      _
    $region23: #{tpu_custom_call.1} parent=1 // pred_check_branch
      %52 = sbr.rel (0) target = $region25
    $region24: #{tpu_custom_call.1} parent=1 // pred_region
      %53 = dma.done [#allocation8], 256
    $region25: #{tpu_custom_call.1} parent=1 // pred_fallthru
      _
    // Predicated region
    $region26: #{tpu_custom_call.1} parent=1 // pred_check
      _
    $region27: #{tpu_custom_call.1} parent=1 // pred_check_branch
      %55 = sbr.rel (0) target = $region29
    $region28: #{tpu_custom_call.1} parent=1 // pred_region
      %56 = dma.done [#allocation11], 256
    $region29: #{tpu_custom_call.1} parent=1 // pred_fallthru
      _
    // Predicated region
    $region30: #{tpu_custom_call.1} parent=1 // pred_check
      _
    $region31: #{tpu_custom_call.1} parent=1 // pred_check_branch
      %58 = sbr.rel (0) target = $region33
    $region32: #{tpu_custom_call.1} parent=1 // pred_region
      %59 = dma.done [#allocation11], 64
    $region33: #{tpu_custom_call.1} parent=1 // pred_fallthru
      _
    // Predicated region
    $region34: #{tpu_custom_call.1} parent=1 // pred_check
      _
    $region35: #{tpu_custom_call.1} parent=1 // pred_check_branch
      %62 = sbr.rel target = $region37
    $region36: #{tpu_custom_call.1} parent=1 // pred_region
      %63 = sst [smem:[#allocation16]] [#allocation15]
      %64 = sst [smem:[#allocation17]] [#allocation14]
    $region37: #{tpu_custom_call.1} parent=1 // pred_fallthru
      _
    %66 = shalt.err (0)
    %s68 = sshll.u32 [#allocation2], 4
    %s69 = int_to_ptr.vmem [resolvable:$true] %s68
    %71 = dma.hbm_to_vmem [thread:$0]  %s5, 32768, %s69, [#allocation6]
    %s72 = scalar_lea.sflag [#allocation6], 1
    // Predicated region
    $region38: #{tpu_custom_call.1} parent=1 // pred_check
      _
    $region39: #{tpu_custom_call.1} parent=1 // pred_check_branch
      %74 = sbr.rel target = $region41
    $region40: #{tpu_custom_call.1} parent=1 // pred_region
      %75 = sst [smem:[#allocation16]] [#allocation19]
      %76 = sst [smem:[#allocation17]] [#allocation18]
    $region41: #{tpu_custom_call.1} parent=1 // pred_fallthru
      _
    %78 = shalt.err (0)
    %s80 = sshll.u32 [#allocation3], 4
    %s81 = int_to_ptr.vmem [resolvable:$true] %s80
    %83 = dma.hbm_to_vmem [thread:$0]  %s6, 32768, %s81, %s72
    %s84 = scalar_lea.sflag [#allocation6], 2
    // Predicated region
    $region42: #{tpu_custom_call.1} parent=1 // pred_check
      _
    $region43: #{tpu_custom_call.1} parent=1 // pred_check_branch
      %86 = sbr.rel target = $region45
    $region44: #{tpu_custom_call.1} parent=1 // pred_region
      %87 = sst [smem:[#allocation16]] [#allocation21]
      %88 = sst [smem:[#allocation17]] [#allocation20]
    $region45: #{tpu_custom_call.1} parent=1 // pred_fallthru
      _
    %90 = shalt.err (0)
    %s92 = sshll.u32 [#allocation4], 4
    %s93 = int_to_ptr.vmem [resolvable:$true] %s92
    %95 = dma.hbm_to_vmem [thread:$0]  %s7, 16384, %s93, %s84
    %s96 = scalar_lea.sflag [#allocation6], 3
    // Predicated region
    $region46: #{tpu_custom_call.1} parent=1 // pred_check
      _
    $region47: #{tpu_custom_call.1} parent=1 // pred_check_branch
      %98 = sbr.rel target = $region49
    $region48: #{tpu_custom_call.1} parent=1 // pred_region
      %99 = sst [smem:[#allocation16]] [#allocation23]
      %100 = sst [smem:[#allocation17]] [#allocation22]
    $region49: #{tpu_custom_call.1} parent=1 // pred_fallthru
      _
    %102 = shalt.err (0)
    %s104 = sshll.u32 [#allocation5], 4
    %s105 = int_to_ptr.vmem [resolvable:$true] %s104
    %107 = dma.hbm_to_vmem [thread:$0]  %s8, 4096, %s105, %s96
    %v108 = vld [vmem:[#allocation12] sm:$0xf]
    %s109 = smul.u32 4, 128
    %s110 = smul.u32 %s109, 4
    %s111 = sshll.u32 %s110, 4
    %112 = dma.done [#allocation6], %s111
    %v113 = vld [vmem:[#allocation7] sm:$0xff]
    %v114 = vld [vmem:[#allocation7 + $0x8] sm:$0xff]
    %v117 = vcombine.high %v113, %v113
    %v119 = vunpack.c.l.s4 1983009808
    %v120 = vunpack.c.0.s8 %v119
    %v121 = vlaneseq
    %v122 = vshrl.u32 %v121, 7
    %v123 = vsub.s32 %v120, %v122
    %v124 = vrot.slane %v113, %v123
    %v126 = vunpack.c.l.s4 1983009808
    %v127 = vunpack.c.0.s8 %v126
    %v128 = vlaneseq
    %v129 = vshrl.u32 %v128, 7
    %v130 = vsub.s32 %v127, %v129
    %v131 = vrot.slane %v117, %v130
    %v132 = vcombine.high %v124, %v124
    %v133 = vcombine.high %v131, %v131
    %v134 = vcombine.high %v114, %v114
    %v136 = vunpack.c.l.s4 1983009808
    %v137 = vunpack.c.0.s8 %v136
    %v138 = vlaneseq
    %v139 = vshrl.u32 %v138, 7
    %v140 = vsub.s32 %v137, %v139
    %v141 = vrot.slane %v114, %v140
    %v143 = vunpack.c.l.s4 1983009808
    %v144 = vunpack.c.0.s8 %v143
    %v145 = vlaneseq
    %v146 = vshrl.u32 %v145, 7
    %v147 = vsub.s32 %v144, %v146
    %v148 = vrot.slane %v134, %v147
    %v149 = vcombine.high %v141, %v141
    %v150 = vcombine.high %v148, %v148
    %v159 = vpack.c.bf16 %v124, %v124
    %v160 = vpack.c.bf16 %v132, %v132
    %v161 = vpack.c.bf16 %v131, %v131
    %v162 = vpack.c.bf16 %v133, %v133
    %v163 = vpack.c.bf16 %v141, %v141
    %v164 = vpack.c.bf16 %v149, %v149
    %v165 = vpack.c.bf16 %v148, %v148
    %v166 = vpack.c.bf16 %v150, %v150
    %v167 = vld [vmem:[#allocation2] sm:$0xff]
    %v168 = vld [vmem:[#allocation2 + $0x8] sm:$0xff]
    %v169 = vld [vmem:[#allocation2 + $0x10] sm:$0xff]
    %v170 = vld [vmem:[#allocation2 + $0x18] sm:$0xff]
    %v171 = vld [vmem:[#allocation2 + $0x20] sm:$0xff]
    %v172 = vld [vmem:[#allocation2 + $0x28] sm:$0xff]
    %v173 = vld [vmem:[#allocation2 + $0x30] sm:$0xff]
    %v174 = vld [vmem:[#allocation2 + $0x38] sm:$0xff]
    %v175 = vld [vmem:[#allocation2 + $0x40] sm:$0xff]
    %v176 = vld [vmem:[#allocation2 + $0x48] sm:$0xff]
    %v177 = vld [vmem:[#allocation2 + $0x50] sm:$0xff]
    %v178 = vld [vmem:[#allocation2 + $0x58] sm:$0xff]
    %v179 = vld [vmem:[#allocation2 + $0x60] sm:$0xff]
    %v180 = vld [vmem:[#allocation2 + $0x68] sm:$0xff]
    %v181 = vld [vmem:[#allocation2 + $0x70] sm:$0xff]
    %v182 = vld [vmem:[#allocation2 + $0x78] sm:$0xff]
    %v183 = vld [vmem:[#allocation2 + $0x80] sm:$0xff]
    %v184 = vld [vmem:[#allocation2 + $0x88] sm:$0xff]
    %v185 = vld [vmem:[#allocation2 + $0x90] sm:$0xff]
    %v186 = vld [vmem:[#allocation2 + $0x98] sm:$0xff]
    %v187 = vld [vmem:[#allocation2 + $0xa0] sm:$0xff]
    %v188 = vld [vmem:[#allocation2 + $0xa8] sm:$0xff]
    %v189 = vld [vmem:[#allocation2 + $0xb0] sm:$0xff]
    %v190 = vld [vmem:[#allocation2 + $0xb8] sm:$0xff]
    %v191 = vld [vmem:[#allocation2 + $0xc0] sm:$0xff]
    %v192 = vld [vmem:[#allocation2 + $0xc8] sm:$0xff]
    %v193 = vld [vmem:[#allocation2 + $0xd0] sm:$0xff]
    %v194 = vld [vmem:[#allocation2 + $0xd8] sm:$0xff]
    %v195 = vld [vmem:[#allocation2 + $0xe0] sm:$0xff]
    %v196 = vld [vmem:[#allocation2 + $0xe8] sm:$0xff]
    %v197 = vld [vmem:[#allocation2 + $0xf0] sm:$0xff]
    %v198 = vld [vmem:[#allocation2 + $0xf8] sm:$0xff]
    %v199 = vld [vmem:[#allocation2 + $0x100] sm:$0xff]
    %v200 = vld [vmem:[#allocation2 + $0x108] sm:$0xff]
    %v201 = vld [vmem:[#allocation2 + $0x110] sm:$0xff]
    %v202 = vld [vmem:[#allocation2 + $0x118] sm:$0xff]
    %v203 = vld [vmem:[#allocation2 + $0x120] sm:$0xff]
    %v204 = vld [vmem:[#allocation2 + $0x128] sm:$0xff]
    %v205 = vld [vmem:[#allocation2 + $0x130] sm:$0xff]
    %v206 = vld [vmem:[#allocation2 + $0x138] sm:$0xff]
    %v207 = vld [vmem:[#allocation2 + $0x140] sm:$0xff]
    %v208 = vld [vmem:[#allocation2 + $0x148] sm:$0xff]
    %v209 = vld [vmem:[#allocation2 + $0x150] sm:$0xff]
    %v210 = vld [vmem:[#allocation2 + $0x158] sm:$0xff]
    %v211 = vld [vmem:[#allocation2 + $0x160] sm:$0xff]
    %v212 = vld [vmem:[#allocation2 + $0x168] sm:$0xff]
    %v213 = vld [vmem:[#allocation2 + $0x170] sm:$0xff]
    %v214 = vld [vmem:[#allocation2 + $0x178] sm:$0xff]
    %v215 = vld [vmem:[#allocation2 + $0x180] sm:$0xff]
    %v216 = vld [vmem:[#allocation2 + $0x188] sm:$0xff]
    %v217 = vld [vmem:[#allocation2 + $0x190] sm:$0xff]
    %v218 = vld [vmem:[#allocation2 + $0x198] sm:$0xff]
    %v219 = vld [vmem:[#allocation2 + $0x1a0] sm:$0xff]
    %v220 = vld [vmem:[#allocation2 + $0x1a8] sm:$0xff]
    %v221 = vld [vmem:[#allocation2 + $0x1b0] sm:$0xff]
    %v222 = vld [vmem:[#allocation2 + $0x1b8] sm:$0xff]
    %v223 = vld [vmem:[#allocation2 + $0x1c0] sm:$0xff]
    %v224 = vld [vmem:[#allocation2 + $0x1c8] sm:$0xff]
    %v225 = vld [vmem:[#allocation2 + $0x1d0] sm:$0xff]
    %v226 = vld [vmem:[#allocation2 + $0x1d8] sm:$0xff]
    %v227 = vld [vmem:[#allocation2 + $0x1e0] sm:$0xff]
    %v228 = vld [vmem:[#allocation2 + $0x1e8] sm:$0xff]
    %v229 = vld [vmem:[#allocation2 + $0x1f0] sm:$0xff]
    %v230 = vld [vmem:[#allocation2 + $0x1f8] sm:$0xff]
    %v231 = vld [vmem:[#allocation2 + $0x200] sm:$0xff]
    %v232 = vld [vmem:[#allocation2 + $0x208] sm:$0xff]
    %v233 = vld [vmem:[#allocation2 + $0x210] sm:$0xff]
    %v234 = vld [vmem:[#allocation2 + $0x218] sm:$0xff]
    %v235 = vld [vmem:[#allocation2 + $0x220] sm:$0xff]
    %v236 = vld [vmem:[#allocation2 + $0x228] sm:$0xff]
    %v237 = vld [vmem:[#allocation2 + $0x230] sm:$0xff]
    %v238 = vld [vmem:[#allocation2 + $0x238] sm:$0xff]
    %v239 = vld [vmem:[#allocation2 + $0x240] sm:$0xff]
    %v240 = vld [vmem:[#allocation2 + $0x248] sm:$0xff]
    %v241 = vld [vmem:[#allocation2 + $0x250] sm:$0xff]
    %v242 = vld [vmem:[#allocation2 + $0x258] sm:$0xff]
    %v243 = vld [vmem:[#allocation2 + $0x260] sm:$0xff]
    %v244 = vld [vmem:[#allocation2 + $0x268] sm:$0xff]
    %v245 = vld [vmem:[#allocation2 + $0x270] sm:$0xff]
    %v246 = vld [vmem:[#allocation2 + $0x278] sm:$0xff]
    %v247 = vld [vmem:[#allocation2 + $0x280] sm:$0xff]
    %v248 = vld [vmem:[#allocation2 + $0x288] sm:$0xff]
    %v249 = vld [vmem:[#allocation2 + $0x290] sm:$0xff]
    %v250 = vld [vmem:[#allocation2 + $0x298] sm:$0xff]
    %v251 = vld [vmem:[#allocation2 + $0x2a0] sm:$0xff]
    %v252 = vld [vmem:[#allocation2 + $0x2a8] sm:$0xff]
    %v253 = vld [vmem:[#allocation2 + $0x2b0] sm:$0xff]
    %v254 = vld [vmem:[#allocation2 + $0x2b8] sm:$0xff]
    %v255 = vld [vmem:[#allocation2 + $0x2c0] sm:$0xff]
    %v256 = vld [vmem:[#allocation2 + $0x2c8] sm:$0xff]
    %v257 = vld [vmem:[#allocation2 + $0x2d0] sm:$0xff]
    %v258 = vld [vmem:[#allocation2 + $0x2d8] sm:$0xff]
    %v259 = vld [vmem:[#allocation2 + $0x2e0] sm:$0xff]
    %v260 = vld [vmem:[#allocation2 + $0x2e8] sm:$0xff]
    %v261 = vld [vmem:[#allocation2 + $0x2f0] sm:$0xff]
    %v262 = vld [vmem:[#allocation2 + $0x2f8] sm:$0xff]
    %v263 = vld [vmem:[#allocation2 + $0x300] sm:$0xff]
    %v264 = vld [vmem:[#allocation2 + $0x308] sm:$0xff]
    %v265 = vld [vmem:[#allocation2 + $0x310] sm:$0xff]
    %v266 = vld [vmem:[#allocation2 + $0x318] sm:$0xff]
    %v267 = vld [vmem:[#allocation2 + $0x320] sm:$0xff]
    %v268 = vld [vmem:[#allocation2 + $0x328] sm:$0xff]
    %v269 = vld [vmem:[#allocation2 + $0x330] sm:$0xff]
    %v270 = vld [vmem:[#allocation2 + $0x338] sm:$0xff]
    %v271 = vld [vmem:[#allocation2 + $0x340] sm:$0xff]
    %v272 = vld [vmem:[#allocation2 + $0x348] sm:$0xff]
    %v273 = vld [vmem:[#allocation2 + $0x350] sm:$0xff]
    %v274 = vld [vmem:[#allocation2 + $0x358] sm:$0xff]
    %v275 = vld [vmem:[#allocation2 + $0x360] sm:$0xff]
    %v276 = vld [vmem:[#allocation2 + $0x368] sm:$0xff]
    %v277 = vld [vmem:[#allocation2 + $0x370] sm:$0xff]
    %v278 = vld [vmem:[#allocation2 + $0x378] sm:$0xff]
    %v279 = vld [vmem:[#allocation2 + $0x380] sm:$0xff]
    %v280 = vld [vmem:[#allocation2 + $0x388] sm:$0xff]
    %v281 = vld [vmem:[#allocation2 + $0x390] sm:$0xff]
    %v282 = vld [vmem:[#allocation2 + $0x398] sm:$0xff]
    %v283 = vld [vmem:[#allocation2 + $0x3a0] sm:$0xff]
    %v284 = vld [vmem:[#allocation2 + $0x3a8] sm:$0xff]
    %v285 = vld [vmem:[#allocation2 + $0x3b0] sm:$0xff]
    %v286 = vld [vmem:[#allocation2 + $0x3b8] sm:$0xff]
    %v287 = vld [vmem:[#allocation2 + $0x3c0] sm:$0xff]
    %v288 = vld [vmem:[#allocation2 + $0x3c8] sm:$0xff]
    %v289 = vld [vmem:[#allocation2 + $0x3d0] sm:$0xff]
    %v290 = vld [vmem:[#allocation2 + $0x3d8] sm:$0xff]
    %v291 = vld [vmem:[#allocation2 + $0x3e0] sm:$0xff]
    %v292 = vld [vmem:[#allocation2 + $0x3e8] sm:$0xff]
    %v293 = vld [vmem:[#allocation2 + $0x3f0] sm:$0xff]
    %v294 = vld [vmem:[#allocation2 + $0x3f8] sm:$0xff]
    %v295 = vld [vmem:[#allocation2 + $0x400] sm:$0xff]
    %v296 = vld [vmem:[#allocation2 + $0x408] sm:$0xff]
    %v297 = vld [vmem:[#allocation2 + $0x410] sm:$0xff]
    %v298 = vld [vmem:[#allocation2 + $0x418] sm:$0xff]
    %v299 = vld [vmem:[#allocation2 + $0x420] sm:$0xff]
    %v300 = vld [vmem:[#allocation2 + $0x428] sm:$0xff]
    %v301 = vld [vmem:[#allocation2 + $0x430] sm:$0xff]
    %v302 = vld [vmem:[#allocation2 + $0x438] sm:$0xff]
    %v303 = vld [vmem:[#allocation2 + $0x440] sm:$0xff]
    %v304 = vld [vmem:[#allocation2 + $0x448] sm:$0xff]
    %v305 = vld [vmem:[#allocation2 + $0x450] sm:$0xff]
    %v306 = vld [vmem:[#allocation2 + $0x458] sm:$0xff]
    %v307 = vld [vmem:[#allocation2 + $0x460] sm:$0xff]
    %v308 = vld [vmem:[#allocation2 + $0x468] sm:$0xff]
    %v309 = vld [vmem:[#allocation2 + $0x470] sm:$0xff]
    %v310 = vld [vmem:[#allocation2 + $0x478] sm:$0xff]
    %v311 = vld [vmem:[#allocation2 + $0x480] sm:$0xff]
    %v312 = vld [vmem:[#allocation2 + $0x488] sm:$0xff]
    %v313 = vld [vmem:[#allocation2 + $0x490] sm:$0xff]
    %v314 = vld [vmem:[#allocation2 + $0x498] sm:$0xff]
    %v315 = vld [vmem:[#allocation2 + $0x4a0] sm:$0xff]
    %v316 = vld [vmem:[#allocation2 + $0x4a8] sm:$0xff]
    %v317 = vld [vmem:[#allocation2 + $0x4b0] sm:$0xff]
    %v318 = vld [vmem:[#allocation2 + $0x4b8] sm:$0xff]
    %v319 = vld [vmem:[#allocation2 + $0x4c0] sm:$0xff]
    %v320 = vld [vmem:[#allocation2 + $0x4c8] sm:$0xff]
    %v321 = vld [vmem:[#allocation2 + $0x4d0] sm:$0xff]
    %v322 = vld [vmem:[#allocation2 + $0x4d8] sm:$0xff]
    %v323 = vld [vmem:[#allocation2 + $0x4e0] sm:$0xff]
    %v324 = vld [vmem:[#allocation2 + $0x4e8] sm:$0xff]
    %v325 = vld [vmem:[#allocation2 + $0x4f0] sm:$0xff]
    %v326 = vld [vmem:[#allocation2 + $0x4f8] sm:$0xff]
    %v327 = vld [vmem:[#allocation2 + $0x500] sm:$0xff]
    %v328 = vld [vmem:[#allocation2 + $0x508] sm:$0xff]
    %v329 = vld [vmem:[#allocation2 + $0x510] sm:$0xff]
    %v330 = vld [vmem:[#allocation2 + $0x518] sm:$0xff]
    %v331 = vld [vmem:[#allocation2 + $0x520] sm:$0xff]
    %v332 = vld [vmem:[#allocation2 + $0x528] sm:$0xff]
    %v333 = vld [vmem:[#allocation2 + $0x530] sm:$0xff]
    %v334 = vld [vmem:[#allocation2 + $0x538] sm:$0xff]
    %v335 = vld [vmem:[#allocation2 + $0x540] sm:$0xff]
    %v336 = vld [vmem:[#allocation2 + $0x548] sm:$0xff]
    %v337 = vld [vmem:[#allocation2 + $0x550] sm:$0xff]
    %v338 = vld [vmem:[#allocation2 + $0x558] sm:$0xff]
    %v339 = vld [vmem:[#allocation2 + $0x560] sm:$0xff]
    %v340 = vld [vmem:[#allocation2 + $0x568] sm:$0xff]
    %v341 = vld [vmem:[#allocation2 + $0x570] sm:$0xff]
    %v342 = vld [vmem:[#allocation2 + $0x578] sm:$0xff]
    %v343 = vld [vmem:[#allocation2 + $0x580] sm:$0xff]
    %v344 = vld [vmem:[#allocation2 + $0x588] sm:$0xff]
    %v345 = vld [vmem:[#allocation2 + $0x590] sm:$0xff]
    %v346 = vld [vmem:[#allocation2 + $0x598] sm:$0xff]
    %v347 = vld [vmem:[#allocation2 + $0x5a0] sm:$0xff]
    %v348 = vld [vmem:[#allocation2 + $0x5a8] sm:$0xff]
    %v349 = vld [vmem:[#allocation2 + $0x5b0] sm:$0xff]
    %v350 = vld [vmem:[#allocation2 + $0x5b8] sm:$0xff]
    %v351 = vld [vmem:[#allocation2 + $0x5c0] sm:$0xff]
    %v352 = vld [vmem:[#allocation2 + $0x5c8] sm:$0xff]
    %v353 = vld [vmem:[#allocation2 + $0x5d0] sm:$0xff]
    %v354 = vld [vmem:[#allocation2 + $0x5d8] sm:$0xff]
    %v355 = vld [vmem:[#allocation2 + $0x5e0] sm:$0xff]
    %v356 = vld [vmem:[#allocation2 + $0x5e8] sm:$0xff]
    %v357 = vld [vmem:[#allocation2 + $0x5f0] sm:$0xff]
    %v358 = vld [vmem:[#allocation2 + $0x5f8] sm:$0xff]
    %v359 = vld [vmem:[#allocation2 + $0x600] sm:$0xff]
    %v360 = vld [vmem:[#allocation2 + $0x608] sm:$0xff]
    %v361 = vld [vmem:[#allocation2 + $0x610] sm:$0xff]
    %v362 = vld [vmem:[#allocation2 + $0x618] sm:$0xff]
    %v363 = vld [vmem:[#allocation2 + $0x620] sm:$0xff]
    %v364 = vld [vmem:[#allocation2 + $0x628] sm:$0xff]
    %v365 = vld [vmem:[#allocation2 + $0x630] sm:$0xff]
    %v366 = vld [vmem:[#allocation2 + $0x638] sm:$0xff]
    %v367 = vld [vmem:[#allocation2 + $0x640] sm:$0xff]
    %v368 = vld [vmem:[#allocation2 + $0x648] sm:$0xff]
    %v369 = vld [vmem:[#allocation2 + $0x650] sm:$0xff]
    %v370 = vld [vmem:[#allocation2 + $0x658] sm:$0xff]
    %v371 = vld [vmem:[#allocation2 + $0x660] sm:$0xff]
    %v372 = vld [vmem:[#allocation2 + $0x668] sm:$0xff]
    %v373 = vld [vmem:[#allocation2 + $0x670] sm:$0xff]
    %v374 = vld [vmem:[#allocation2 + $0x678] sm:$0xff]
    %v375 = vld [vmem:[#allocation2 + $0x680] sm:$0xff]
    %v376 = vld [vmem:[#allocation2 + $0x688] sm:$0xff]
    %v377 = vld [vmem:[#allocation2 + $0x690] sm:$0xff]
    %v378 = vld [vmem:[#allocation2 + $0x698] sm:$0xff]
    %v379 = vld [vmem:[#allocation2 + $0x6a0] sm:$0xff]
    %v380 = vld [vmem:[#allocation2 + $0x6a8] sm:$0xff]
    %v381 = vld [vmem:[#allocation2 + $0x6b0] sm:$0xff]
    %v382 = vld [vmem:[#allocation2 + $0x6b8] sm:$0xff]
    %v383 = vld [vmem:[#allocation2 + $0x6c0] sm:$0xff]
    %v384 = vld [vmem:[#allocation2 + $0x6c8] sm:$0xff]
    %v385 = vld [vmem:[#allocation2 + $0x6d0] sm:$0xff]
    %v386 = vld [vmem:[#allocation2 + $0x6d8] sm:$0xff]
    %v387 = vld [vmem:[#allocation2 + $0x6e0] sm:$0xff]
    %v388 = vld [vmem:[#allocation2 + $0x6e8] sm:$0xff]
    %v389 = vld [vmem:[#allocation2 + $0x6f0] sm:$0xff]
    %v390 = vld [vmem:[#allocation2 + $0x6f8] sm:$0xff]
    %v391 = vld [vmem:[#allocation2 + $0x700] sm:$0xff]
    %v392 = vld [vmem:[#allocation2 + $0x708] sm:$0xff]
    %v393 = vld [vmem:[#allocation2 + $0x710] sm:$0xff]
    %v394 = vld [vmem:[#allocation2 + $0x718] sm:$0xff]
    %v395 = vld [vmem:[#allocation2 + $0x720] sm:$0xff]
    %v396 = vld [vmem:[#allocation2 + $0x728] sm:$0xff]
    %v397 = vld [vmem:[#allocation2 + $0x730] sm:$0xff]
    %v398 = vld [vmem:[#allocation2 + $0x738] sm:$0xff]
    %v399 = vld [vmem:[#allocation2 + $0x740] sm:$0xff]
    %v400 = vld [vmem:[#allocation2 + $0x748] sm:$0xff]
    %v401 = vld [vmem:[#allocation2 + $0x750] sm:$0xff]
    %v402 = vld [vmem:[#allocation2 + $0x758] sm:$0xff]
    %v403 = vld [vmem:[#allocation2 + $0x760] sm:$0xff]
    %v404 = vld [vmem:[#allocation2 + $0x768] sm:$0xff]
    %v405 = vld [vmem:[#allocation2 + $0x770] sm:$0xff]
    %v406 = vld [vmem:[#allocation2 + $0x778] sm:$0xff]
    %v407 = vld [vmem:[#allocation2 + $0x780] sm:$0xff]
    %v408 = vld [vmem:[#allocation2 + $0x788] sm:$0xff]
    %v409 = vld [vmem:[#allocation2 + $0x790] sm:$0xff]
    %v410 = vld [vmem:[#allocation2 + $0x798] sm:$0xff]
    %v411 = vld [vmem:[#allocation2 + $0x7a0] sm:$0xff]
    %v412 = vld [vmem:[#allocation2 + $0x7a8] sm:$0xff]
    %v413 = vld [vmem:[#allocation2 + $0x7b0] sm:$0xff]
    %v414 = vld [vmem:[#allocation2 + $0x7b8] sm:$0xff]
    %v415 = vld [vmem:[#allocation2 + $0x7c0] sm:$0xff]
    %v416 = vld [vmem:[#allocation2 + $0x7c8] sm:$0xff]
    %v417 = vld [vmem:[#allocation2 + $0x7d0] sm:$0xff]
    %v418 = vld [vmem:[#allocation2 + $0x7d8] sm:$0xff]
    %v419 = vld [vmem:[#allocation2 + $0x7e0] sm:$0xff]
    %v420 = vld [vmem:[#allocation2 + $0x7e8] sm:$0xff]
    %v421 = vld [vmem:[#allocation2 + $0x7f0] sm:$0xff]
    %v422 = vld [vmem:[#allocation2 + $0x7f8] sm:$0xff]
    %v679 = vunpack.c.l.b16 %v167
    %v680 = vunpack.c.h.b16 %v167
    %v681 = vunpack.c.l.b16 %v168
    %v682 = vunpack.c.h.b16 %v168
    %v683 = vunpack.c.l.b16 %v169
    %v684 = vunpack.c.h.b16 %v169
    %v685 = vunpack.c.l.b16 %v170
    %v686 = vunpack.c.h.b16 %v170
    %v687 = vunpack.c.l.b16 %v171
    %v688 = vunpack.c.h.b16 %v171
    %v689 = vunpack.c.l.b16 %v172
    %v690 = vunpack.c.h.b16 %v172
    %v691 = vunpack.c.l.b16 %v173
    %v692 = vunpack.c.h.b16 %v173
    %v693 = vunpack.c.l.b16 %v174
    %v694 = vunpack.c.h.b16 %v174
    %v695 = vunpack.c.l.b16 %v175
    %v696 = vunpack.c.h.b16 %v175
    %v697 = vunpack.c.l.b16 %v176
    %v698 = vunpack.c.h.b16 %v176
    %v699 = vunpack.c.l.b16 %v177
    %v700 = vunpack.c.h.b16 %v177
    %v701 = vunpack.c.l.b16 %v178
    %v702 = vunpack.c.h.b16 %v178
    %v703 = vunpack.c.l.b16 %v179
    %v704 = vunpack.c.h.b16 %v179
    %v705 = vunpack.c.l.b16 %v180
    %v706 = vunpack.c.h.b16 %v180
    %v707 = vunpack.c.l.b16 %v181
    %v708 = vunpack.c.h.b16 %v181
    %v709 = vunpack.c.l.b16 %v182
    %v710 = vunpack.c.h.b16 %v182
    %v711 = vunpack.c.l.b16 %v183
    %v712 = vunpack.c.h.b16 %v183
    %v713 = vunpack.c.l.b16 %v184
    %v714 = vunpack.c.h.b16 %v184
    %v715 = vunpack.c.l.b16 %v185
    %v716 = vunpack.c.h.b16 %v185
    %v717 = vunpack.c.l.b16 %v186
    %v718 = vunpack.c.h.b16 %v186
    %v719 = vunpack.c.l.b16 %v187
    %v720 = vunpack.c.h.b16 %v187
    %v721 = vunpack.c.l.b16 %v188
    %v722 = vunpack.c.h.b16 %v188
    %v723 = vunpack.c.l.b16 %v189
    %v724 = vunpack.c.h.b16 %v189
    %v725 = vunpack.c.l.b16 %v190
    %v726 = vunpack.c.h.b16 %v190
    %v727 = vunpack.c.l.b16 %v191
    %v728 = vunpack.c.h.b16 %v191
    %v729 = vunpack.c.l.b16 %v192
    %v730 = vunpack.c.h.b16 %v192
    %v731 = vunpack.c.l.b16 %v193
    %v732 = vunpack.c.h.b16 %v193
    %v733 = vunpack.c.l.b16 %v194
    %v734 = vunpack.c.h.b16 %v194
    %v735 = vunpack.c.l.b16 %v195
    %v736 = vunpack.c.h.b16 %v195
    %v737 = vunpack.c.l.b16 %v196
    %v738 = vunpack.c.h.b16 %v196
    %v739 = vunpack.c.l.b16 %v197
    %v740 = vunpack.c.h.b16 %v197
    %v741 = vunpack.c.l.b16 %v198
    %v742 = vunpack.c.h.b16 %v198
    %v743 = vunpack.c.l.b16 %v199
    %v744 = vunpack.c.h.b16 %v199
    %v745 = vunpack.c.l.b16 %v200
    %v746 = vunpack.c.h.b16 %v200
    %v747 = vunpack.c.l.b16 %v201
    %v748 = vunpack.c.h.b16 %v201
    %v749 = vunpack.c.l.b16 %v202
    %v750 = vunpack.c.h.b16 %v202
    %v751 = vunpack.c.l.b16 %v203
    %v752 = vunpack.c.h.b16 %v203
    %v753 = vunpack.c.l.b16 %v204
    %v754 = vunpack.c.h.b16 %v204
    %v755 = vunpack.c.l.b16 %v205
    %v756 = vunpack.c.h.b16 %v205
    %v757 = vunpack.c.l.b16 %v206
    %v758 = vunpack.c.h.b16 %v206
    %v759 = vunpack.c.l.b16 %v207
    %v760 = vunpack.c.h.b16 %v207
    %v761 = vunpack.c.l.b16 %v208
    %v762 = vunpack.c.h.b16 %v208
    %v763 = vunpack.c.l.b16 %v209
    %v764 = vunpack.c.h.b16 %v209
    %v765 = vunpack.c.l.b16 %v210
    %v766 = vunpack.c.h.b16 %v210
    %v767 = vunpack.c.l.b16 %v211
    %v768 = vunpack.c.h.b16 %v211
    %v769 = vunpack.c.l.b16 %v212
    %v770 = vunpack.c.h.b16 %v212
    %v771 = vunpack.c.l.b16 %v213
    %v772 = vunpack.c.h.b16 %v213
    %v773 = vunpack.c.l.b16 %v214
    %v774 = vunpack.c.h.b16 %v214
    %v775 = vunpack.c.l.b16 %v215
    %v776 = vunpack.c.h.b16 %v215
    %v777 = vunpack.c.l.b16 %v216
    %v778 = vunpack.c.h.b16 %v216
    %v779 = vunpack.c.l.b16 %v217
    %v780 = vunpack.c.h.b16 %v217
    %v781 = vunpack.c.l.b16 %v218
    %v782 = vunpack.c.h.b16 %v218
    %v783 = vunpack.c.l.b16 %v219
    %v784 = vunpack.c.h.b16 %v219
    %v785 = vunpack.c.l.b16 %v220
    %v786 = vunpack.c.h.b16 %v220
    %v787 = vunpack.c.l.b16 %v221
    %v788 = vunpack.c.h.b16 %v221
    %v789 = vunpack.c.l.b16 %v222
    %v790 = vunpack.c.h.b16 %v222
    %v791 = vunpack.c.l.b16 %v223
    %v792 = vunpack.c.h.b16 %v223
    %v793 = vunpack.c.l.b16 %v224
    %v794 = vunpack.c.h.b16 %v224
    %v795 = vunpack.c.l.b16 %v225
    %v796 = vunpack.c.h.b16 %v225
    %v797 = vunpack.c.l.b16 %v226
    %v798 = vunpack.c.h.b16 %v226
    %v799 = vunpack.c.l.b16 %v227
    %v800 = vunpack.c.h.b16 %v227
    %v801 = vunpack.c.l.b16 %v228
    %v802 = vunpack.c.h.b16 %v228
    %v803 = vunpack.c.l.b16 %v229
    %v804 = vunpack.c.h.b16 %v229
    %v805 = vunpack.c.l.b16 %v230
    %v806 = vunpack.c.h.b16 %v230
    %v807 = vunpack.c.l.b16 %v231
    %v808 = vunpack.c.h.b16 %v231
    %v809 = vunpack.c.l.b16 %v232
    %v810 = vunpack.c.h.b16 %v232
    %v811 = vunpack.c.l.b16 %v233
    %v812 = vunpack.c.h.b16 %v233
    %v813 = vunpack.c.l.b16 %v234
    %v814 = vunpack.c.h.b16 %v234
    %v815 = vunpack.c.l.b16 %v235
    %v816 = vunpack.c.h.b16 %v235
    %v817 = vunpack.c.l.b16 %v236
    %v818 = vunpack.c.h.b16 %v236
    %v819 = vunpack.c.l.b16 %v237
    %v820 = vunpack.c.h.b16 %v237
    %v821 = vunpack.c.l.b16 %v238
    %v822 = vunpack.c.h.b16 %v238
    %v823 = vunpack.c.l.b16 %v239
    %v824 = vunpack.c.h.b16 %v239
    %v825 = vunpack.c.l.b16 %v240
    %v826 = vunpack.c.h.b16 %v240
    %v827 = vunpack.c.l.b16 %v241
    %v828 = vunpack.c.h.b16 %v241
    %v829 = vunpack.c.l.b16 %v242
    %v830 = vunpack.c.h.b16 %v242
    %v831 = vunpack.c.l.b16 %v243
    %v832 = vunpack.c.h.b16 %v243
    %v833 = vunpack.c.l.b16 %v244
    %v834 = vunpack.c.h.b16 %v244
    %v835 = vunpack.c.l.b16 %v245
    %v836 = vunpack.c.h.b16 %v245
    %v837 = vunpack.c.l.b16 %v246
    %v838 = vunpack.c.h.b16 %v246
    %v839 = vunpack.c.l.b16 %v247
    %v840 = vunpack.c.h.b16 %v247
    %v841 = vunpack.c.l.b16 %v248
    %v842 = vunpack.c.h.b16 %v248
    %v843 = vunpack.c.l.b16 %v249
    %v844 = vunpack.c.h.b16 %v249
    %v845 = vunpack.c.l.b16 %v250
    %v846 = vunpack.c.h.b16 %v250
    %v847 = vunpack.c.l.b16 %v251
    %v848 = vunpack.c.h.b16 %v251
    %v849 = vunpack.c.l.b16 %v252
    %v850 = vunpack.c.h.b16 %v252
    %v851 = vunpack.c.l.b16 %v253
    %v852 = vunpack.c.h.b16 %v253
    %v853 = vunpack.c.l.b16 %v254
    %v854 = vunpack.c.h.b16 %v254
    %v855 = vunpack.c.l.b16 %v255
    %v856 = vunpack.c.h.b16 %v255
    %v857 = vunpack.c.l.b16 %v256
    %v858 = vunpack.c.h.b16 %v256
    %v859 = vunpack.c.l.b16 %v257
    %v860 = vunpack.c.h.b16 %v257
    %v861 = vunpack.c.l.b16 %v258
    %v862 = vunpack.c.h.b16 %v258
    %v863 = vunpack.c.l.b16 %v259
    %v864 = vunpack.c.h.b16 %v259
    %v865 = vunpack.c.l.b16 %v260
    %v866 = vunpack.c.h.b16 %v260
    %v867 = vunpack.c.l.b16 %v261
    %v868 = vunpack.c.h.b16 %v261
    %v869 = vunpack.c.l.b16 %v262
    %v870 = vunpack.c.h.b16 %v262
    %v871 = vunpack.c.l.b16 %v263
    %v872 = vunpack.c.h.b16 %v263
    %v873 = vunpack.c.l.b16 %v264
    %v874 = vunpack.c.h.b16 %v264
    %v875 = vunpack.c.l.b16 %v265
    %v876 = vunpack.c.h.b16 %v265
    %v877 = vunpack.c.l.b16 %v266
    %v878 = vunpack.c.h.b16 %v266
    %v879 = vunpack.c.l.b16 %v267
    %v880 = vunpack.c.h.b16 %v267
    %v881 = vunpack.c.l.b16 %v268
    %v882 = vunpack.c.h.b16 %v268
    %v883 = vunpack.c.l.b16 %v269
    %v884 = vunpack.c.h.b16 %v269
    %v885 = vunpack.c.l.b16 %v270
    %v886 = vunpack.c.h.b16 %v270
    %v887 = vunpack.c.l.b16 %v271
    %v888 = vunpack.c.h.b16 %v271
    %v889 = vunpack.c.l.b16 %v272
    %v890 = vunpack.c.h.b16 %v272
    %v891 = vunpack.c.l.b16 %v273
    %v892 = vunpack.c.h.b16 %v273
    %v893 = vunpack.c.l.b16 %v274
    %v894 = vunpack.c.h.b16 %v274
    %v895 = vunpack.c.l.b16 %v275
    %v896 = vunpack.c.h.b16 %v275
    %v897 = vunpack.c.l.b16 %v276
    %v898 = vunpack.c.h.b16 %v276
    %v899 = vunpack.c.l.b16 %v277
    %v900 = vunpack.c.h.b16 %v277
    %v901 = vunpack.c.l.b16 %v278
    %v902 = vunpack.c.h.b16 %v278
    %v903 = vunpack.c.l.b16 %v279
    %v904 = vunpack.c.h.b16 %v279
    %v905 = vunpack.c.l.b16 %v280
    %v906 = vunpack.c.h.b16 %v280
    %v907 = vunpack.c.l.b16 %v281
    %v908 = vunpack.c.h.b16 %v281
    %v909 = vunpack.c.l.b16 %v282
    %v910 = vunpack.c.h.b16 %v282
    %v911 = vunpack.c.l.b16 %v283
    %v912 = vunpack.c.h.b16 %v283
    %v913 = vunpack.c.l.b16 %v284
    %v914 = vunpack.c.h.b16 %v284
    %v915 = vunpack.c.l.b16 %v285
    %v916 = vunpack.c.h.b16 %v285
    %v917 = vunpack.c.l.b16 %v286
    %v918 = vunpack.c.h.b16 %v286
    %v919 = vunpack.c.l.b16 %v287
    %v920 = vunpack.c.h.b16 %v287
    %v921 = vunpack.c.l.b16 %v288
    %v922 = vunpack.c.h.b16 %v288
    %v923 = vunpack.c.l.b16 %v289
    %v924 = vunpack.c.h.b16 %v289
    %v925 = vunpack.c.l.b16 %v290
    %v926 = vunpack.c.h.b16 %v290
    %v927 = vunpack.c.l.b16 %v291
    %v928 = vunpack.c.h.b16 %v291
    %v929 = vunpack.c.l.b16 %v292
    %v930 = vunpack.c.h.b16 %v292
    %v931 = vunpack.c.l.b16 %v293
    %v932 = vunpack.c.h.b16 %v293
    %v933 = vunpack.c.l.b16 %v294
    %v934 = vunpack.c.h.b16 %v294
    %v935 = vunpack.c.l.b16 %v295
    %v936 = vunpack.c.h.b16 %v295
    %v937 = vunpack.c.l.b16 %v296
    %v938 = vunpack.c.h.b16 %v296
    %v939 = vunpack.c.l.b16 %v297
    %v940 = vunpack.c.h.b16 %v297
    %v941 = vunpack.c.l.b16 %v298
    %v942 = vunpack.c.h.b16 %v298
    %v943 = vunpack.c.l.b16 %v299
    %v944 = vunpack.c.h.b16 %v299
    %v945 = vunpack.c.l.b16 %v300
    %v946 = vunpack.c.h.b16 %v300
    %v947 = vunpack.c.l.b16 %v301
    %v948 = vunpack.c.h.b16 %v301
    %v949 = vunpack.c.l.b16 %v302
    %v950 = vunpack.c.h.b16 %v302
    %v951 = vunpack.c.l.b16 %v303
    %v952 = vunpack.c.h.b16 %v303
    %v953 = vunpack.c.l.b16 %v304
    %v954 = vunpack.c.h.b16 %v304
    %v955 = vunpack.c.l.b16 %v305
    %v956 = vunpack.c.h.b16 %v305
    %v957 = vunpack.c.l.b16 %v306
    %v958 = vunpack.c.h.b16 %v306
    %v959 = vunpack.c.l.b16 %v307
    %v960 = vunpack.c.h.b16 %v307
    %v961 = vunpack.c.l.b16 %v308
    %v962 = vunpack.c.h.b16 %v308
    %v963 = vunpack.c.l.b16 %v309
    %v964 = vunpack.c.h.b16 %v309
    %v965 = vunpack.c.l.b16 %v310
    %v966 = vunpack.c.h.b16 %v310
    %v967 = vunpack.c.l.b16 %v311
    %v968 = vunpack.c.h.b16 %v311
    %v969 = vunpack.c.l.b16 %v312
    %v970 = vunpack.c.h.b16 %v312
    %v971 = vunpack.c.l.b16 %v313
    %v972 = vunpack.c.h.b16 %v313
    %v973 = vunpack.c.l.b16 %v314
    %v974 = vunpack.c.h.b16 %v314
    %v975 = vunpack.c.l.b16 %v315
    %v976 = vunpack.c.h.b16 %v315
    %v977 = vunpack.c.l.b16 %v316
    %v978 = vunpack.c.h.b16 %v316
    %v979 = vunpack.c.l.b16 %v317
    %v980 = vunpack.c.h.b16 %v317
    %v981 = vunpack.c.l.b16 %v318
    %v982 = vunpack.c.h.b16 %v318
    %v983 = vunpack.c.l.b16 %v319
    %v984 = vunpack.c.h.b16 %v319
    %v985 = vunpack.c.l.b16 %v320
    %v986 = vunpack.c.h.b16 %v320
    %v987 = vunpack.c.l.b16 %v321
    %v988 = vunpack.c.h.b16 %v321
    %v989 = vunpack.c.l.b16 %v322
    %v990 = vunpack.c.h.b16 %v322
    %v991 = vunpack.c.l.b16 %v323
    %v992 = vunpack.c.h.b16 %v323
    %v993 = vunpack.c.l.b16 %v324
    %v994 = vunpack.c.h.b16 %v324
    %v995 = vunpack.c.l.b16 %v325
    %v996 = vunpack.c.h.b16 %v325
    %v997 = vunpack.c.l.b16 %v326
    %v998 = vunpack.c.h.b16 %v326
    %v999 = vunpack.c.l.b16 %v327
    %v1000 = vunpack.c.h.b16 %v327
    %v1001 = vunpack.c.l.b16 %v328
    %v1002 = vunpack.c.h.b16 %v328
    %v1003 = vunpack.c.l.b16 %v329
    %v1004 = vunpack.c.h.b16 %v329
    %v1005 = vunpack.c.l.b16 %v330
    %v1006 = vunpack.c.h.b16 %v330
    %v1007 = vunpack.c.l.b16 %v331
    %v1008 = vunpack.c.h.b16 %v331
    %v1009 = vunpack.c.l.b16 %v332
    %v1010 = vunpack.c.h.b16 %v332
    %v1011 = vunpack.c.l.b16 %v333
    %v1012 = vunpack.c.h.b16 %v333
    %v1013 = vunpack.c.l.b16 %v334
    %v1014 = vunpack.c.h.b16 %v334
    %v1015 = vunpack.c.l.b16 %v335
    %v1016 = vunpack.c.h.b16 %v335
    %v1017 = vunpack.c.l.b16 %v336
    %v1018 = vunpack.c.h.b16 %v336
    %v1019 = vunpack.c.l.b16 %v337
    %v1020 = vunpack.c.h.b16 %v337
    %v1021 = vunpack.c.l.b16 %v338
    %v1022 = vunpack.c.h.b16 %v338
    %v1023 = vunpack.c.l.b16 %v339
    %v1024 = vunpack.c.h.b16 %v339
    %v1025 = vunpack.c.l.b16 %v340
    %v1026 = vunpack.c.h.b16 %v340
    %v1027 = vunpack.c.l.b16 %v341
    %v1028 = vunpack.c.h.b16 %v341
    %v1029 = vunpack.c.l.b16 %v342
    %v1030 = vunpack.c.h.b16 %v342
    %v1031 = vunpack.c.l.b16 %v343
    %v1032 = vunpack.c.h.b16 %v343
    %v1033 = vunpack.c.l.b16 %v344
    %v1034 = vunpack.c.h.b16 %v344
    %v1035 = vunpack.c.l.b16 %v345
    %v1036 = vunpack.c.h.b16 %v345
    %v1037 = vunpack.c.l.b16 %v346
    %v1038 = vunpack.c.h.b16 %v346
    %v1039 = vunpack.c.l.b16 %v347
    %v1040 = vunpack.c.h.b16 %v347
    %v1041 = vunpack.c.l.b16 %v348
    %v1042 = vunpack.c.h.b16 %v348
    %v1043 = vunpack.c.l.b16 %v349
    %v1044 = vunpack.c.h.b16 %v349
    %v1045 = vunpack.c.l.b16 %v350
    %v1046 = vunpack.c.h.b16 %v350
    %v1047 = vunpack.c.l.b16 %v351
    %v1048 = vunpack.c.h.b16 %v351
    %v1049 = vunpack.c.l.b16 %v352
    %v1050 = vunpack.c.h.b16 %v352
    %v1051 = vunpack.c.l.b16 %v353
    %v1052 = vunpack.c.h.b16 %v353
    %v1053 = vunpack.c.l.b16 %v354
    %v1054 = vunpack.c.h.b16 %v354
    %v1055 = vunpack.c.l.b16 %v355
    %v1056 = vunpack.c.h.b16 %v355
    %v1057 = vunpack.c.l.b16 %v356
    %v1058 = vunpack.c.h.b16 %v356
    %v1059 = vunpack.c.l.b16 %v357
    %v1060 = vunpack.c.h.b16 %v357
    %v1061 = vunpack.c.l.b16 %v358
    %v1062 = vunpack.c.h.b16 %v358
    %v1063 = vunpack.c.l.b16 %v359
    %v1064 = vunpack.c.h.b16 %v359
    %v1065 = vunpack.c.l.b16 %v360
    %v1066 = vunpack.c.h.b16 %v360
    %v1067 = vunpack.c.l.b16 %v361
    %v1068 = vunpack.c.h.b16 %v361
    %v1069 = vunpack.c.l.b16 %v362
    %v1070 = vunpack.c.h.b16 %v362
    %v1071 = vunpack.c.l.b16 %v363
    %v1072 = vunpack.c.h.b16 %v363
    %v1073 = vunpack.c.l.b16 %v364
    %v1074 = vunpack.c.h.b16 %v364
    %v1075 = vunpack.c.l.b16 %v365
    %v1076 = vunpack.c.h.b16 %v365
    %v1077 = vunpack.c.l.b16 %v366
    %v1078 = vunpack.c.h.b16 %v366
    %v1079 = vunpack.c.l.b16 %v367
    %v1080 = vunpack.c.h.b16 %v367
    %v1081 = vunpack.c.l.b16 %v368
    %v1082 = vunpack.c.h.b16 %v368
    %v1083 = vunpack.c.l.b16 %v369
    %v1084 = vunpack.c.h.b16 %v369
    %v1085 = vunpack.c.l.b16 %v370
    %v1086 = vunpack.c.h.b16 %v370
    %v1087 = vunpack.c.l.b16 %v371
    %v1088 = vunpack.c.h.b16 %v371
    %v1089 = vunpack.c.l.b16 %v372
    %v1090 = vunpack.c.h.b16 %v372
    %v1091 = vunpack.c.l.b16 %v373
    %v1092 = vunpack.c.h.b16 %v373
    %v1093 = vunpack.c.l.b16 %v374
    %v1094 = vunpack.c.h.b16 %v374
    %v1095 = vunpack.c.l.b16 %v375
    %v1096 = vunpack.c.h.b16 %v375
    %v1097 = vunpack.c.l.b16 %v376
    %v1098 = vunpack.c.h.b16 %v376
    %v1099 = vunpack.c.l.b16 %v377
    %v1100 = vunpack.c.h.b16 %v377
    %v1101 = vunpack.c.l.b16 %v378
    %v1102 = vunpack.c.h.b16 %v378
    %v1103 = vunpack.c.l.b16 %v379
    %v1104 = vunpack.c.h.b16 %v379
    %v1105 = vunpack.c.l.b16 %v380
    %v1106 = vunpack.c.h.b16 %v380
    %v1107 = vunpack.c.l.b16 %v381
    %v1108 = vunpack.c.h.b16 %v381
    %v1109 = vunpack.c.l.b16 %v382
    %v1110 = vunpack.c.h.b16 %v382
    %v1111 = vunpack.c.l.b16 %v383
    %v1112 = vunpack.c.h.b16 %v383
    %v1113 = vunpack.c.l.b16 %v384
    %v1114 = vunpack.c.h.b16 %v384
    %v1115 = vunpack.c.l.b16 %v385
    %v1116 = vunpack.c.h.b16 %v385
    %v1117 = vunpack.c.l.b16 %v386
    %v1118 = vunpack.c.h.b16 %v386
    %v1119 = vunpack.c.l.b16 %v387
    %v1120 = vunpack.c.h.b16 %v387
    %v1121 = vunpack.c.l.b16 %v388
    %v1122 = vunpack.c.h.b16 %v388
    %v1123 = vunpack.c.l.b16 %v389
    %v1124 = vunpack.c.h.b16 %v389
    %v1125 = vunpack.c.l.b16 %v390
    %v1126 = vunpack.c.h.b16 %v390
    %v1127 = vunpack.c.l.b16 %v391
    %v1128 = vunpack.c.h.b16 %v391
    %v1129 = vunpack.c.l.b16 %v392
    %v1130 = vunpack.c.h.b16 %v392
    %v1131 = vunpack.c.l.b16 %v393
    %v1132 = vunpack.c.h.b16 %v393
    %v1133 = vunpack.c.l.b16 %v394
    %v1134 = vunpack.c.h.b16 %v394
    %v1135 = vunpack.c.l.b16 %v395
    %v1136 = vunpack.c.h.b16 %v395
    %v1137 = vunpack.c.l.b16 %v396
    %v1138 = vunpack.c.h.b16 %v396
    %v1139 = vunpack.c.l.b16 %v397
    %v1140 = vunpack.c.h.b16 %v397
    %v1141 = vunpack.c.l.b16 %v398
    %v1142 = vunpack.c.h.b16 %v398
    %v1143 = vunpack.c.l.b16 %v399
    %v1144 = vunpack.c.h.b16 %v399
    %v1145 = vunpack.c.l.b16 %v400
    %v1146 = vunpack.c.h.b16 %v400
    %v1147 = vunpack.c.l.b16 %v401
    %v1148 = vunpack.c.h.b16 %v401
    %v1149 = vunpack.c.l.b16 %v402
    %v1150 = vunpack.c.h.b16 %v402
    %v1151 = vunpack.c.l.b16 %v403
    %v1152 = vunpack.c.h.b16 %v403
    %v1153 = vunpack.c.l.b16 %v404
    %v1154 = vunpack.c.h.b16 %v404
    %v1155 = vunpack.c.l.b16 %v405
    %v1156 = vunpack.c.h.b16 %v405
    %v1157 = vunpack.c.l.b16 %v406
    %v1158 = vunpack.c.h.b16 %v406
    %v1159 = vunpack.c.l.b16 %v407
    %v1160 = vunpack.c.h.b16 %v407
    %v1161 = vunpack.c.l.b16 %v408
    %v1162 = vunpack.c.h.b16 %v408
    %v1163 = vunpack.c.l.b16 %v409
    %v1164 = vunpack.c.h.b16 %v409
    %v1165 = vunpack.c.l.b16 %v410
    %v1166 = vunpack.c.h.b16 %v410
    %v1167 = vunpack.c.l.b16 %v411
    %v1168 = vunpack.c.h.b16 %v411
    %v1169 = vunpack.c.l.b16 %v412
    %v1170 = vunpack.c.h.b16 %v412
    %v1171 = vunpack.c.l.b16 %v413
    %v1172 = vunpack.c.h.b16 %v413
    %v1173 = vunpack.c.l.b16 %v414
    %v1174 = vunpack.c.h.b16 %v414
    %v1175 = vunpack.c.l.b16 %v415
    %v1176 = vunpack.c.h.b16 %v415
    %v1177 = vunpack.c.l.b16 %v416
    %v1178 = vunpack.c.h.b16 %v416
    %v1179 = vunpack.c.l.b16 %v417
    %v1180 = vunpack.c.h.b16 %v417
    %v1181 = vunpack.c.l.b16 %v418
    %v1182 = vunpack.c.h.b16 %v418
    %v1183 = vunpack.c.l.b16 %v419
    %v1184 = vunpack.c.h.b16 %v419
    %v1185 = vunpack.c.l.b16 %v420
    %v1186 = vunpack.c.h.b16 %v420
    %v1187 = vunpack.c.l.b16 %v421
    %v1188 = vunpack.c.h.b16 %v421
    %v1189 = vunpack.c.l.b16 %v422
    %v1190 = vunpack.c.h.b16 %v422
    %v1191 = vpack.c.b16 %v683, %v679
    %v1192 = vpack.c.b16 %v684, %v680
    %v1193 = vpack.c.b16 %v685, %v681
    %v1194 = vpack.c.b16 %v686, %v682
    %v1195 = vpack.c.b16 %v691, %v687
    %v1196 = vpack.c.b16 %v692, %v688
    %v1197 = vpack.c.b16 %v693, %v689
    %v1198 = vpack.c.b16 %v694, %v690
    %v1199 = vpack.c.b16 %v699, %v695
    %v1200 = vpack.c.b16 %v700, %v696
    %v1201 = vpack.c.b16 %v701, %v697
    %v1202 = vpack.c.b16 %v702, %v698
    %v1203 = vpack.c.b16 %v707, %v703
    %v1204 = vpack.c.b16 %v708, %v704
    %v1205 = vpack.c.b16 %v709, %v705
    %v1206 = vpack.c.b16 %v710, %v706
    %v1207 = vpack.c.b16 %v715, %v711
    %v1208 = vpack.c.b16 %v716, %v712
    %v1209 = vpack.c.b16 %v717, %v713
    %v1210 = vpack.c.b16 %v718, %v714
    %v1211 = vpack.c.b16 %v723, %v719
    %v1212 = vpack.c.b16 %v724, %v720
    %v1213 = vpack.c.b16 %v725, %v721
    %v1214 = vpack.c.b16 %v726, %v722
    %v1215 = vpack.c.b16 %v731, %v727
    %v1216 = vpack.c.b16 %v732, %v728
    %v1217 = vpack.c.b16 %v733, %v729
    %v1218 = vpack.c.b16 %v734, %v730
    %v1219 = vpack.c.b16 %v739, %v735
    %v1220 = vpack.c.b16 %v740, %v736
    %v1221 = vpack.c.b16 %v741, %v737
    %v1222 = vpack.c.b16 %v742, %v738
    %v1223 = vpack.c.b16 %v747, %v743
    %v1224 = vpack.c.b16 %v748, %v744
    %v1225 = vpack.c.b16 %v749, %v745
    %v1226 = vpack.c.b16 %v750, %v746
    %v1227 = vpack.c.b16 %v755, %v751
    %v1228 = vpack.c.b16 %v756, %v752
    %v1229 = vpack.c.b16 %v757, %v753
    %v1230 = vpack.c.b16 %v758, %v754
    %v1231 = vpack.c.b16 %v763, %v759
    %v1232 = vpack.c.b16 %v764, %v760
    %v1233 = vpack.c.b16 %v765, %v761
    %v1234 = vpack.c.b16 %v766, %v762
    %v1235 = vpack.c.b16 %v771, %v767
    %v1236 = vpack.c.b16 %v772, %v768
    %v1237 = vpack.c.b16 %v773, %v769
    %v1238 = vpack.c.b16 %v774, %v770
    %v1239 = vpack.c.b16 %v779, %v775
    %v1240 = vpack.c.b16 %v780, %v776
    %v1241 = vpack.c.b16 %v781, %v777
    %v1242 = vpack.c.b16 %v782, %v778
    %v1243 = vpack.c.b16 %v787, %v783
    %v1244 = vpack.c.b16 %v788, %v784
    %v1245 = vpack.c.b16 %v789, %v785
    %v1246 = vpack.c.b16 %v790, %v786
    %v1247 = vpack.c.b16 %v795, %v791
    %v1248 = vpack.c.b16 %v796, %v792
    %v1249 = vpack.c.b16 %v797, %v793
    %v1250 = vpack.c.b16 %v798, %v794
    %v1251 = vpack.c.b16 %v803, %v799
    %v1252 = vpack.c.b16 %v804, %v800
    %v1253 = vpack.c.b16 %v805, %v801
    %v1254 = vpack.c.b16 %v806, %v802
    %v1255 = vpack.c.b16 %v811, %v807
    %v1256 = vpack.c.b16 %v812, %v808
    %v1257 = vpack.c.b16 %v813, %v809
    %v1258 = vpack.c.b16 %v814, %v810
    %v1259 = vpack.c.b16 %v819, %v815
    %v1260 = vpack.c.b16 %v820, %v816
    %v1261 = vpack.c.b16 %v821, %v817
    %v1262 = vpack.c.b16 %v822, %v818
    %v1263 = vpack.c.b16 %v827, %v823
    %v1264 = vpack.c.b16 %v828, %v824
    %v1265 = vpack.c.b16 %v829, %v825
    %v1266 = vpack.c.b16 %v830, %v826
    %v1267 = vpack.c.b16 %v835, %v831
    %v1268 = vpack.c.b16 %v836, %v832
    %v1269 = vpack.c.b16 %v837, %v833
    %v1270 = vpack.c.b16 %v838, %v834
    %v1271 = vpack.c.b16 %v843, %v839
    %v1272 = vpack.c.b16 %v844, %v840
    %v1273 = vpack.c.b16 %v845, %v841
    %v1274 = vpack.c.b16 %v846, %v842
    %v1275 = vpack.c.b16 %v851, %v847
    %v1276 = vpack.c.b16 %v852, %v848
    %v1277 = vpack.c.b16 %v853, %v849
    %v1278 = vpack.c.b16 %v854, %v850
    %v1279 = vpack.c.b16 %v859, %v855
    %v1280 = vpack.c.b16 %v860, %v856
    %v1281 = vpack.c.b16 %v861, %v857
    %v1282 = vpack.c.b16 %v862, %v858
    %v1283 = vpack.c.b16 %v867, %v863
    %v1284 = vpack.c.b16 %v868, %v864
    %v1285 = vpack.c.b16 %v869, %v865
    %v1286 = vpack.c.b16 %v870, %v866
    %v1287 = vpack.c.b16 %v875, %v871
    %v1288 = vpack.c.b16 %v876, %v872
    %v1289 = vpack.c.b16 %v877, %v873
    %v1290 = vpack.c.b16 %v878, %v874
    %v1291 = vpack.c.b16 %v883, %v879
    %v1292 = vpack.c.b16 %v884, %v880
    %v1293 = vpack.c.b16 %v885, %v881
    %v1294 = vpack.c.b16 %v886, %v882
    %v1295 = vpack.c.b16 %v891, %v887
    %v1296 = vpack.c.b16 %v892, %v888
    %v1297 = vpack.c.b16 %v893, %v889
    %v1298 = vpack.c.b16 %v894, %v890
    %v1299 = vpack.c.b16 %v899, %v895
    %v1300 = vpack.c.b16 %v900, %v896
    %v1301 = vpack.c.b16 %v901, %v897
    %v1302 = vpack.c.b16 %v902, %v898
    %v1303 = vpack.c.b16 %v907, %v903
    %v1304 = vpack.c.b16 %v908, %v904
    %v1305 = vpack.c.b16 %v909, %v905
    %v1306 = vpack.c.b16 %v910, %v906
    %v1307 = vpack.c.b16 %v915, %v911
    %v1308 = vpack.c.b16 %v916, %v912
    %v1309 = vpack.c.b16 %v917, %v913
    %v1310 = vpack.c.b16 %v918, %v914
    %v1311 = vpack.c.b16 %v923, %v919
    %v1312 = vpack.c.b16 %v924, %v920
    %v1313 = vpack.c.b16 %v925, %v921
    %v1314 = vpack.c.b16 %v926, %v922
    %v1315 = vpack.c.b16 %v931, %v927
    %v1316 = vpack.c.b16 %v932, %v928
    %v1317 = vpack.c.b16 %v933, %v929
    %v1318 = vpack.c.b16 %v934, %v930
    %v1319 = vpack.c.b16 %v939, %v935
    %v1320 = vpack.c.b16 %v940, %v936
    %v1321 = vpack.c.b16 %v941, %v937
    %v1322 = vpack.c.b16 %v942, %v938
    %v1323 = vpack.c.b16 %v947, %v943
    %v1324 = vpack.c.b16 %v948, %v944
    %v1325 = vpack.c.b16 %v949, %v945
    %v1326 = vpack.c.b16 %v950, %v946
    %v1327 = vpack.c.b16 %v955, %v951
    %v1328 = vpack.c.b16 %v956, %v952
    %v1329 = vpack.c.b16 %v957, %v953
    %v1330 = vpack.c.b16 %v958, %v954
    %v1331 = vpack.c.b16 %v963, %v959
    %v1332 = vpack.c.b16 %v964, %v960
    %v1333 = vpack.c.b16 %v965, %v961
    %v1334 = vpack.c.b16 %v966, %v962
    %v1335 = vpack.c.b16 %v971, %v967
    %v1336 = vpack.c.b16 %v972, %v968
    %v1337 = vpack.c.b16 %v973, %v969
    %v1338 = vpack.c.b16 %v974, %v970
    %v1339 = vpack.c.b16 %v979, %v975
    %v1340 = vpack.c.b16 %v980, %v976
    %v1341 = vpack.c.b16 %v981, %v977
    %v1342 = vpack.c.b16 %v982, %v978
    %v1343 = vpack.c.b16 %v987, %v983
    %v1344 = vpack.c.b16 %v988, %v984
    %v1345 = vpack.c.b16 %v989, %v985
    %v1346 = vpack.c.b16 %v990, %v986
    %v1347 = vpack.c.b16 %v995, %v991
    %v1348 = vpack.c.b16 %v996, %v992
    %v1349 = vpack.c.b16 %v997, %v993
    %v1350 = vpack.c.b16 %v998, %v994
    %v1351 = vpack.c.b16 %v1003, %v999
    %v1352 = vpack.c.b16 %v1004, %v1000
    %v1353 = vpack.c.b16 %v1005, %v1001
    %v1354 = vpack.c.b16 %v1006, %v1002
    %v1355 = vpack.c.b16 %v1011, %v1007
    %v1356 = vpack.c.b16 %v1012, %v1008
    %v1357 = vpack.c.b16 %v1013, %v1009
    %v1358 = vpack.c.b16 %v1014, %v1010
    %v1359 = vpack.c.b16 %v1019, %v1015
    %v1360 = vpack.c.b16 %v1020, %v1016
    %v1361 = vpack.c.b16 %v1021, %v1017
    %v1362 = vpack.c.b16 %v1022, %v1018
    %v1363 = vpack.c.b16 %v1027, %v1023
    %v1364 = vpack.c.b16 %v1028, %v1024
    %v1365 = vpack.c.b16 %v1029, %v1025
    %v1366 = vpack.c.b16 %v1030, %v1026
    %v1367 = vpack.c.b16 %v1035, %v1031
    %v1368 = vpack.c.b16 %v1036, %v1032
    %v1369 = vpack.c.b16 %v1037, %v1033
    %v1370 = vpack.c.b16 %v1038, %v1034
    %v1371 = vpack.c.b16 %v1043, %v1039
    %v1372 = vpack.c.b16 %v1044, %v1040
    %v1373 = vpack.c.b16 %v1045, %v1041
    %v1374 = vpack.c.b16 %v1046, %v1042
    %v1375 = vpack.c.b16 %v1051, %v1047
    %v1376 = vpack.c.b16 %v1052, %v1048
    %v1377 = vpack.c.b16 %v1053, %v1049
    %v1378 = vpack.c.b16 %v1054, %v1050
    %v1379 = vpack.c.b16 %v1059, %v1055
    %v1380 = vpack.c.b16 %v1060, %v1056
    %v1381 = vpack.c.b16 %v1061, %v1057
    %v1382 = vpack.c.b16 %v1062, %v1058
    %v1383 = vpack.c.b16 %v1067, %v1063
    %v1384 = vpack.c.b16 %v1068, %v1064
    %v1385 = vpack.c.b16 %v1069, %v1065
    %v1386 = vpack.c.b16 %v1070, %v1066
    %v1387 = vpack.c.b16 %v1075, %v1071
    %v1388 = vpack.c.b16 %v1076, %v1072
    %v1389 = vpack.c.b16 %v1077, %v1073
    %v1390 = vpack.c.b16 %v1078, %v1074
    %v1391 = vpack.c.b16 %v1083, %v1079
    %v1392 = vpack.c.b16 %v1084, %v1080
    %v1393 = vpack.c.b16 %v1085, %v1081
    %v1394 = vpack.c.b16 %v1086, %v1082
    %v1395 = vpack.c.b16 %v1091, %v1087
    %v1396 = vpack.c.b16 %v1092, %v1088
    %v1397 = vpack.c.b16 %v1093, %v1089
    %v1398 = vpack.c.b16 %v1094, %v1090
    %v1399 = vpack.c.b16 %v1099, %v1095
    %v1400 = vpack.c.b16 %v1100, %v1096
    %v1401 = vpack.c.b16 %v1101, %v1097
    %v1402 = vpack.c.b16 %v1102, %v1098
    %v1403 = vpack.c.b16 %v1107, %v1103
    %v1404 = vpack.c.b16 %v1108, %v1104
    %v1405 = vpack.c.b16 %v1109, %v1105
    %v1406 = vpack.c.b16 %v1110, %v1106
    %v1407 = vpack.c.b16 %v1115, %v1111
    %v1408 = vpack.c.b16 %v1116, %v1112
    %v1409 = vpack.c.b16 %v1117, %v1113
    %v1410 = vpack.c.b16 %v1118, %v1114
    %v1411 = vpack.c.b16 %v1123, %v1119
    %v1412 = vpack.c.b16 %v1124, %v1120
    %v1413 = vpack.c.b16 %v1125, %v1121
    %v1414 = vpack.c.b16 %v1126, %v1122
    %v1415 = vpack.c.b16 %v1131, %v1127
    %v1416 = vpack.c.b16 %v1132, %v1128
    %v1417 = vpack.c.b16 %v1133, %v1129
    %v1418 = vpack.c.b16 %v1134, %v1130
    %v1419 = vpack.c.b16 %v1139, %v1135
    %v1420 = vpack.c.b16 %v1140, %v1136
    %v1421 = vpack.c.b16 %v1141, %v1137
    %v1422 = vpack.c.b16 %v1142, %v1138
    %v1423 = vpack.c.b16 %v1147, %v1143
    %v1424 = vpack.c.b16 %v1148, %v1144
    %v1425 = vpack.c.b16 %v1149, %v1145
    %v1426 = vpack.c.b16 %v1150, %v1146
    %v1427 = vpack.c.b16 %v1155, %v1151
    %v1428 = vpack.c.b16 %v1156, %v1152
    %v1429 = vpack.c.b16 %v1157, %v1153
    %v1430 = vpack.c.b16 %v1158, %v1154
    %v1431 = vpack.c.b16 %v1163, %v1159
    %v1432 = vpack.c.b16 %v1164, %v1160
    %v1433 = vpack.c.b16 %v1165, %v1161
    %v1434 = vpack.c.b16 %v1166, %v1162
    %v1435 = vpack.c.b16 %v1171, %v1167
    %v1436 = vpack.c.b16 %v1172, %v1168
    %v1437 = vpack.c.b16 %v1173, %v1169
    %v1438 = vpack.c.b16 %v1174, %v1170
    %v1439 = vpack.c.b16 %v1179, %v1175
    %v1440 = vpack.c.b16 %v1180, %v1176
    %v1441 = vpack.c.b16 %v1181, %v1177
    %v1442 = vpack.c.b16 %v1182, %v1178
    %v1443 = vpack.c.b16 %v1187, %v1183
    %v1444 = vpack.c.b16 %v1188, %v1184
    %v1445 = vpack.c.b16 %v1189, %v1185
    %v1446 = vpack.c.b16 %v1190, %v1186
    %1703 = vmatprep.subr.bf16.mxu0 %v1220
    %1704 = vmatpush1.bf16.msra.mxu0 %v1219
    %1705 = vmatprep.subr.bf16.mxu0 %v1216
    %1706 = vmatpush1.bf16.msra.mxu0 %v1215
    %1707 = vmatprep.subr.bf16.mxu0 %v1212
    %1708 = vmatpush1.bf16.msra.mxu0 %v1211
    %1709 = vmatprep.subr.bf16.mxu0 %v1208
    %1710 = vmatpush1.bf16.msra.mxu0 %v1207
    %1711 = vmatprep.subr.bf16.mxu0 %v1204
    %1712 = vmatpush1.bf16.msra.mxu0 %v1203
    %1713 = vmatprep.subr.bf16.mxu0 %v1200
    %1714 = vmatpush1.bf16.msra.mxu0 %v1199
    %1715 = vmatprep.subr.bf16.mxu0 %v1196
    %1716 = vmatpush1.bf16.msra.mxu0 %v1195
    %1717 = vmatprep.subr.bf16.mxu0 %v1192
    %1718 = vmatpush1.bf16.msra.mxu0 %v1191
    %1719 = vmatprep.subr.bf16.mxu0 %v1252
    %1720 = vmatpush2.bf16.msra.mxu0 %v1251
    %1721 = vmatprep.subr.bf16.mxu0 %v1248
    %1722 = vmatpush2.bf16.msra.mxu0 %v1247
    %1723 = vmatprep.subr.bf16.mxu0 %v1244
    %1724 = vmatpush2.bf16.msra.mxu0 %v1243
    %1725 = vmatprep.subr.bf16.mxu0 %v1240
    %1726 = vmatpush2.bf16.msra.mxu0 %v1239
    %1727 = vmatprep.subr.bf16.mxu0 %v1236
    %1728 = vmatpush2.bf16.msra.mxu0 %v1235
    %1729 = vmatprep.subr.bf16.mxu0 %v1232
    %1730 = vmatpush2.bf16.msra.mxu0 %v1231
    %1731 = vmatprep.subr.bf16.mxu0 %v1228
    %1732 = vmatpush2.bf16.msra.mxu0 %v1227
    %1733 = vmatprep.subr.bf16.mxu0 %v1224
    %1734 = vmatpush2.bf16.msra.mxu0 %v1223
    %1735 = vmatprep.mubr.bf16.mxu0 %v160
    %1736 = vmatmul.mubr.bf16.gmra.mxu0 %v159
    %v1737 = vpop.f32.mrf.mxu0
    %v1738 = vadd.f32 0.0, %v1737
    %v1739 = vpop.f32.mrf.mxu0
    %v1740 = vadd.f32 0.0, %v1739
    %v1741 = vpop.f32.mrf.mxu0
    %v1742 = vpop.f32.mrf.mxu0
    %1743 = vdwg.mxu0
    %1744 = vmatprep.subr.bf16.mxu0 %v1284
    %1745 = vmatpush1.bf16.msra.mxu0 %v1283
    %1746 = vmatprep.subr.bf16.mxu0 %v1280
    %1747 = vmatpush1.bf16.msra.mxu0 %v1279
    %1748 = vmatprep.subr.bf16.mxu0 %v1276
    %1749 = vmatpush1.bf16.msra.mxu0 %v1275
    %1750 = vmatprep.subr.bf16.mxu0 %v1272
    %1751 = vmatpush1.bf16.msra.mxu0 %v1271
    %1752 = vmatprep.subr.bf16.mxu0 %v1268
    %1753 = vmatpush1.bf16.msra.mxu0 %v1267
    %1754 = vmatprep.subr.bf16.mxu0 %v1264
    %1755 = vmatpush1.bf16.msra.mxu0 %v1263
    %1756 = vmatprep.subr.bf16.mxu0 %v1260
    %1757 = vmatpush1.bf16.msra.mxu0 %v1259
    %1758 = vmatprep.subr.bf16.mxu0 %v1256
    %1759 = vmatpush1.bf16.msra.mxu0 %v1255
    %1760 = vmatprep.subr.bf16.mxu0 %v1316
    %1761 = vmatpush2.bf16.msra.mxu0 %v1315
    %1762 = vmatprep.subr.bf16.mxu0 %v1312
    %1763 = vmatpush2.bf16.msra.mxu0 %v1311
    %1764 = vmatprep.subr.bf16.mxu0 %v1308
    %1765 = vmatpush2.bf16.msra.mxu0 %v1307
    %1766 = vmatprep.subr.bf16.mxu0 %v1304
    %1767 = vmatpush2.bf16.msra.mxu0 %v1303
    %1768 = vmatprep.subr.bf16.mxu0 %v1300
    %1769 = vmatpush2.bf16.msra.mxu0 %v1299
    %1770 = vmatprep.subr.bf16.mxu0 %v1296
    %1771 = vmatpush2.bf16.msra.mxu0 %v1295
    %1772 = vmatprep.subr.bf16.mxu0 %v1292
    %1773 = vmatpush2.bf16.msra.mxu0 %v1291
    %1774 = vmatprep.subr.bf16.mxu0 %v1288
    %1775 = vmatpush2.bf16.msra.mxu0 %v1287
    %1776 = vmatprep.mubr.bf16.mxu0 %v162
    %1777 = vmatmul.mubr.bf16.gmra.mxu0 %v161
    %v1778 = vpop.f32.mrf.mxu0
    %v1779 = vadd.f32 %v1738, %v1778
    %v1780 = vpop.f32.mrf.mxu0
    %v1781 = vadd.f32 %v1740, %v1780
    %v1782 = vpop.f32.mrf.mxu0
    %v1783 = vpop.f32.mrf.mxu0
    %1784 = vdwg.mxu0
    %1785 = vmatprep.subr.bf16.mxu0 %v1348
    %1786 = vmatpush1.bf16.msra.mxu0 %v1347
    %1787 = vmatprep.subr.bf16.mxu0 %v1344
    %1788 = vmatpush1.bf16.msra.mxu0 %v1343
    %1789 = vmatprep.subr.bf16.mxu0 %v1340
    %1790 = vmatpush1.bf16.msra.mxu0 %v1339
    %1791 = vmatprep.subr.bf16.mxu0 %v1336
    %1792 = vmatpush1.bf16.msra.mxu0 %v1335
    %1793 = vmatprep.subr.bf16.mxu0 %v1332
    %1794 = vmatpush1.bf16.msra.mxu0 %v1331
    %1795 = vmatprep.subr.bf16.mxu0 %v1328
    %1796 = vmatpush1.bf16.msra.mxu0 %v1327
    %1797 = vmatprep.subr.bf16.mxu0 %v1324
    %1798 = vmatpush1.bf16.msra.mxu0 %v1323
    %1799 = vmatprep.subr.bf16.mxu0 %v1320
    %1800 = vmatpush1.bf16.msra.mxu0 %v1319
    %1801 = vmatprep.subr.bf16.mxu0 %v1380
    %1802 = vmatpush2.bf16.msra.mxu0 %v1379
    %1803 = vmatprep.subr.bf16.mxu0 %v1376
    %1804 = vmatpush2.bf16.msra.mxu0 %v1375
    %1805 = vmatprep.subr.bf16.mxu0 %v1372
    %1806 = vmatpush2.bf16.msra.mxu0 %v1371
    %1807 = vmatprep.subr.bf16.mxu0 %v1368
    %1808 = vmatpush2.bf16.msra.mxu0 %v1367
    %1809 = vmatprep.subr.bf16.mxu0 %v1364
    %1810 = vmatpush2.bf16.msra.mxu0 %v1363
    %1811 = vmatprep.subr.bf16.mxu0 %v1360
    %1812 = vmatpush2.bf16.msra.mxu0 %v1359
    %1813 = vmatprep.subr.bf16.mxu0 %v1356
    %1814 = vmatpush2.bf16.msra.mxu0 %v1355
    %1815 = vmatprep.subr.bf16.mxu0 %v1352
    %1816 = vmatpush2.bf16.msra.mxu0 %v1351
    %1817 = vmatprep.mubr.bf16.mxu0 %v164
    %1818 = vmatmul.mubr.bf16.gmra.mxu0 %v163
    %v1819 = vpop.f32.mrf.mxu0
    %v1820 = vadd.f32 %v1779, %v1819
    %v1821 = vpop.f32.mrf.mxu0
    %v1822 = vadd.f32 %v1781, %v1821
    %v1823 = vpop.f32.mrf.mxu0
    %v1824 = vpop.f32.mrf.mxu0
    %1825 = vdwg.mxu0
    %1826 = vmatprep.subr.bf16.mxu0 %v1412
    %1827 = vmatpush1.bf16.msra.mxu0 %v1411
    %1828 = vmatprep.subr.bf16.mxu0 %v1408
    %1829 = vmatpush1.bf16.msra.mxu0 %v1407
    %1830 = vmatprep.subr.bf16.mxu0 %v1404
    %1831 = vmatpush1.bf16.msra.mxu0 %v1403
    %1832 = vmatprep.subr.bf16.mxu0 %v1400
    %1833 = vmatpush1.bf16.msra.mxu0 %v1399
    %1834 = vmatprep.subr.bf16.mxu0 %v1396
    %1835 = vmatpush1.bf16.msra.mxu0 %v1395
    %1836 = vmatprep.subr.bf16.mxu0 %v1392
    %1837 = vmatpush1.bf16.msra.mxu0 %v1391
    %1838 = vmatprep.subr.bf16.mxu0 %v1388
    %1839 = vmatpush1.bf16.msra.mxu0 %v1387
    %1840 = vmatprep.subr.bf16.mxu0 %v1384
    %1841 = vmatpush1.bf16.msra.mxu0 %v1383
    %1842 = vmatprep.subr.bf16.mxu0 %v1444
    %1843 = vmatpush2.bf16.msra.mxu0 %v1443
    %1844 = vmatprep.subr.bf16.mxu0 %v1440
    %1845 = vmatpush2.bf16.msra.mxu0 %v1439
    %1846 = vmatprep.subr.bf16.mxu0 %v1436
    %1847 = vmatpush2.bf16.msra.mxu0 %v1435
    %1848 = vmatprep.subr.bf16.mxu0 %v1432
    %1849 = vmatpush2.bf16.msra.mxu0 %v1431
    %1850 = vmatprep.subr.bf16.mxu0 %v1428
    %1851 = vmatpush2.bf16.msra.mxu0 %v1427
    %1852 = vmatprep.subr.bf16.mxu0 %v1424
    %1853 = vmatpush2.bf16.msra.mxu0 %v1423
    %1854 = vmatprep.subr.bf16.mxu0 %v1420
    %1855 = vmatpush2.bf16.msra.mxu0 %v1419
    %1856 = vmatprep.subr.bf16.mxu0 %v1416
    %1857 = vmatpush2.bf16.msra.mxu0 %v1415
    %1858 = vmatprep.mubr.bf16.mxu0 %v166
    %1859 = vmatmul.mubr.bf16.gmra.mxu0 %v165
    %v1860 = vpop.f32.mrf.mxu0
    %v1861 = vadd.f32 %v1820, %v1860
    %v1862 = vpop.f32.mrf.mxu0
    %v1863 = vadd.f32 %v1822, %v1862
    %v1864 = vpop.f32.mrf.mxu0
    %v1865 = vpop.f32.mrf.mxu0
    %1866 = vdwg.mxu0
    %1867 = vmatprep.subr.bf16.mxu0 %v1222
    %1868 = vmatpush1.bf16.msra.mxu0 %v1221
    %1869 = vmatprep.subr.bf16.mxu0 %v1218
    %1870 = vmatpush1.bf16.msra.mxu0 %v1217
    %1871 = vmatprep.subr.bf16.mxu0 %v1214
    %1872 = vmatpush1.bf16.msra.mxu0 %v1213
    %1873 = vmatprep.subr.bf16.mxu0 %v1210
    %1874 = vmatpush1.bf16.msra.mxu0 %v1209
    %1875 = vmatprep.subr.bf16.mxu0 %v1206
    %1876 = vmatpush1.bf16.msra.mxu0 %v1205
    %1877 = vmatprep.subr.bf16.mxu0 %v1202
    %1878 = vmatpush1.bf16.msra.mxu0 %v1201
    %1879 = vmatprep.subr.bf16.mxu0 %v1198
    %1880 = vmatpush1.bf16.msra.mxu0 %v1197
    %1881 = vmatprep.subr.bf16.mxu0 %v1194
    %1882 = vmatpush1.bf16.msra.mxu0 %v1193
    %1883 = vmatprep.subr.bf16.mxu0 %v1254
    %1884 = vmatpush2.bf16.msra.mxu0 %v1253
    %1885 = vmatprep.subr.bf16.mxu0 %v1250
    %1886 = vmatpush2.bf16.msra.mxu0 %v1249
    %1887 = vmatprep.subr.bf16.mxu0 %v1246
    %1888 = vmatpush2.bf16.msra.mxu0 %v1245
    %1889 = vmatprep.subr.bf16.mxu0 %v1242
    %1890 = vmatpush2.bf16.msra.mxu0 %v1241
    %1891 = vmatprep.subr.bf16.mxu0 %v1238
    %1892 = vmatpush2.bf16.msra.mxu0 %v1237
    %1893 = vmatprep.subr.bf16.mxu0 %v1234
    %1894 = vmatpush2.bf16.msra.mxu0 %v1233
    %1895 = vmatprep.subr.bf16.mxu0 %v1230
    %1896 = vmatpush2.bf16.msra.mxu0 %v1229
    %1897 = vmatprep.subr.bf16.mxu0 %v1226
    %1898 = vmatpush2.bf16.msra.mxu0 %v1225
    %1899 = vmatprep.mubr.bf16.mxu0 %v160
    %1900 = vmatmul.mubr.bf16.gmra.mxu0 %v159
    %v1901 = vpop.f32.mrf.mxu0
    %v1902 = vadd.f32 0.0, %v1901
    %v1903 = vpop.f32.mrf.mxu0
    %v1904 = vadd.f32 0.0, %v1903
    %v1905 = vpop.f32.mrf.mxu0
    %v1906 = vpop.f32.mrf.mxu0
    %1907 = vdwg.mxu0
    %1908 = vmatprep.subr.bf16.mxu0 %v1286
    %1909 = vmatpush1.bf16.msra.mxu0 %v1285
    %1910 = vmatprep.subr.bf16.mxu0 %v1282
    %1911 = vmatpush1.bf16.msra.mxu0 %v1281
    %1912 = vmatprep.subr.bf16.mxu0 %v1278
    %1913 = vmatpush1.bf16.msra.mxu0 %v1277
    %1914 = vmatprep.subr.bf16.mxu0 %v1274
    %1915 = vmatpush1.bf16.msra.mxu0 %v1273
    %1916 = vmatprep.subr.bf16.mxu0 %v1270
    %1917 = vmatpush1.bf16.msra.mxu0 %v1269
    %1918 = vmatprep.subr.bf16.mxu0 %v1266
    %1919 = vmatpush1.bf16.msra.mxu0 %v1265
    %1920 = vmatprep.subr.bf16.mxu0 %v1262
    %1921 = vmatpush1.bf16.msra.mxu0 %v1261
    %1922 = vmatprep.subr.bf16.mxu0 %v1258
    %1923 = vmatpush1.bf16.msra.mxu0 %v1257
    %1924 = vmatprep.subr.bf16.mxu0 %v1318
    %1925 = vmatpush2.bf16.msra.mxu0 %v1317
    %1926 = vmatprep.subr.bf16.mxu0 %v1314
    %1927 = vmatpush2.bf16.msra.mxu0 %v1313
    %1928 = vmatprep.subr.bf16.mxu0 %v1310
    %1929 = vmatpush2.bf16.msra.mxu0 %v1309
    %1930 = vmatprep.subr.bf16.mxu0 %v1306
    %1931 = vmatpush2.bf16.msra.mxu0 %v1305
    %1932 = vmatprep.subr.bf16.mxu0 %v1302
    %1933 = vmatpush2.bf16.msra.mxu0 %v1301
    %1934 = vmatprep.subr.bf16.mxu0 %v1298
    %1935 = vmatpush2.bf16.msra.mxu0 %v1297
    %1936 = vmatprep.subr.bf16.mxu0 %v1294
    %1937 = vmatpush2.bf16.msra.mxu0 %v1293
    %1938 = vmatprep.subr.bf16.mxu0 %v1290
    %1939 = vmatpush2.bf16.msra.mxu0 %v1289
    %1940 = vmatprep.mubr.bf16.mxu0 %v162
    %1941 = vmatmul.mubr.bf16.gmra.mxu0 %v161
    %v1942 = vpop.f32.mrf.mxu0
    %v1943 = vadd.f32 %v1902, %v1942
    %v1944 = vpop.f32.mrf.mxu0
    %v1945 = vadd.f32 %v1904, %v1944
    %v1946 = vpop.f32.mrf.mxu0
    %v1947 = vpop.f32.mrf.mxu0
    %1948 = vdwg.mxu0
    %1949 = vmatprep.subr.bf16.mxu0 %v1350
    %1950 = vmatpush1.bf16.msra.mxu0 %v1349
    %1951 = vmatprep.subr.bf16.mxu0 %v1346
    %1952 = vmatpush1.bf16.msra.mxu0 %v1345
    %1953 = vmatprep.subr.bf16.mxu0 %v1342
    %1954 = vmatpush1.bf16.msra.mxu0 %v1341
    %1955 = vmatprep.subr.bf16.mxu0 %v1338
    %1956 = vmatpush1.bf16.msra.mxu0 %v1337
    %1957 = vmatprep.subr.bf16.mxu0 %v1334
    %1958 = vmatpush1.bf16.msra.mxu0 %v1333
    %1959 = vmatprep.subr.bf16.mxu0 %v1330
    %1960 = vmatpush1.bf16.msra.mxu0 %v1329
    %1961 = vmatprep.subr.bf16.mxu0 %v1326
    %1962 = vmatpush1.bf16.msra.mxu0 %v1325
    %1963 = vmatprep.subr.bf16.mxu0 %v1322
    %1964 = vmatpush1.bf16.msra.mxu0 %v1321
    %1965 = vmatprep.subr.bf16.mxu0 %v1382
    %1966 = vmatpush2.bf16.msra.mxu0 %v1381
    %1967 = vmatprep.subr.bf16.mxu0 %v1378
    %1968 = vmatpush2.bf16.msra.mxu0 %v1377
    %1969 = vmatprep.subr.bf16.mxu0 %v1374
    %1970 = vmatpush2.bf16.msra.mxu0 %v1373
    %1971 = vmatprep.subr.bf16.mxu0 %v1370
    %1972 = vmatpush2.bf16.msra.mxu0 %v1369
    %1973 = vmatprep.subr.bf16.mxu0 %v1366
    %1974 = vmatpush2.bf16.msra.mxu0 %v1365
    %1975 = vmatprep.subr.bf16.mxu0 %v1362
    %1976 = vmatpush2.bf16.msra.mxu0 %v1361
    %1977 = vmatprep.subr.bf16.mxu0 %v1358
    %1978 = vmatpush2.bf16.msra.mxu0 %v1357
    %1979 = vmatprep.subr.bf16.mxu0 %v1354
    %1980 = vmatpush2.bf16.msra.mxu0 %v1353
    %1981 = vmatprep.mubr.bf16.mxu0 %v164
    %1982 = vmatmul.mubr.bf16.gmra.mxu0 %v163
    %v1983 = vpop.f32.mrf.mxu0
    %v1984 = vadd.f32 %v1943, %v1983
    %v1985 = vpop.f32.mrf.mxu0
    %v1986 = vadd.f32 %v1945, %v1985
    %v1987 = vpop.f32.mrf.mxu0
    %v1988 = vpop.f32.mrf.mxu0
    %1989 = vdwg.mxu0
    %1990 = vmatprep.subr.bf16.mxu0 %v1414
    %1991 = vmatpush1.bf16.msra.mxu0 %v1413
    %1992 = vmatprep.subr.bf16.mxu0 %v1410
    %1993 = vmatpush1.bf16.msra.mxu0 %v1409
    %1994 = vmatprep.subr.bf16.mxu0 %v1406
    %1995 = vmatpush1.bf16.msra.mxu0 %v1405
    %1996 = vmatprep.subr.bf16.mxu0 %v1402
    %1997 = vmatpush1.bf16.msra.mxu0 %v1401
    %1998 = vmatprep.subr.bf16.mxu0 %v1398
    %1999 = vmatpush1.bf16.msra.mxu0 %v1397
    %2000 = vmatprep.subr.bf16.mxu0 %v1394
    %2001 = vmatpush1.bf16.msra.mxu0 %v1393
    %2002 = vmatprep.subr.bf16.mxu0 %v1390
    %2003 = vmatpush1.bf16.msra.mxu0 %v1389
    %2004 = vmatprep.subr.bf16.mxu0 %v1386
    %2005 = vmatpush1.bf16.msra.mxu0 %v1385
    %2006 = vmatprep.subr.bf16.mxu0 %v1446
    %2007 = vmatpush2.bf16.msra.mxu0 %v1445
    %2008 = vmatprep.subr.bf16.mxu0 %v1442
    %2009 = vmatpush2.bf16.msra.mxu0 %v1441
    %2010 = vmatprep.subr.bf16.mxu0 %v1438
    %2011 = vmatpush2.bf16.msra.mxu0 %v1437
    %2012 = vmatprep.subr.bf16.mxu0 %v1434
    %2013 = vmatpush2.bf16.msra.mxu0 %v1433
    %2014 = vmatprep.subr.bf16.mxu0 %v1430
    %2015 = vmatpush2.bf16.msra.mxu0 %v1429
    %2016 = vmatprep.subr.bf16.mxu0 %v1426
    %2017 = vmatpush2.bf16.msra.mxu0 %v1425
    %2018 = vmatprep.subr.bf16.mxu0 %v1422
    %2019 = vmatpush2.bf16.msra.mxu0 %v1421
    %2020 = vmatprep.subr.bf16.mxu0 %v1418
    %2021 = vmatpush2.bf16.msra.mxu0 %v1417
    %2022 = vmatprep.mubr.bf16.mxu0 %v166
    %2023 = vmatmul.mubr.bf16.gmra.mxu0 %v165
    %v2024 = vpop.f32.mrf.mxu0
    %v2025 = vadd.f32 %v1984, %v2024
    %v2026 = vpop.f32.mrf.mxu0
    %v2027 = vadd.f32 %v1986, %v2026
    %v2028 = vpop.f32.mrf.mxu0
    %v2029 = vpop.f32.mrf.mxu0
    %2030 = vdwg.mxu0
    %v2032 = vlaneseq
    %v2033 = vshrl.u32 %v2032, 7
    %v2034 = vsub.s32 0, %v2033
    %v2035 = vrot.slane %v108, %v2034
    %v2036 = vlaneseq
    %v2037 = vshrl.u32 %v2036, 7
    %v2038 = vsub.s32 1, %v2037
    %v2039 = vrot.slane %v108, %v2038
    %v2040 = vlaneseq
    %v2041 = vshrl.u32 %v2040, 7
    %v2042 = vsub.s32 2, %v2041
    %v2043 = vrot.slane %v108, %v2042
    %v2044 = vlaneseq
    %v2045 = vshrl.u32 %v2044, 7
    %v2046 = vsub.s32 3, %v2045
    %v2047 = vrot.slane %v108, %v2046
    %v2052 = vadd.f32 %v2035, %v1861
    %v2053 = vadd.f32 %v2039, %v1863
    %v2054 = vadd.f32 %v2043, %v2025
    %v2055 = vadd.f32 %v2047, %v2027
    %s2056 = sshll.u32 %s110, 4
    %2057 = dma.done %s72, %s2056
    %v2058 = vld [vmem:[#allocation10] sm:$0xff]
    %v2059 = vld [vmem:[#allocation10 + $0x8] sm:$0xff]
    %v2062 = vcombine.high %v2058, %v2058
    %v2064 = vunpack.c.l.s4 1983009808
    %v2065 = vunpack.c.0.s8 %v2064
    %v2066 = vlaneseq
    %v2067 = vshrl.u32 %v2066, 7
    %v2068 = vsub.s32 %v2065, %v2067
    %v2069 = vrot.slane %v2058, %v2068
    %v2071 = vunpack.c.l.s4 1983009808
    %v2072 = vunpack.c.0.s8 %v2071
    %v2073 = vlaneseq
    %v2074 = vshrl.u32 %v2073, 7
    %v2075 = vsub.s32 %v2072, %v2074
    %v2076 = vrot.slane %v2062, %v2075
    %v2077 = vcombine.high %v2069, %v2069
    %v2078 = vcombine.high %v2076, %v2076
    %v2079 = vcombine.high %v2059, %v2059
    %v2081 = vunpack.c.l.s4 1983009808
    %v2082 = vunpack.c.0.s8 %v2081
    %v2083 = vlaneseq
    %v2084 = vshrl.u32 %v2083, 7
    %v2085 = vsub.s32 %v2082, %v2084
    %v2086 = vrot.slane %v2059, %v2085
    %v2088 = vunpack.c.l.s4 1983009808
    %v2089 = vunpack.c.0.s8 %v2088
    %v2090 = vlaneseq
    %v2091 = vshrl.u32 %v2090, 7
    %v2092 = vsub.s32 %v2089, %v2091
    %v2093 = vrot.slane %v2079, %v2092
    %v2094 = vcombine.high %v2086, %v2086
    %v2095 = vcombine.high %v2093, %v2093
    %v2104 = vpack.c.bf16 %v2069, %v2069
    %v2105 = vpack.c.bf16 %v2077, %v2077
    %v2106 = vpack.c.bf16 %v2076, %v2076
    %v2107 = vpack.c.bf16 %v2078, %v2078
    %v2108 = vpack.c.bf16 %v2086, %v2086
    %v2109 = vpack.c.bf16 %v2094, %v2094
    %v2110 = vpack.c.bf16 %v2093, %v2093
    %v2111 = vpack.c.bf16 %v2095, %v2095
    %v2112 = vld [vmem:[#allocation3] sm:$0xff]
    %v2113 = vld [vmem:[#allocation3 + $0x8] sm:$0xff]
    %v2114 = vld [vmem:[#allocation3 + $0x10] sm:$0xff]
    %v2115 = vld [vmem:[#allocation3 + $0x18] sm:$0xff]
    %v2116 = vld [vmem:[#allocation3 + $0x20] sm:$0xff]
    %v2117 = vld [vmem:[#allocation3 + $0x28] sm:$0xff]
    %v2118 = vld [vmem:[#allocation3 + $0x30] sm:$0xff]
    %v2119 = vld [vmem:[#allocation3 + $0x38] sm:$0xff]
    %v2120 = vld [vmem:[#allocation3 + $0x40] sm:$0xff]
    %v2121 = vld [vmem:[#allocation3 + $0x48] sm:$0xff]
    %v2122 = vld [vmem:[#allocation3 + $0x50] sm:$0xff]
    %v2123 = vld [vmem:[#allocation3 + $0x58] sm:$0xff]
    %v2124 = vld [vmem:[#allocation3 + $0x60] sm:$0xff]
    %v2125 = vld [vmem:[#allocation3 + $0x68] sm:$0xff]
    %v2126 = vld [vmem:[#allocation3 + $0x70] sm:$0xff]
    %v2127 = vld [vmem:[#allocation3 + $0x78] sm:$0xff]
    %v2128 = vld [vmem:[#allocation3 + $0x80] sm:$0xff]
    %v2129 = vld [vmem:[#allocation3 + $0x88] sm:$0xff]
    %v2130 = vld [vmem:[#allocation3 + $0x90] sm:$0xff]
    %v2131 = vld [vmem:[#allocation3 + $0x98] sm:$0xff]
    %v2132 = vld [vmem:[#allocation3 + $0xa0] sm:$0xff]
    %v2133 = vld [vmem:[#allocation3 + $0xa8] sm:$0xff]
    %v2134 = vld [vmem:[#allocation3 + $0xb0] sm:$0xff]
    %v2135 = vld [vmem:[#allocation3 + $0xb8] sm:$0xff]
    %v2136 = vld [vmem:[#allocation3 + $0xc0] sm:$0xff]
    %v2137 = vld [vmem:[#allocation3 + $0xc8] sm:$0xff]
    %v2138 = vld [vmem:[#allocation3 + $0xd0] sm:$0xff]
    %v2139 = vld [vmem:[#allocation3 + $0xd8] sm:$0xff]
    %v2140 = vld [vmem:[#allocation3 + $0xe0] sm:$0xff]
    %v2141 = vld [vmem:[#allocation3 + $0xe8] sm:$0xff]
    %v2142 = vld [vmem:[#allocation3 + $0xf0] sm:$0xff]
    %v2143 = vld [vmem:[#allocation3 + $0xf8] sm:$0xff]
    %v2144 = vld [vmem:[#allocation3 + $0x100] sm:$0xff]
    %v2145 = vld [vmem:[#allocation3 + $0x108] sm:$0xff]
    %v2146 = vld [vmem:[#allocation3 + $0x110] sm:$0xff]
    %v2147 = vld [vmem:[#allocation3 + $0x118] sm:$0xff]
    %v2148 = vld [vmem:[#allocation3 + $0x120] sm:$0xff]
    %v2149 = vld [vmem:[#allocation3 + $0x128] sm:$0xff]
    %v2150 = vld [vmem:[#allocation3 + $0x130] sm:$0xff]
    %v2151 = vld [vmem:[#allocation3 + $0x138] sm:$0xff]
    %v2152 = vld [vmem:[#allocation3 + $0x140] sm:$0xff]
    %v2153 = vld [vmem:[#allocation3 + $0x148] sm:$0xff]
    %v2154 = vld [vmem:[#allocation3 + $0x150] sm:$0xff]
    %v2155 = vld [vmem:[#allocation3 + $0x158] sm:$0xff]
    %v2156 = vld [vmem:[#allocation3 + $0x160] sm:$0xff]
    %v2157 = vld [vmem:[#allocation3 + $0x168] sm:$0xff]
    %v2158 = vld [vmem:[#allocation3 + $0x170] sm:$0xff]
    %v2159 = vld [vmem:[#allocation3 + $0x178] sm:$0xff]
    %v2160 = vld [vmem:[#allocation3 + $0x180] sm:$0xff]
    %v2161 = vld [vmem:[#allocation3 + $0x188] sm:$0xff]
    %v2162 = vld [vmem:[#allocation3 + $0x190] sm:$0xff]
    %v2163 = vld [vmem:[#allocation3 + $0x198] sm:$0xff]
    %v2164 = vld [vmem:[#allocation3 + $0x1a0] sm:$0xff]
    %v2165 = vld [vmem:[#allocation3 + $0x1a8] sm:$0xff]
    %v2166 = vld [vmem:[#allocation3 + $0x1b0] sm:$0xff]
    %v2167 = vld [vmem:[#allocation3 + $0x1b8] sm:$0xff]
    %v2168 = vld [vmem:[#allocation3 + $0x1c0] sm:$0xff]
    %v2169 = vld [vmem:[#allocation3 + $0x1c8] sm:$0xff]
    %v2170 = vld [vmem:[#allocation3 + $0x1d0] sm:$0xff]
    %v2171 = vld [vmem:[#allocation3 + $0x1d8] sm:$0xff]
    %v2172 = vld [vmem:[#allocation3 + $0x1e0] sm:$0xff]
    %v2173 = vld [vmem:[#allocation3 + $0x1e8] sm:$0xff]
    %v2174 = vld [vmem:[#allocation3 + $0x1f0] sm:$0xff]
    %v2175 = vld [vmem:[#allocation3 + $0x1f8] sm:$0xff]
    %v2176 = vld [vmem:[#allocation3 + $0x200] sm:$0xff]
    %v2177 = vld [vmem:[#allocation3 + $0x208] sm:$0xff]
    %v2178 = vld [vmem:[#allocation3 + $0x210] sm:$0xff]
    %v2179 = vld [vmem:[#allocation3 + $0x218] sm:$0xff]
    %v2180 = vld [vmem:[#allocation3 + $0x220] sm:$0xff]
    %v2181 = vld [vmem:[#allocation3 + $0x228] sm:$0xff]
    %v2182 = vld [vmem:[#allocation3 + $0x230] sm:$0xff]
    %v2183 = vld [vmem:[#allocation3 + $0x238] sm:$0xff]
    %v2184 = vld [vmem:[#allocation3 + $0x240] sm:$0xff]
    %v2185 = vld [vmem:[#allocation3 + $0x248] sm:$0xff]
    %v2186 = vld [vmem:[#allocation3 + $0x250] sm:$0xff]
    %v2187 = vld [vmem:[#allocation3 + $0x258] sm:$0xff]
    %v2188 = vld [vmem:[#allocation3 + $0x260] sm:$0xff]
    %v2189 = vld [vmem:[#allocation3 + $0x268] sm:$0xff]
    %v2190 = vld [vmem:[#allocation3 + $0x270] sm:$0xff]
    %v2191 = vld [vmem:[#allocation3 + $0x278] sm:$0xff]
    %v2192 = vld [vmem:[#allocation3 + $0x280] sm:$0xff]
    %v2193 = vld [vmem:[#allocation3 + $0x288] sm:$0xff]
    %v2194 = vld [vmem:[#allocation3 + $0x290] sm:$0xff]
    %v2195 = vld [vmem:[#allocation3 + $0x298] sm:$0xff]
    %v2196 = vld [vmem:[#allocation3 + $0x2a0] sm:$0xff]
    %v2197 = vld [vmem:[#allocation3 + $0x2a8] sm:$0xff]
    %v2198 = vld [vmem:[#allocation3 + $0x2b0] sm:$0xff]
    %v2199 = vld [vmem:[#allocation3 + $0x2b8] sm:$0xff]
    %v2200 = vld [vmem:[#allocation3 + $0x2c0] sm:$0xff]
    %v2201 = vld [vmem:[#allocation3 + $0x2c8] sm:$0xff]
    %v2202 = vld [vmem:[#allocation3 + $0x2d0] sm:$0xff]
    %v2203 = vld [vmem:[#allocation3 + $0x2d8] sm:$0xff]
    %v2204 = vld [vmem:[#allocation3 + $0x2e0] sm:$0xff]
    %v2205 = vld [vmem:[#allocation3 + $0x2e8] sm:$0xff]
    %v2206 = vld [vmem:[#allocation3 + $0x2f0] sm:$0xff]
    %v2207 = vld [vmem:[#allocation3 + $0x2f8] sm:$0xff]
    %v2208 = vld [vmem:[#allocation3 + $0x300] sm:$0xff]
    %v2209 = vld [vmem:[#allocation3 + $0x308] sm:$0xff]
    %v2210 = vld [vmem:[#allocation3 + $0x310] sm:$0xff]
    %v2211 = vld [vmem:[#allocation3 + $0x318] sm:$0xff]
    %v2212 = vld [vmem:[#allocation3 + $0x320] sm:$0xff]
    %v2213 = vld [vmem:[#allocation3 + $0x328] sm:$0xff]
    %v2214 = vld [vmem:[#allocation3 + $0x330] sm:$0xff]
    %v2215 = vld [vmem:[#allocation3 + $0x338] sm:$0xff]
    %v2216 = vld [vmem:[#allocation3 + $0x340] sm:$0xff]
    %v2217 = vld [vmem:[#allocation3 + $0x348] sm:$0xff]
    %v2218 = vld [vmem:[#allocation3 + $0x350] sm:$0xff]
    %v2219 = vld [vmem:[#allocation3 + $0x358] sm:$0xff]
    %v2220 = vld [vmem:[#allocation3 + $0x360] sm:$0xff]
    %v2221 = vld [vmem:[#allocation3 + $0x368] sm:$0xff]
    %v2222 = vld [vmem:[#allocation3 + $0x370] sm:$0xff]
    %v2223 = vld [vmem:[#allocation3 + $0x378] sm:$0xff]
    %v2224 = vld [vmem:[#allocation3 + $0x380] sm:$0xff]
    %v2225 = vld [vmem:[#allocation3 + $0x388] sm:$0xff]
    %v2226 = vld [vmem:[#allocation3 + $0x390] sm:$0xff]
    %v2227 = vld [vmem:[#allocation3 + $0x398] sm:$0xff]
    %v2228 = vld [vmem:[#allocation3 + $0x3a0] sm:$0xff]
    %v2229 = vld [vmem:[#allocation3 + $0x3a8] sm:$0xff]
    %v2230 = vld [vmem:[#allocation3 + $0x3b0] sm:$0xff]
    %v2231 = vld [vmem:[#allocation3 + $0x3b8] sm:$0xff]
    %v2232 = vld [vmem:[#allocation3 + $0x3c0] sm:$0xff]
    %v2233 = vld [vmem:[#allocation3 + $0x3c8] sm:$0xff]
    %v2234 = vld [vmem:[#allocation3 + $0x3d0] sm:$0xff]
    %v2235 = vld [vmem:[#allocation3 + $0x3d8] sm:$0xff]
    %v2236 = vld [vmem:[#allocation3 + $0x3e0] sm:$0xff]
    %v2237 = vld [vmem:[#allocation3 + $0x3e8] sm:$0xff]
    %v2238 = vld [vmem:[#allocation3 + $0x3f0] sm:$0xff]
    %v2239 = vld [vmem:[#allocation3 + $0x3f8] sm:$0xff]
    %v2240 = vld [vmem:[#allocation3 + $0x400] sm:$0xff]
    %v2241 = vld [vmem:[#allocation3 + $0x408] sm:$0xff]
    %v2242 = vld [vmem:[#allocation3 + $0x410] sm:$0xff]
    %v2243 = vld [vmem:[#allocation3 + $0x418] sm:$0xff]
    %v2244 = vld [vmem:[#allocation3 + $0x420] sm:$0xff]
    %v2245 = vld [vmem:[#allocation3 + $0x428] sm:$0xff]
    %v2246 = vld [vmem:[#allocation3 + $0x430] sm:$0xff]
    %v2247 = vld [vmem:[#allocation3 + $0x438] sm:$0xff]
    %v2248 = vld [vmem:[#allocation3 + $0x440] sm:$0xff]
    %v2249 = vld [vmem:[#allocation3 + $0x448] sm:$0xff]
    %v2250 = vld [vmem:[#allocation3 + $0x450] sm:$0xff]
    %v2251 = vld [vmem:[#allocation3 + $0x458] sm:$0xff]
    %v2252 = vld [vmem:[#allocation3 + $0x460] sm:$0xff]
    %v2253 = vld [vmem:[#allocation3 + $0x468] sm:$0xff]
    %v2254 = vld [vmem:[#allocation3 + $0x470] sm:$0xff]
    %v2255 = vld [vmem:[#allocation3 + $0x478] sm:$0xff]
    %v2256 = vld [vmem:[#allocation3 + $0x480] sm:$0xff]
    %v2257 = vld [vmem:[#allocation3 + $0x488] sm:$0xff]
    %v2258 = vld [vmem:[#allocation3 + $0x490] sm:$0xff]
    %v2259 = vld [vmem:[#allocation3 + $0x498] sm:$0xff]
    %v2260 = vld [vmem:[#allocation3 + $0x4a0] sm:$0xff]
    %v2261 = vld [vmem:[#allocation3 + $0x4a8] sm:$0xff]
    %v2262 = vld [vmem:[#allocation3 + $0x4b0] sm:$0xff]
    %v2263 = vld [vmem:[#allocation3 + $0x4b8] sm:$0xff]
    %v2264 = vld [vmem:[#allocation3 + $0x4c0] sm:$0xff]
    %v2265 = vld [vmem:[#allocation3 + $0x4c8] sm:$0xff]
    %v2266 = vld [vmem:[#allocation3 + $0x4d0] sm:$0xff]
    %v2267 = vld [vmem:[#allocation3 + $0x4d8] sm:$0xff]
    %v2268 = vld [vmem:[#allocation3 + $0x4e0] sm:$0xff]
    %v2269 = vld [vmem:[#allocation3 + $0x4e8] sm:$0xff]
    %v2270 = vld [vmem:[#allocation3 + $0x4f0] sm:$0xff]
    %v2271 = vld [vmem:[#allocation3 + $0x4f8] sm:$0xff]
    %v2272 = vld [vmem:[#allocation3 + $0x500] sm:$0xff]
    %v2273 = vld [vmem:[#allocation3 + $0x508] sm:$0xff]
    %v2274 = vld [vmem:[#allocation3 + $0x510] sm:$0xff]
    %v2275 = vld [vmem:[#allocation3 + $0x518] sm:$0xff]
    %v2276 = vld [vmem:[#allocation3 + $0x520] sm:$0xff]
    %v2277 = vld [vmem:[#allocation3 + $0x528] sm:$0xff]
    %v2278 = vld [vmem:[#allocation3 + $0x530] sm:$0xff]
    %v2279 = vld [vmem:[#allocation3 + $0x538] sm:$0xff]
    %v2280 = vld [vmem:[#allocation3 + $0x540] sm:$0xff]
    %v2281 = vld [vmem:[#allocation3 + $0x548] sm:$0xff]
    %v2282 = vld [vmem:[#allocation3 + $0x550] sm:$0xff]
    %v2283 = vld [vmem:[#allocation3 + $0x558] sm:$0xff]
    %v2284 = vld [vmem:[#allocation3 + $0x560] sm:$0xff]
    %v2285 = vld [vmem:[#allocation3 + $0x568] sm:$0xff]
    %v2286 = vld [vmem:[#allocation3 + $0x570] sm:$0xff]
    %v2287 = vld [vmem:[#allocation3 + $0x578] sm:$0xff]
    %v2288 = vld [vmem:[#allocation3 + $0x580] sm:$0xff]
    %v2289 = vld [vmem:[#allocation3 + $0x588] sm:$0xff]
    %v2290 = vld [vmem:[#allocation3 + $0x590] sm:$0xff]
    %v2291 = vld [vmem:[#allocation3 + $0x598] sm:$0xff]
    %v2292 = vld [vmem:[#allocation3 + $0x5a0] sm:$0xff]
    %v2293 = vld [vmem:[#allocation3 + $0x5a8] sm:$0xff]
    %v2294 = vld [vmem:[#allocation3 + $0x5b0] sm:$0xff]
    %v2295 = vld [vmem:[#allocation3 + $0x5b8] sm:$0xff]
    %v2296 = vld [vmem:[#allocation3 + $0x5c0] sm:$0xff]
    %v2297 = vld [vmem:[#allocation3 + $0x5c8] sm:$0xff]
    %v2298 = vld [vmem:[#allocation3 + $0x5d0] sm:$0xff]
    %v2299 = vld [vmem:[#allocation3 + $0x5d8] sm:$0xff]
    %v2300 = vld [vmem:[#allocation3 + $0x5e0] sm:$0xff]
    %v2301 = vld [vmem:[#allocation3 + $0x5e8] sm:$0xff]
    %v2302 = vld [vmem:[#allocation3 + $0x5f0] sm:$0xff]
    %v2303 = vld [vmem:[#allocation3 + $0x5f8] sm:$0xff]
    %v2304 = vld [vmem:[#allocation3 + $0x600] sm:$0xff]
    %v2305 = vld [vmem:[#allocation3 + $0x608] sm:$0xff]
    %v2306 = vld [vmem:[#allocation3 + $0x610] sm:$0xff]
    %v2307 = vld [vmem:[#allocation3 + $0x618] sm:$0xff]
    %v2308 = vld [vmem:[#allocation3 + $0x620] sm:$0xff]
    %v2309 = vld [vmem:[#allocation3 + $0x628] sm:$0xff]
    %v2310 = vld [vmem:[#allocation3 + $0x630] sm:$0xff]
    %v2311 = vld [vmem:[#allocation3 + $0x638] sm:$0xff]
    %v2312 = vld [vmem:[#allocation3 + $0x640] sm:$0xff]
    %v2313 = vld [vmem:[#allocation3 + $0x648] sm:$0xff]
    %v2314 = vld [vmem:[#allocation3 + $0x650] sm:$0xff]
    %v2315 = vld [vmem:[#allocation3 + $0x658] sm:$0xff]
    %v2316 = vld [vmem:[#allocation3 + $0x660] sm:$0xff]
    %v2317 = vld [vmem:[#allocation3 + $0x668] sm:$0xff]
    %v2318 = vld [vmem:[#allocation3 + $0x670] sm:$0xff]
    %v2319 = vld [vmem:[#allocation3 + $0x678] sm:$0xff]
    %v2320 = vld [vmem:[#allocation3 + $0x680] sm:$0xff]
    %v2321 = vld [vmem:[#allocation3 + $0x688] sm:$0xff]
    %v2322 = vld [vmem:[#allocation3 + $0x690] sm:$0xff]
    %v2323 = vld [vmem:[#allocation3 + $0x698] sm:$0xff]
    %v2324 = vld [vmem:[#allocation3 + $0x6a0] sm:$0xff]
    %v2325 = vld [vmem:[#allocation3 + $0x6a8] sm:$0xff]
    %v2326 = vld [vmem:[#allocation3 + $0x6b0] sm:$0xff]
    %v2327 = vld [vmem:[#allocation3 + $0x6b8] sm:$0xff]
    %v2328 = vld [vmem:[#allocation3 + $0x6c0] sm:$0xff]
    %v2329 = vld [vmem:[#allocation3 + $0x6c8] sm:$0xff]
    %v2330 = vld [vmem:[#allocation3 + $0x6d0] sm:$0xff]
    %v2331 = vld [vmem:[#allocation3 + $0x6d8] sm:$0xff]
    %v2332 = vld [vmem:[#allocation3 + $0x6e0] sm:$0xff]
    %v2333 = vld [vmem:[#allocation3 + $0x6e8] sm:$0xff]
    %v2334 = vld [vmem:[#allocation3 + $0x6f0] sm:$0xff]
    %v2335 = vld [vmem:[#allocation3 + $0x6f8] sm:$0xff]
    %v2336 = vld [vmem:[#allocation3 + $0x700] sm:$0xff]
    %v2337 = vld [vmem:[#allocation3 + $0x708] sm:$0xff]
    %v2338 = vld [vmem:[#allocation3 + $0x710] sm:$0xff]
    %v2339 = vld [vmem:[#allocation3 + $0x718] sm:$0xff]
    %v2340 = vld [vmem:[#allocation3 + $0x720] sm:$0xff]
    %v2341 = vld [vmem:[#allocation3 + $0x728] sm:$0xff]
    %v2342 = vld [vmem:[#allocation3 + $0x730] sm:$0xff]
    %v2343 = vld [vmem:[#allocation3 + $0x738] sm:$0xff]
    %v2344 = vld [vmem:[#allocation3 + $0x740] sm:$0xff]
    %v2345 = vld [vmem:[#allocation3 + $0x748] sm:$0xff]
    %v2346 = vld [vmem:[#allocation3 + $0x750] sm:$0xff]
    %v2347 = vld [vmem:[#allocation3 + $0x758] sm:$0xff]
    %v2348 = vld [vmem:[#allocation3 + $0x760] sm:$0xff]
    %v2349 = vld [vmem:[#allocation3 + $0x768] sm:$0xff]
    %v2350 = vld [vmem:[#allocation3 + $0x770] sm:$0xff]
    %v2351 = vld [vmem:[#allocation3 + $0x778] sm:$0xff]
    %v2352 = vld [vmem:[#allocation3 + $0x780] sm:$0xff]
    %v2353 = vld [vmem:[#allocation3 + $0x788] sm:$0xff]
    %v2354 = vld [vmem:[#allocation3 + $0x790] sm:$0xff]
    %v2355 = vld [vmem:[#allocation3 + $0x798] sm:$0xff]
    %v2356 = vld [vmem:[#allocation3 + $0x7a0] sm:$0xff]
    %v2357 = vld [vmem:[#allocation3 + $0x7a8] sm:$0xff]
    %v2358 = vld [vmem:[#allocation3 + $0x7b0] sm:$0xff]
    %v2359 = vld [vmem:[#allocation3 + $0x7b8] sm:$0xff]
    %v2360 = vld [vmem:[#allocation3 + $0x7c0] sm:$0xff]
    %v2361 = vld [vmem:[#allocation3 + $0x7c8] sm:$0xff]
    %v2362 = vld [vmem:[#allocation3 + $0x7d0] sm:$0xff]
    %v2363 = vld [vmem:[#allocation3 + $0x7d8] sm:$0xff]
    %v2364 = vld [vmem:[#allocation3 + $0x7e0] sm:$0xff]
    %v2365 = vld [vmem:[#allocation3 + $0x7e8] sm:$0xff]
    %v2366 = vld [vmem:[#allocation3 + $0x7f0] sm:$0xff]
    %v2367 = vld [vmem:[#allocation3 + $0x7f8] sm:$0xff]
    %v2624 = vunpack.c.l.b16 %v2112
    %v2625 = vunpack.c.h.b16 %v2112
    %v2626 = vunpack.c.l.b16 %v2113
    %v2627 = vunpack.c.h.b16 %v2113
    %v2628 = vunpack.c.l.b16 %v2114
    %v2629 = vunpack.c.h.b16 %v2114
    %v2630 = vunpack.c.l.b16 %v2115
    %v2631 = vunpack.c.h.b16 %v2115
    %v2632 = vunpack.c.l.b16 %v2116
    %v2633 = vunpack.c.h.b16 %v2116
    %v2634 = vunpack.c.l.b16 %v2117
    %v2635 = vunpack.c.h.b16 %v2117
    %v2636 = vunpack.c.l.b16 %v2118
    %v2637 = vunpack.c.h.b16 %v2118
    %v2638 = vunpack.c.l.b16 %v2119
    %v2639 = vunpack.c.h.b16 %v2119
    %v2640 = vunpack.c.l.b16 %v2120
    %v2641 = vunpack.c.h.b16 %v2120
    %v2642 = vunpack.c.l.b16 %v2121
    %v2643 = vunpack.c.h.b16 %v2121
    %v2644 = vunpack.c.l.b16 %v2122
    %v2645 = vunpack.c.h.b16 %v2122
    %v2646 = vunpack.c.l.b16 %v2123
    %v2647 = vunpack.c.h.b16 %v2123
    %v2648 = vunpack.c.l.b16 %v2124
    %v2649 = vunpack.c.h.b16 %v2124
    %v2650 = vunpack.c.l.b16 %v2125
    %v2651 = vunpack.c.h.b16 %v2125
    %v2652 = vunpack.c.l.b16 %v2126
    %v2653 = vunpack.c.h.b16 %v2126
    %v2654 = vunpack.c.l.b16 %v2127
    %v2655 = vunpack.c.h.b16 %v2127
    %v2656 = vunpack.c.l.b16 %v2128
    %v2657 = vunpack.c.h.b16 %v2128
    %v2658 = vunpack.c.l.b16 %v2129
    %v2659 = vunpack.c.h.b16 %v2129
    %v2660 = vunpack.c.l.b16 %v2130
    %v2661 = vunpack.c.h.b16 %v2130
    %v2662 = vunpack.c.l.b16 %v2131
    %v2663 = vunpack.c.h.b16 %v2131
    %v2664 = vunpack.c.l.b16 %v2132
    %v2665 = vunpack.c.h.b16 %v2132
    %v2666 = vunpack.c.l.b16 %v2133
    %v2667 = vunpack.c.h.b16 %v2133
    %v2668 = vunpack.c.l.b16 %v2134
    %v2669 = vunpack.c.h.b16 %v2134
    %v2670 = vunpack.c.l.b16 %v2135
    %v2671 = vunpack.c.h.b16 %v2135
    %v2672 = vunpack.c.l.b16 %v2136
    %v2673 = vunpack.c.h.b16 %v2136
    %v2674 = vunpack.c.l.b16 %v2137
    %v2675 = vunpack.c.h.b16 %v2137
    %v2676 = vunpack.c.l.b16 %v2138
    %v2677 = vunpack.c.h.b16 %v2138
    %v2678 = vunpack.c.l.b16 %v2139
    %v2679 = vunpack.c.h.b16 %v2139
    %v2680 = vunpack.c.l.b16 %v2140
    %v2681 = vunpack.c.h.b16 %v2140
    %v2682 = vunpack.c.l.b16 %v2141
    %v2683 = vunpack.c.h.b16 %v2141
    %v2684 = vunpack.c.l.b16 %v2142
    %v2685 = vunpack.c.h.b16 %v2142
    %v2686 = vunpack.c.l.b16 %v2143
    %v2687 = vunpack.c.h.b16 %v2143
    %v2688 = vunpack.c.l.b16 %v2144
    %v2689 = vunpack.c.h.b16 %v2144
    %v2690 = vunpack.c.l.b16 %v2145
    %v2691 = vunpack.c.h.b16 %v2145
    %v2692 = vunpack.c.l.b16 %v2146
    %v2693 = vunpack.c.h.b16 %v2146
    %v2694 = vunpack.c.l.b16 %v2147
    %v2695 = vunpack.c.h.b16 %v2147
    %v2696 = vunpack.c.l.b16 %v2148
    %v2697 = vunpack.c.h.b16 %v2148
    %v2698 = vunpack.c.l.b16 %v2149
    %v2699 = vunpack.c.h.b16 %v2149
    %v2700 = vunpack.c.l.b16 %v2150
    %v2701 = vunpack.c.h.b16 %v2150
    %v2702 = vunpack.c.l.b16 %v2151
    %v2703 = vunpack.c.h.b16 %v2151
    %v2704 = vunpack.c.l.b16 %v2152
    %v2705 = vunpack.c.h.b16 %v2152
    %v2706 = vunpack.c.l.b16 %v2153
    %v2707 = vunpack.c.h.b16 %v2153
    %v2708 = vunpack.c.l.b16 %v2154
    %v2709 = vunpack.c.h.b16 %v2154
    %v2710 = vunpack.c.l.b16 %v2155
    %v2711 = vunpack.c.h.b16 %v2155
    %v2712 = vunpack.c.l.b16 %v2156
    %v2713 = vunpack.c.h.b16 %v2156
    %v2714 = vunpack.c.l.b16 %v2157
    %v2715 = vunpack.c.h.b16 %v2157
    %v2716 = vunpack.c.l.b16 %v2158
    %v2717 = vunpack.c.h.b16 %v2158
    %v2718 = vunpack.c.l.b16 %v2159
    %v2719 = vunpack.c.h.b16 %v2159
    %v2720 = vunpack.c.l.b16 %v2160
    %v2721 = vunpack.c.h.b16 %v2160
    %v2722 = vunpack.c.l.b16 %v2161
    %v2723 = vunpack.c.h.b16 %v2161
    %v2724 = vunpack.c.l.b16 %v2162
    %v2725 = vunpack.c.h.b16 %v2162
    %v2726 = vunpack.c.l.b16 %v2163
    %v2727 = vunpack.c.h.b16 %v2163
    %v2728 = vunpack.c.l.b16 %v2164
    %v2729 = vunpack.c.h.b16 %v2164
    %v2730 = vunpack.c.l.b16 %v2165
    %v2731 = vunpack.c.h.b16 %v2165
    %v2732 = vunpack.c.l.b16 %v2166
    %v2733 = vunpack.c.h.b16 %v2166
    %v2734 = vunpack.c.l.b16 %v2167
    %v2735 = vunpack.c.h.b16 %v2167
    %v2736 = vunpack.c.l.b16 %v2168
    %v2737 = vunpack.c.h.b16 %v2168
    %v2738 = vunpack.c.l.b16 %v2169
    %v2739 = vunpack.c.h.b16 %v2169
    %v2740 = vunpack.c.l.b16 %v2170
    %v2741 = vunpack.c.h.b16 %v2170
    %v2742 = vunpack.c.l.b16 %v2171
    %v2743 = vunpack.c.h.b16 %v2171
    %v2744 = vunpack.c.l.b16 %v2172
    %v2745 = vunpack.c.h.b16 %v2172
    %v2746 = vunpack.c.l.b16 %v2173
    %v2747 = vunpack.c.h.b16 %v2173
    %v2748 = vunpack.c.l.b16 %v2174
    %v2749 = vunpack.c.h.b16 %v2174
    %v2750 = vunpack.c.l.b16 %v2175
    %v2751 = vunpack.c.h.b16 %v2175
    %v2752 = vunpack.c.l.b16 %v2176
    %v2753 = vunpack.c.h.b16 %v2176
    %v2754 = vunpack.c.l.b16 %v2177
    %v2755 = vunpack.c.h.b16 %v2177
    %v2756 = vunpack.c.l.b16 %v2178
    %v2757 = vunpack.c.h.b16 %v2178
    %v2758 = vunpack.c.l.b16 %v2179
    %v2759 = vunpack.c.h.b16 %v2179
    %v2760 = vunpack.c.l.b16 %v2180
    %v2761 = vunpack.c.h.b16 %v2180
    %v2762 = vunpack.c.l.b16 %v2181
    %v2763 = vunpack.c.h.b16 %v2181
    %v2764 = vunpack.c.l.b16 %v2182
    %v2765 = vunpack.c.h.b16 %v2182
    %v2766 = vunpack.c.l.b16 %v2183
    %v2767 = vunpack.c.h.b16 %v2183
    %v2768 = vunpack.c.l.b16 %v2184
    %v2769 = vunpack.c.h.b16 %v2184
    %v2770 = vunpack.c.l.b16 %v2185
    %v2771 = vunpack.c.h.b16 %v2185
    %v2772 = vunpack.c.l.b16 %v2186
    %v2773 = vunpack.c.h.b16 %v2186
    %v2774 = vunpack.c.l.b16 %v2187
    %v2775 = vunpack.c.h.b16 %v2187
    %v2776 = vunpack.c.l.b16 %v2188
    %v2777 = vunpack.c.h.b16 %v2188
    %v2778 = vunpack.c.l.b16 %v2189
    %v2779 = vunpack.c.h.b16 %v2189
    %v2780 = vunpack.c.l.b16 %v2190
    %v2781 = vunpack.c.h.b16 %v2190
    %v2782 = vunpack.c.l.b16 %v2191
    %v2783 = vunpack.c.h.b16 %v2191
    %v2784 = vunpack.c.l.b16 %v2192
    %v2785 = vunpack.c.h.b16 %v2192
    %v2786 = vunpack.c.l.b16 %v2193
    %v2787 = vunpack.c.h.b16 %v2193
    %v2788 = vunpack.c.l.b16 %v2194
    %v2789 = vunpack.c.h.b16 %v2194
    %v2790 = vunpack.c.l.b16 %v2195
    %v2791 = vunpack.c.h.b16 %v2195
    %v2792 = vunpack.c.l.b16 %v2196
    %v2793 = vunpack.c.h.b16 %v2196
    %v2794 = vunpack.c.l.b16 %v2197
    %v2795 = vunpack.c.h.b16 %v2197
    %v2796 = vunpack.c.l.b16 %v2198
    %v2797 = vunpack.c.h.b16 %v2198
    %v2798 = vunpack.c.l.b16 %v2199
    %v2799 = vunpack.c.h.b16 %v2199
    %v2800 = vunpack.c.l.b16 %v2200
    %v2801 = vunpack.c.h.b16 %v2200
    %v2802 = vunpack.c.l.b16 %v2201
    %v2803 = vunpack.c.h.b16 %v2201
    %v2804 = vunpack.c.l.b16 %v2202
    %v2805 = vunpack.c.h.b16 %v2202
    %v2806 = vunpack.c.l.b16 %v2203
    %v2807 = vunpack.c.h.b16 %v2203
    %v2808 = vunpack.c.l.b16 %v2204
    %v2809 = vunpack.c.h.b16 %v2204
    %v2810 = vunpack.c.l.b16 %v2205
    %v2811 = vunpack.c.h.b16 %v2205
    %v2812 = vunpack.c.l.b16 %v2206
    %v2813 = vunpack.c.h.b16 %v2206
    %v2814 = vunpack.c.l.b16 %v2207
    %v2815 = vunpack.c.h.b16 %v2207
    %v2816 = vunpack.c.l.b16 %v2208
    %v2817 = vunpack.c.h.b16 %v2208
    %v2818 = vunpack.c.l.b16 %v2209
    %v2819 = vunpack.c.h.b16 %v2209
    %v2820 = vunpack.c.l.b16 %v2210
    %v2821 = vunpack.c.h.b16 %v2210
    %v2822 = vunpack.c.l.b16 %v2211
    %v2823 = vunpack.c.h.b16 %v2211
    %v2824 = vunpack.c.l.b16 %v2212
    %v2825 = vunpack.c.h.b16 %v2212
    %v2826 = vunpack.c.l.b16 %v2213
    %v2827 = vunpack.c.h.b16 %v2213
    %v2828 = vunpack.c.l.b16 %v2214
    %v2829 = vunpack.c.h.b16 %v2214
    %v2830 = vunpack.c.l.b16 %v2215
    %v2831 = vunpack.c.h.b16 %v2215
    %v2832 = vunpack.c.l.b16 %v2216
    %v2833 = vunpack.c.h.b16 %v2216
    %v2834 = vunpack.c.l.b16 %v2217
    %v2835 = vunpack.c.h.b16 %v2217
    %v2836 = vunpack.c.l.b16 %v2218
    %v2837 = vunpack.c.h.b16 %v2218
    %v2838 = vunpack.c.l.b16 %v2219
    %v2839 = vunpack.c.h.b16 %v2219
    %v2840 = vunpack.c.l.b16 %v2220
    %v2841 = vunpack.c.h.b16 %v2220
    %v2842 = vunpack.c.l.b16 %v2221
    %v2843 = vunpack.c.h.b16 %v2221
    %v2844 = vunpack.c.l.b16 %v2222
    %v2845 = vunpack.c.h.b16 %v2222
    %v2846 = vunpack.c.l.b16 %v2223
    %v2847 = vunpack.c.h.b16 %v2223
    %v2848 = vunpack.c.l.b16 %v2224
    %v2849 = vunpack.c.h.b16 %v2224
    %v2850 = vunpack.c.l.b16 %v2225
    %v2851 = vunpack.c.h.b16 %v2225
    %v2852 = vunpack.c.l.b16 %v2226
    %v2853 = vunpack.c.h.b16 %v2226
    %v2854 = vunpack.c.l.b16 %v2227
    %v2855 = vunpack.c.h.b16 %v2227
    %v2856 = vunpack.c.l.b16 %v2228
    %v2857 = vunpack.c.h.b16 %v2228
    %v2858 = vunpack.c.l.b16 %v2229
    %v2859 = vunpack.c.h.b16 %v2229
    %v2860 = vunpack.c.l.b16 %v2230
    %v2861 = vunpack.c.h.b16 %v2230
    %v2862 = vunpack.c.l.b16 %v2231
    %v2863 = vunpack.c.h.b16 %v2231
    %v2864 = vunpack.c.l.b16 %v2232
    %v2865 = vunpack.c.h.b16 %v2232
    %v2866 = vunpack.c.l.b16 %v2233
    %v2867 = vunpack.c.h.b16 %v2233
    %v2868 = vunpack.c.l.b16 %v2234
    %v2869 = vunpack.c.h.b16 %v2234
    %v2870 = vunpack.c.l.b16 %v2235
    %v2871 = vunpack.c.h.b16 %v2235
    %v2872 = vunpack.c.l.b16 %v2236
    %v2873 = vunpack.c.h.b16 %v2236
    %v2874 = vunpack.c.l.b16 %v2237
    %v2875 = vunpack.c.h.b16 %v2237
    %v2876 = vunpack.c.l.b16 %v2238
    %v2877 = vunpack.c.h.b16 %v2238
    %v2878 = vunpack.c.l.b16 %v2239
    %v2879 = vunpack.c.h.b16 %v2239
    %v2880 = vunpack.c.l.b16 %v2240
    %v2881 = vunpack.c.h.b16 %v2240
    %v2882 = vunpack.c.l.b16 %v2241
    %v2883 = vunpack.c.h.b16 %v2241
    %v2884 = vunpack.c.l.b16 %v2242
    %v2885 = vunpack.c.h.b16 %v2242
    %v2886 = vunpack.c.l.b16 %v2243
    %v2887 = vunpack.c.h.b16 %v2243
    %v2888 = vunpack.c.l.b16 %v2244
    %v2889 = vunpack.c.h.b16 %v2244
    %v2890 = vunpack.c.l.b16 %v2245
    %v2891 = vunpack.c.h.b16 %v2245
    %v2892 = vunpack.c.l.b16 %v2246
    %v2893 = vunpack.c.h.b16 %v2246
    %v2894 = vunpack.c.l.b16 %v2247
    %v2895 = vunpack.c.h.b16 %v2247
    %v2896 = vunpack.c.l.b16 %v2248
    %v2897 = vunpack.c.h.b16 %v2248
    %v2898 = vunpack.c.l.b16 %v2249
    %v2899 = vunpack.c.h.b16 %v2249
    %v2900 = vunpack.c.l.b16 %v2250
    %v2901 = vunpack.c.h.b16 %v2250
    %v2902 = vunpack.c.l.b16 %v2251
    %v2903 = vunpack.c.h.b16 %v2251
    %v2904 = vunpack.c.l.b16 %v2252
    %v2905 = vunpack.c.h.b16 %v2252
    %v2906 = vunpack.c.l.b16 %v2253
    %v2907 = vunpack.c.h.b16 %v2253
    %v2908 = vunpack.c.l.b16 %v2254
    %v2909 = vunpack.c.h.b16 %v2254
    %v2910 = vunpack.c.l.b16 %v2255
    %v2911 = vunpack.c.h.b16 %v2255
    %v2912 = vunpack.c.l.b16 %v2256
    %v2913 = vunpack.c.h.b16 %v2256
    %v2914 = vunpack.c.l.b16 %v2257
    %v2915 = vunpack.c.h.b16 %v2257
    %v2916 = vunpack.c.l.b16 %v2258
    %v2917 = vunpack.c.h.b16 %v2258
    %v2918 = vunpack.c.l.b16 %v2259
    %v2919 = vunpack.c.h.b16 %v2259
    %v2920 = vunpack.c.l.b16 %v2260
    %v2921 = vunpack.c.h.b16 %v2260
    %v2922 = vunpack.c.l.b16 %v2261
    %v2923 = vunpack.c.h.b16 %v2261
    %v2924 = vunpack.c.l.b16 %v2262
    %v2925 = vunpack.c.h.b16 %v2262
    %v2926 = vunpack.c.l.b16 %v2263
    %v2927 = vunpack.c.h.b16 %v2263
    %v2928 = vunpack.c.l.b16 %v2264
    %v2929 = vunpack.c.h.b16 %v2264
    %v2930 = vunpack.c.l.b16 %v2265
    %v2931 = vunpack.c.h.b16 %v2265
    %v2932 = vunpack.c.l.b16 %v2266
    %v2933 = vunpack.c.h.b16 %v2266
    %v2934 = vunpack.c.l.b16 %v2267
    %v2935 = vunpack.c.h.b16 %v2267
    %v2936 = vunpack.c.l.b16 %v2268
    %v2937 = vunpack.c.h.b16 %v2268
    %v2938 = vunpack.c.l.b16 %v2269
    %v2939 = vunpack.c.h.b16 %v2269
    %v2940 = vunpack.c.l.b16 %v2270
    %v2941 = vunpack.c.h.b16 %v2270
    %v2942 = vunpack.c.l.b16 %v2271
    %v2943 = vunpack.c.h.b16 %v2271
    %v2944 = vunpack.c.l.b16 %v2272
    %v2945 = vunpack.c.h.b16 %v2272
    %v2946 = vunpack.c.l.b16 %v2273
    %v2947 = vunpack.c.h.b16 %v2273
    %v2948 = vunpack.c.l.b16 %v2274
    %v2949 = vunpack.c.h.b16 %v2274
    %v2950 = vunpack.c.l.b16 %v2275
    %v2951 = vunpack.c.h.b16 %v2275
    %v2952 = vunpack.c.l.b16 %v2276
    %v2953 = vunpack.c.h.b16 %v2276
    %v2954 = vunpack.c.l.b16 %v2277
    %v2955 = vunpack.c.h.b16 %v2277
    %v2956 = vunpack.c.l.b16 %v2278
    %v2957 = vunpack.c.h.b16 %v2278
    %v2958 = vunpack.c.l.b16 %v2279
    %v2959 = vunpack.c.h.b16 %v2279
    %v2960 = vunpack.c.l.b16 %v2280
    %v2961 = vunpack.c.h.b16 %v2280
    %v2962 = vunpack.c.l.b16 %v2281
    %v2963 = vunpack.c.h.b16 %v2281
    %v2964 = vunpack.c.l.b16 %v2282
    %v2965 = vunpack.c.h.b16 %v2282
    %v2966 = vunpack.c.l.b16 %v2283
    %v2967 = vunpack.c.h.b16 %v2283
    %v2968 = vunpack.c.l.b16 %v2284
    %v2969 = vunpack.c.h.b16 %v2284
    %v2970 = vunpack.c.l.b16 %v2285
    %v2971 = vunpack.c.h.b16 %v2285
    %v2972 = vunpack.c.l.b16 %v2286
    %v2973 = vunpack.c.h.b16 %v2286
    %v2974 = vunpack.c.l.b16 %v2287
    %v2975 = vunpack.c.h.b16 %v2287
    %v2976 = vunpack.c.l.b16 %v2288
    %v2977 = vunpack.c.h.b16 %v2288
    %v2978 = vunpack.c.l.b16 %v2289
    %v2979 = vunpack.c.h.b16 %v2289
    %v2980 = vunpack.c.l.b16 %v2290
    %v2981 = vunpack.c.h.b16 %v2290
    %v2982 = vunpack.c.l.b16 %v2291
    %v2983 = vunpack.c.h.b16 %v2291
    %v2984 = vunpack.c.l.b16 %v2292
    %v2985 = vunpack.c.h.b16 %v2292
    %v2986 = vunpack.c.l.b16 %v2293
    %v2987 = vunpack.c.h.b16 %v2293
    %v2988 = vunpack.c.l.b16 %v2294
    %v2989 = vunpack.c.h.b16 %v2294
    %v2990 = vunpack.c.l.b16 %v2295
    %v2991 = vunpack.c.h.b16 %v2295
    %v2992 = vunpack.c.l.b16 %v2296
    %v2993 = vunpack.c.h.b16 %v2296
    %v2994 = vunpack.c.l.b16 %v2297
    %v2995 = vunpack.c.h.b16 %v2297
    %v2996 = vunpack.c.l.b16 %v2298
    %v2997 = vunpack.c.h.b16 %v2298
    %v2998 = vunpack.c.l.b16 %v2299
    %v2999 = vunpack.c.h.b16 %v2299
    %v3000 = vunpack.c.l.b16 %v2300
    %v3001 = vunpack.c.h.b16 %v2300
    %v3002 = vunpack.c.l.b16 %v2301
    %v3003 = vunpack.c.h.b16 %v2301
    %v3004 = vunpack.c.l.b16 %v2302
    %v3005 = vunpack.c.h.b16 %v2302
    %v3006 = vunpack.c.l.b16 %v2303
    %v3007 = vunpack.c.h.b16 %v2303
    %v3008 = vunpack.c.l.b16 %v2304
    %v3009 = vunpack.c.h.b16 %v2304
    %v3010 = vunpack.c.l.b16 %v2305
    %v3011 = vunpack.c.h.b16 %v2305
    %v3012 = vunpack.c.l.b16 %v2306
    %v3013 = vunpack.c.h.b16 %v2306
    %v3014 = vunpack.c.l.b16 %v2307
    %v3015 = vunpack.c.h.b16 %v2307
    %v3016 = vunpack.c.l.b16 %v2308
    %v3017 = vunpack.c.h.b16 %v2308
    %v3018 = vunpack.c.l.b16 %v2309
    %v3019 = vunpack.c.h.b16 %v2309
    %v3020 = vunpack.c.l.b16 %v2310
    %v3021 = vunpack.c.h.b16 %v2310
    %v3022 = vunpack.c.l.b16 %v2311
    %v3023 = vunpack.c.h.b16 %v2311
    %v3024 = vunpack.c.l.b16 %v2312
    %v3025 = vunpack.c.h.b16 %v2312
    %v3026 = vunpack.c.l.b16 %v2313
    %v3027 = vunpack.c.h.b16 %v2313
    %v3028 = vunpack.c.l.b16 %v2314
    %v3029 = vunpack.c.h.b16 %v2314
    %v3030 = vunpack.c.l.b16 %v2315
    %v3031 = vunpack.c.h.b16 %v2315
    %v3032 = vunpack.c.l.b16 %v2316
    %v3033 = vunpack.c.h.b16 %v2316
    %v3034 = vunpack.c.l.b16 %v2317
    %v3035 = vunpack.c.h.b16 %v2317
    %v3036 = vunpack.c.l.b16 %v2318
    %v3037 = vunpack.c.h.b16 %v2318
    %v3038 = vunpack.c.l.b16 %v2319
    %v3039 = vunpack.c.h.b16 %v2319
    %v3040 = vunpack.c.l.b16 %v2320
    %v3041 = vunpack.c.h.b16 %v2320
    %v3042 = vunpack.c.l.b16 %v2321
    %v3043 = vunpack.c.h.b16 %v2321
    %v3044 = vunpack.c.l.b16 %v2322
    %v3045 = vunpack.c.h.b16 %v2322
    %v3046 = vunpack.c.l.b16 %v2323
    %v3047 = vunpack.c.h.b16 %v2323
    %v3048 = vunpack.c.l.b16 %v2324
    %v3049 = vunpack.c.h.b16 %v2324
    %v3050 = vunpack.c.l.b16 %v2325
    %v3051 = vunpack.c.h.b16 %v2325
    %v3052 = vunpack.c.l.b16 %v2326
    %v3053 = vunpack.c.h.b16 %v2326
    %v3054 = vunpack.c.l.b16 %v2327
    %v3055 = vunpack.c.h.b16 %v2327
    %v3056 = vunpack.c.l.b16 %v2328
    %v3057 = vunpack.c.h.b16 %v2328
    %v3058 = vunpack.c.l.b16 %v2329
    %v3059 = vunpack.c.h.b16 %v2329
    %v3060 = vunpack.c.l.b16 %v2330
    %v3061 = vunpack.c.h.b16 %v2330
    %v3062 = vunpack.c.l.b16 %v2331
    %v3063 = vunpack.c.h.b16 %v2331
    %v3064 = vunpack.c.l.b16 %v2332
    %v3065 = vunpack.c.h.b16 %v2332
    %v3066 = vunpack.c.l.b16 %v2333
    %v3067 = vunpack.c.h.b16 %v2333
    %v3068 = vunpack.c.l.b16 %v2334
    %v3069 = vunpack.c.h.b16 %v2334
    %v3070 = vunpack.c.l.b16 %v2335
    %v3071 = vunpack.c.h.b16 %v2335
    %v3072 = vunpack.c.l.b16 %v2336
    %v3073 = vunpack.c.h.b16 %v2336
    %v3074 = vunpack.c.l.b16 %v2337
    %v3075 = vunpack.c.h.b16 %v2337
    %v3076 = vunpack.c.l.b16 %v2338
    %v3077 = vunpack.c.h.b16 %v2338
    %v3078 = vunpack.c.l.b16 %v2339
    %v3079 = vunpack.c.h.b16 %v2339
    %v3080 = vunpack.c.l.b16 %v2340
    %v3081 = vunpack.c.h.b16 %v2340
    %v3082 = vunpack.c.l.b16 %v2341
    %v3083 = vunpack.c.h.b16 %v2341
    %v3084 = vunpack.c.l.b16 %v2342
    %v3085 = vunpack.c.h.b16 %v2342
    %v3086 = vunpack.c.l.b16 %v2343
    %v3087 = vunpack.c.h.b16 %v2343
    %v3088 = vunpack.c.l.b16 %v2344
    %v3089 = vunpack.c.h.b16 %v2344
    %v3090 = vunpack.c.l.b16 %v2345
    %v3091 = vunpack.c.h.b16 %v2345
    %v3092 = vunpack.c.l.b16 %v2346
    %v3093 = vunpack.c.h.b16 %v2346
    %v3094 = vunpack.c.l.b16 %v2347
    %v3095 = vunpack.c.h.b16 %v2347
    %v3096 = vunpack.c.l.b16 %v2348
    %v3097 = vunpack.c.h.b16 %v2348
    %v3098 = vunpack.c.l.b16 %v2349
    %v3099 = vunpack.c.h.b16 %v2349
    %v3100 = vunpack.c.l.b16 %v2350
    %v3101 = vunpack.c.h.b16 %v2350
    %v3102 = vunpack.c.l.b16 %v2351
    %v3103 = vunpack.c.h.b16 %v2351
    %v3104 = vunpack.c.l.b16 %v2352
    %v3105 = vunpack.c.h.b16 %v2352
    %v3106 = vunpack.c.l.b16 %v2353
    %v3107 = vunpack.c.h.b16 %v2353
    %v3108 = vunpack.c.l.b16 %v2354
    %v3109 = vunpack.c.h.b16 %v2354
    %v3110 = vunpack.c.l.b16 %v2355
    %v3111 = vunpack.c.h.b16 %v2355
    %v3112 = vunpack.c.l.b16 %v2356
    %v3113 = vunpack.c.h.b16 %v2356
    %v3114 = vunpack.c.l.b16 %v2357
    %v3115 = vunpack.c.h.b16 %v2357
    %v3116 = vunpack.c.l.b16 %v2358
    %v3117 = vunpack.c.h.b16 %v2358
    %v3118 = vunpack.c.l.b16 %v2359
    %v3119 = vunpack.c.h.b16 %v2359
    %v3120 = vunpack.c.l.b16 %v2360
    %v3121 = vunpack.c.h.b16 %v2360
    %v3122 = vunpack.c.l.b16 %v2361
    %v3123 = vunpack.c.h.b16 %v2361
    %v3124 = vunpack.c.l.b16 %v2362
    %v3125 = vunpack.c.h.b16 %v2362
    %v3126 = vunpack.c.l.b16 %v2363
    %v3127 = vunpack.c.h.b16 %v2363
    %v3128 = vunpack.c.l.b16 %v2364
    %v3129 = vunpack.c.h.b16 %v2364
    %v3130 = vunpack.c.l.b16 %v2365
    %v3131 = vunpack.c.h.b16 %v2365
    %v3132 = vunpack.c.l.b16 %v2366
    %v3133 = vunpack.c.h.b16 %v2366
    %v3134 = vunpack.c.l.b16 %v2367
    %v3135 = vunpack.c.h.b16 %v2367
    %v3136 = vpack.c.b16 %v2628, %v2624
    %v3137 = vpack.c.b16 %v2629, %v2625
    %v3138 = vpack.c.b16 %v2630, %v2626
    %v3139 = vpack.c.b16 %v2631, %v2627
    %v3140 = vpack.c.b16 %v2636, %v2632
    %v3141 = vpack.c.b16 %v2637, %v2633
    %v3142 = vpack.c.b16 %v2638, %v2634
    %v3143 = vpack.c.b16 %v2639, %v2635
    %v3144 = vpack.c.b16 %v2644, %v2640
    %v3145 = vpack.c.b16 %v2645, %v2641
    %v3146 = vpack.c.b16 %v2646, %v2642
    %v3147 = vpack.c.b16 %v2647, %v2643
    %v3148 = vpack.c.b16 %v2652, %v2648
    %v3149 = vpack.c.b16 %v2653, %v2649
    %v3150 = vpack.c.b16 %v2654, %v2650
    %v3151 = vpack.c.b16 %v2655, %v2651
    %v3152 = vpack.c.b16 %v2660, %v2656
    %v3153 = vpack.c.b16 %v2661, %v2657
    %v3154 = vpack.c.b16 %v2662, %v2658
    %v3155 = vpack.c.b16 %v2663, %v2659
    %v3156 = vpack.c.b16 %v2668, %v2664
    %v3157 = vpack.c.b16 %v2669, %v2665
    %v3158 = vpack.c.b16 %v2670, %v2666
    %v3159 = vpack.c.b16 %v2671, %v2667
    %v3160 = vpack.c.b16 %v2676, %v2672
    %v3161 = vpack.c.b16 %v2677, %v2673
    %v3162 = vpack.c.b16 %v2678, %v2674
    %v3163 = vpack.c.b16 %v2679, %v2675
    %v3164 = vpack.c.b16 %v2684, %v2680
    %v3165 = vpack.c.b16 %v2685, %v2681
    %v3166 = vpack.c.b16 %v2686, %v2682
    %v3167 = vpack.c.b16 %v2687, %v2683
    %v3168 = vpack.c.b16 %v2692, %v2688
    %v3169 = vpack.c.b16 %v2693, %v2689
    %v3170 = vpack.c.b16 %v2694, %v2690
    %v3171 = vpack.c.b16 %v2695, %v2691
    %v3172 = vpack.c.b16 %v2700, %v2696
    %v3173 = vpack.c.b16 %v2701, %v2697
    %v3174 = vpack.c.b16 %v2702, %v2698
    %v3175 = vpack.c.b16 %v2703, %v2699
    %v3176 = vpack.c.b16 %v2708, %v2704
    %v3177 = vpack.c.b16 %v2709, %v2705
    %v3178 = vpack.c.b16 %v2710, %v2706
    %v3179 = vpack.c.b16 %v2711, %v2707
    %v3180 = vpack.c.b16 %v2716, %v2712
    %v3181 = vpack.c.b16 %v2717, %v2713
    %v3182 = vpack.c.b16 %v2718, %v2714
    %v3183 = vpack.c.b16 %v2719, %v2715
    %v3184 = vpack.c.b16 %v2724, %v2720
    %v3185 = vpack.c.b16 %v2725, %v2721
    %v3186 = vpack.c.b16 %v2726, %v2722
    %v3187 = vpack.c.b16 %v2727, %v2723
    %v3188 = vpack.c.b16 %v2732, %v2728
    %v3189 = vpack.c.b16 %v2733, %v2729
    %v3190 = vpack.c.b16 %v2734, %v2730
    %v3191 = vpack.c.b16 %v2735, %v2731
    %v3192 = vpack.c.b16 %v2740, %v2736
    %v3193 = vpack.c.b16 %v2741, %v2737
    %v3194 = vpack.c.b16 %v2742, %v2738
    %v3195 = vpack.c.b16 %v2743, %v2739
    %v3196 = vpack.c.b16 %v2748, %v2744
    %v3197 = vpack.c.b16 %v2749, %v2745
    %v3198 = vpack.c.b16 %v2750, %v2746
    %v3199 = vpack.c.b16 %v2751, %v2747
    %v3200 = vpack.c.b16 %v2756, %v2752
    %v3201 = vpack.c.b16 %v2757, %v2753
    %v3202 = vpack.c.b16 %v2758, %v2754
    %v3203 = vpack.c.b16 %v2759, %v2755
    %v3204 = vpack.c.b16 %v2764, %v2760
    %v3205 = vpack.c.b16 %v2765, %v2761
    %v3206 = vpack.c.b16 %v2766, %v2762
    %v3207 = vpack.c.b16 %v2767, %v2763
    %v3208 = vpack.c.b16 %v2772, %v2768
    %v3209 = vpack.c.b16 %v2773, %v2769
    %v3210 = vpack.c.b16 %v2774, %v2770
    %v3211 = vpack.c.b16 %v2775, %v2771
    %v3212 = vpack.c.b16 %v2780, %v2776
    %v3213 = vpack.c.b16 %v2781, %v2777
    %v3214 = vpack.c.b16 %v2782, %v2778
    %v3215 = vpack.c.b16 %v2783, %v2779
    %v3216 = vpack.c.b16 %v2788, %v2784
    %v3217 = vpack.c.b16 %v2789, %v2785
    %v3218 = vpack.c.b16 %v2790, %v2786
    %v3219 = vpack.c.b16 %v2791, %v2787
    %v3220 = vpack.c.b16 %v2796, %v2792
    %v3221 = vpack.c.b16 %v2797, %v2793
    %v3222 = vpack.c.b16 %v2798, %v2794
    %v3223 = vpack.c.b16 %v2799, %v2795
    %v3224 = vpack.c.b16 %v2804, %v2800
    %v3225 = vpack.c.b16 %v2805, %v2801
    %v3226 = vpack.c.b16 %v2806, %v2802
    %v3227 = vpack.c.b16 %v2807, %v2803
    %v3228 = vpack.c.b16 %v2812, %v2808
    %v3229 = vpack.c.b16 %v2813, %v2809
    %v3230 = vpack.c.b16 %v2814, %v2810
    %v3231 = vpack.c.b16 %v2815, %v2811
    %v3232 = vpack.c.b16 %v2820, %v2816
    %v3233 = vpack.c.b16 %v2821, %v2817
    %v3234 = vpack.c.b16 %v2822, %v2818
    %v3235 = vpack.c.b16 %v2823, %v2819
    %v3236 = vpack.c.b16 %v2828, %v2824
    %v3237 = vpack.c.b16 %v2829, %v2825
    %v3238 = vpack.c.b16 %v2830, %v2826
    %v3239 = vpack.c.b16 %v2831, %v2827
    %v3240 = vpack.c.b16 %v2836, %v2832
    %v3241 = vpack.c.b16 %v2837, %v2833
    %v3242 = vpack.c.b16 %v2838, %v2834
    %v3243 = vpack.c.b16 %v2839, %v2835
    %v3244 = vpack.c.b16 %v2844, %v2840
    %v3245 = vpack.c.b16 %v2845, %v2841
    %v3246 = vpack.c.b16 %v2846, %v2842
    %v3247 = vpack.c.b16 %v2847, %v2843
    %v3248 = vpack.c.b16 %v2852, %v2848
    %v3249 = vpack.c.b16 %v2853, %v2849
    %v3250 = vpack.c.b16 %v2854, %v2850
    %v3251 = vpack.c.b16 %v2855, %v2851
    %v3252 = vpack.c.b16 %v2860, %v2856
    %v3253 = vpack.c.b16 %v2861, %v2857
    %v3254 = vpack.c.b16 %v2862, %v2858
    %v3255 = vpack.c.b16 %v2863, %v2859
    %v3256 = vpack.c.b16 %v2868, %v2864
    %v3257 = vpack.c.b16 %v2869, %v2865
    %v3258 = vpack.c.b16 %v2870, %v2866
    %v3259 = vpack.c.b16 %v2871, %v2867
    %v3260 = vpack.c.b16 %v2876, %v2872
    %v3261 = vpack.c.b16 %v2877, %v2873
    %v3262 = vpack.c.b16 %v2878, %v2874
    %v3263 = vpack.c.b16 %v2879, %v2875
    %v3264 = vpack.c.b16 %v2884, %v2880
    %v3265 = vpack.c.b16 %v2885, %v2881
    %v3266 = vpack.c.b16 %v2886, %v2882
    %v3267 = vpack.c.b16 %v2887, %v2883
    %v3268 = vpack.c.b16 %v2892, %v2888
    %v3269 = vpack.c.b16 %v2893, %v2889
    %v3270 = vpack.c.b16 %v2894, %v2890
    %v3271 = vpack.c.b16 %v2895, %v2891
    %v3272 = vpack.c.b16 %v2900, %v2896
    %v3273 = vpack.c.b16 %v2901, %v2897
    %v3274 = vpack.c.b16 %v2902, %v2898
    %v3275 = vpack.c.b16 %v2903, %v2899
    %v3276 = vpack.c.b16 %v2908, %v2904
    %v3277 = vpack.c.b16 %v2909, %v2905
    %v3278 = vpack.c.b16 %v2910, %v2906
    %v3279 = vpack.c.b16 %v2911, %v2907
    %v3280 = vpack.c.b16 %v2916, %v2912
    %v3281 = vpack.c.b16 %v2917, %v2913
    %v3282 = vpack.c.b16 %v2918, %v2914
    %v3283 = vpack.c.b16 %v2919, %v2915
    %v3284 = vpack.c.b16 %v2924, %v2920
    %v3285 = vpack.c.b16 %v2925, %v2921
    %v3286 = vpack.c.b16 %v2926, %v2922
    %v3287 = vpack.c.b16 %v2927, %v2923
    %v3288 = vpack.c.b16 %v2932, %v2928
    %v3289 = vpack.c.b16 %v2933, %v2929
    %v3290 = vpack.c.b16 %v2934, %v2930
    %v3291 = vpack.c.b16 %v2935, %v2931
    %v3292 = vpack.c.b16 %v2940, %v2936
    %v3293 = vpack.c.b16 %v2941, %v2937
    %v3294 = vpack.c.b16 %v2942, %v2938
    %v3295 = vpack.c.b16 %v2943, %v2939
    %v3296 = vpack.c.b16 %v2948, %v2944
    %v3297 = vpack.c.b16 %v2949, %v2945
    %v3298 = vpack.c.b16 %v2950, %v2946
    %v3299 = vpack.c.b16 %v2951, %v2947
    %v3300 = vpack.c.b16 %v2956, %v2952
    %v3301 = vpack.c.b16 %v2957, %v2953
    %v3302 = vpack.c.b16 %v2958, %v2954
    %v3303 = vpack.c.b16 %v2959, %v2955
    %v3304 = vpack.c.b16 %v2964, %v2960
    %v3305 = vpack.c.b16 %v2965, %v2961
    %v3306 = vpack.c.b16 %v2966, %v2962
    %v3307 = vpack.c.b16 %v2967, %v2963
    %v3308 = vpack.c.b16 %v2972, %v2968
    %v3309 = vpack.c.b16 %v2973, %v2969
    %v3310 = vpack.c.b16 %v2974, %v2970
    %v3311 = vpack.c.b16 %v2975, %v2971
    %v3312 = vpack.c.b16 %v2980, %v2976
    %v3313 = vpack.c.b16 %v2981, %v2977
    %v3314 = vpack.c.b16 %v2982, %v2978
    %v3315 = vpack.c.b16 %v2983, %v2979
    %v3316 = vpack.c.b16 %v2988, %v2984
    %v3317 = vpack.c.b16 %v2989, %v2985
    %v3318 = vpack.c.b16 %v2990, %v2986
    %v3319 = vpack.c.b16 %v2991, %v2987
    %v3320 = vpack.c.b16 %v2996, %v2992
    %v3321 = vpack.c.b16 %v2997, %v2993
    %v3322 = vpack.c.b16 %v2998, %v2994
    %v3323 = vpack.c.b16 %v2999, %v2995
    %v3324 = vpack.c.b16 %v3004, %v3000
    %v3325 = vpack.c.b16 %v3005, %v3001
    %v3326 = vpack.c.b16 %v3006, %v3002
    %v3327 = vpack.c.b16 %v3007, %v3003
    %v3328 = vpack.c.b16 %v3012, %v3008
    %v3329 = vpack.c.b16 %v3013, %v3009
    %v3330 = vpack.c.b16 %v3014, %v3010
    %v3331 = vpack.c.b16 %v3015, %v3011
    %v3332 = vpack.c.b16 %v3020, %v3016
    %v3333 = vpack.c.b16 %v3021, %v3017
    %v3334 = vpack.c.b16 %v3022, %v3018
    %v3335 = vpack.c.b16 %v3023, %v3019
    %v3336 = vpack.c.b16 %v3028, %v3024
    %v3337 = vpack.c.b16 %v3029, %v3025
    %v3338 = vpack.c.b16 %v3030, %v3026
    %v3339 = vpack.c.b16 %v3031, %v3027
    %v3340 = vpack.c.b16 %v3036, %v3032
    %v3341 = vpack.c.b16 %v3037, %v3033
    %v3342 = vpack.c.b16 %v3038, %v3034
    %v3343 = vpack.c.b16 %v3039, %v3035
    %v3344 = vpack.c.b16 %v3044, %v3040
    %v3345 = vpack.c.b16 %v3045, %v3041
    %v3346 = vpack.c.b16 %v3046, %v3042
    %v3347 = vpack.c.b16 %v3047, %v3043
    %v3348 = vpack.c.b16 %v3052, %v3048
    %v3349 = vpack.c.b16 %v3053, %v3049
    %v3350 = vpack.c.b16 %v3054, %v3050
    %v3351 = vpack.c.b16 %v3055, %v3051
    %v3352 = vpack.c.b16 %v3060, %v3056
    %v3353 = vpack.c.b16 %v3061, %v3057
    %v3354 = vpack.c.b16 %v3062, %v3058
    %v3355 = vpack.c.b16 %v3063, %v3059
    %v3356 = vpack.c.b16 %v3068, %v3064
    %v3357 = vpack.c.b16 %v3069, %v3065
    %v3358 = vpack.c.b16 %v3070, %v3066
    %v3359 = vpack.c.b16 %v3071, %v3067
    %v3360 = vpack.c.b16 %v3076, %v3072
    %v3361 = vpack.c.b16 %v3077, %v3073
    %v3362 = vpack.c.b16 %v3078, %v3074
    %v3363 = vpack.c.b16 %v3079, %v3075
    %v3364 = vpack.c.b16 %v3084, %v3080
    %v3365 = vpack.c.b16 %v3085, %v3081
    %v3366 = vpack.c.b16 %v3086, %v3082
    %v3367 = vpack.c.b16 %v3087, %v3083
    %v3368 = vpack.c.b16 %v3092, %v3088
    %v3369 = vpack.c.b16 %v3093, %v3089
    %v3370 = vpack.c.b16 %v3094, %v3090
    %v3371 = vpack.c.b16 %v3095, %v3091
    %v3372 = vpack.c.b16 %v3100, %v3096
    %v3373 = vpack.c.b16 %v3101, %v3097
    %v3374 = vpack.c.b16 %v3102, %v3098
    %v3375 = vpack.c.b16 %v3103, %v3099
    %v3376 = vpack.c.b16 %v3108, %v3104
    %v3377 = vpack.c.b16 %v3109, %v3105
    %v3378 = vpack.c.b16 %v3110, %v3106
    %v3379 = vpack.c.b16 %v3111, %v3107
    %v3380 = vpack.c.b16 %v3116, %v3112
    %v3381 = vpack.c.b16 %v3117, %v3113
    %v3382 = vpack.c.b16 %v3118, %v3114
    %v3383 = vpack.c.b16 %v3119, %v3115
    %v3384 = vpack.c.b16 %v3124, %v3120
    %v3385 = vpack.c.b16 %v3125, %v3121
    %v3386 = vpack.c.b16 %v3126, %v3122
    %v3387 = vpack.c.b16 %v3127, %v3123
    %v3388 = vpack.c.b16 %v3132, %v3128
    %v3389 = vpack.c.b16 %v3133, %v3129
    %v3390 = vpack.c.b16 %v3134, %v3130
    %v3391 = vpack.c.b16 %v3135, %v3131
    %3648 = vmatprep.subr.bf16.mxu0 %v3165
    %3649 = vmatpush1.bf16.msra.mxu0 %v3164
    %3650 = vmatprep.subr.bf16.mxu0 %v3161
    %3651 = vmatpush1.bf16.msra.mxu0 %v3160
    %3652 = vmatprep.subr.bf16.mxu0 %v3157
    %3653 = vmatpush1.bf16.msra.mxu0 %v3156
    %3654 = vmatprep.subr.bf16.mxu0 %v3153
    %3655 = vmatpush1.bf16.msra.mxu0 %v3152
    %3656 = vmatprep.subr.bf16.mxu0 %v3149
    %3657 = vmatpush1.bf16.msra.mxu0 %v3148
    %3658 = vmatprep.subr.bf16.mxu0 %v3145
    %3659 = vmatpush1.bf16.msra.mxu0 %v3144
    %3660 = vmatprep.subr.bf16.mxu0 %v3141
    %3661 = vmatpush1.bf16.msra.mxu0 %v3140
    %3662 = vmatprep.subr.bf16.mxu0 %v3137
    %3663 = vmatpush1.bf16.msra.mxu0 %v3136
    %3664 = vmatprep.subr.bf16.mxu0 %v3197
    %3665 = vmatpush2.bf16.msra.mxu0 %v3196
    %3666 = vmatprep.subr.bf16.mxu0 %v3193
    %3667 = vmatpush2.bf16.msra.mxu0 %v3192
    %3668 = vmatprep.subr.bf16.mxu0 %v3189
    %3669 = vmatpush2.bf16.msra.mxu0 %v3188
    %3670 = vmatprep.subr.bf16.mxu0 %v3185
    %3671 = vmatpush2.bf16.msra.mxu0 %v3184
    %3672 = vmatprep.subr.bf16.mxu0 %v3181
    %3673 = vmatpush2.bf16.msra.mxu0 %v3180
    %3674 = vmatprep.subr.bf16.mxu0 %v3177
    %3675 = vmatpush2.bf16.msra.mxu0 %v3176
    %3676 = vmatprep.subr.bf16.mxu0 %v3173
    %3677 = vmatpush2.bf16.msra.mxu0 %v3172
    %3678 = vmatprep.subr.bf16.mxu0 %v3169
    %3679 = vmatpush2.bf16.msra.mxu0 %v3168
    %3680 = vmatprep.mubr.bf16.mxu0 %v2105
    %3681 = vmatmul.mubr.bf16.gmra.mxu0 %v2104
    %v3682 = vpop.f32.mrf.mxu0
    %v3683 = vadd.f32 0.0, %v3682
    %v3684 = vpop.f32.mrf.mxu0
    %v3685 = vadd.f32 0.0, %v3684
    %v3686 = vpop.f32.mrf.mxu0
    %v3687 = vpop.f32.mrf.mxu0
    %3688 = vdwg.mxu0
    %3689 = vmatprep.subr.bf16.mxu0 %v3229
    %3690 = vmatpush1.bf16.msra.mxu0 %v3228
    %3691 = vmatprep.subr.bf16.mxu0 %v3225
    %3692 = vmatpush1.bf16.msra.mxu0 %v3224
    %3693 = vmatprep.subr.bf16.mxu0 %v3221
    %3694 = vmatpush1.bf16.msra.mxu0 %v3220
    %3695 = vmatprep.subr.bf16.mxu0 %v3217
    %3696 = vmatpush1.bf16.msra.mxu0 %v3216
    %3697 = vmatprep.subr.bf16.mxu0 %v3213
    %3698 = vmatpush1.bf16.msra.mxu0 %v3212
    %3699 = vmatprep.subr.bf16.mxu0 %v3209
    %3700 = vmatpush1.bf16.msra.mxu0 %v3208
    %3701 = vmatprep.subr.bf16.mxu0 %v3205
    %3702 = vmatpush1.bf16.msra.mxu0 %v3204
    %3703 = vmatprep.subr.bf16.mxu0 %v3201
    %3704 = vmatpush1.bf16.msra.mxu0 %v3200
    %3705 = vmatprep.subr.bf16.mxu0 %v3261
    %3706 = vmatpush2.bf16.msra.mxu0 %v3260
    %3707 = vmatprep.subr.bf16.mxu0 %v3257
    %3708 = vmatpush2.bf16.msra.mxu0 %v3256
    %3709 = vmatprep.subr.bf16.mxu0 %v3253
    %3710 = vmatpush2.bf16.msra.mxu0 %v3252
    %3711 = vmatprep.subr.bf16.mxu0 %v3249
    %3712 = vmatpush2.bf16.msra.mxu0 %v3248
    %3713 = vmatprep.subr.bf16.mxu0 %v3245
    %3714 = vmatpush2.bf16.msra.mxu0 %v3244
    %3715 = vmatprep.subr.bf16.mxu0 %v3241
    %3716 = vmatpush2.bf16.msra.mxu0 %v3240
    %3717 = vmatprep.subr.bf16.mxu0 %v3237
    %3718 = vmatpush2.bf16.msra.mxu0 %v3236
    %3719 = vmatprep.subr.bf16.mxu0 %v3233
    %3720 = vmatpush2.bf16.msra.mxu0 %v3232
    %3721 = vmatprep.mubr.bf16.mxu0 %v2107
    %3722 = vmatmul.mubr.bf16.gmra.mxu0 %v2106
    %v3723 = vpop.f32.mrf.mxu0
    %v3724 = vadd.f32 %v3683, %v3723
    %v3725 = vpop.f32.mrf.mxu0
    %v3726 = vadd.f32 %v3685, %v3725
    %v3727 = vpop.f32.mrf.mxu0
    %v3728 = vpop.f32.mrf.mxu0
    %3729 = vdwg.mxu0
    %3730 = vmatprep.subr.bf16.mxu0 %v3293
    %3731 = vmatpush1.bf16.msra.mxu0 %v3292
    %3732 = vmatprep.subr.bf16.mxu0 %v3289
    %3733 = vmatpush1.bf16.msra.mxu0 %v3288
    %3734 = vmatprep.subr.bf16.mxu0 %v3285
    %3735 = vmatpush1.bf16.msra.mxu0 %v3284
    %3736 = vmatprep.subr.bf16.mxu0 %v3281
    %3737 = vmatpush1.bf16.msra.mxu0 %v3280
    %3738 = vmatprep.subr.bf16.mxu0 %v3277
    %3739 = vmatpush1.bf16.msra.mxu0 %v3276
    %3740 = vmatprep.subr.bf16.mxu0 %v3273
    %3741 = vmatpush1.bf16.msra.mxu0 %v3272
    %3742 = vmatprep.subr.bf16.mxu0 %v3269
    %3743 = vmatpush1.bf16.msra.mxu0 %v3268
    %3744 = vmatprep.subr.bf16.mxu0 %v3265
    %3745 = vmatpush1.bf16.msra.mxu0 %v3264
    %3746 = vmatprep.subr.bf16.mxu0 %v3325
    %3747 = vmatpush2.bf16.msra.mxu0 %v3324
    %3748 = vmatprep.subr.bf16.mxu0 %v3321
    %3749 = vmatpush2.bf16.msra.mxu0 %v3320
    %3750 = vmatprep.subr.bf16.mxu0 %v3317
    %3751 = vmatpush2.bf16.msra.mxu0 %v3316
    %3752 = vmatprep.subr.bf16.mxu0 %v3313
    %3753 = vmatpush2.bf16.msra.mxu0 %v3312
    %3754 = vmatprep.subr.bf16.mxu0 %v3309
    %3755 = vmatpush2.bf16.msra.mxu0 %v3308
    %3756 = vmatprep.subr.bf16.mxu0 %v3305
    %3757 = vmatpush2.bf16.msra.mxu0 %v3304
    %3758 = vmatprep.subr.bf16.mxu0 %v3301
    %3759 = vmatpush2.bf16.msra.mxu0 %v3300
    %3760 = vmatprep.subr.bf16.mxu0 %v3297
    %3761 = vmatpush2.bf16.msra.mxu0 %v3296
    %3762 = vmatprep.mubr.bf16.mxu0 %v2109
    %3763 = vmatmul.mubr.bf16.gmra.mxu0 %v2108
    %v3764 = vpop.f32.mrf.mxu0
    %v3765 = vadd.f32 %v3724, %v3764
    %v3766 = vpop.f32.mrf.mxu0
    %v3767 = vadd.f32 %v3726, %v3766
    %v3768 = vpop.f32.mrf.mxu0
    %v3769 = vpop.f32.mrf.mxu0
    %3770 = vdwg.mxu0
    %3771 = vmatprep.subr.bf16.mxu0 %v3357
    %3772 = vmatpush1.bf16.msra.mxu0 %v3356
    %3773 = vmatprep.subr.bf16.mxu0 %v3353
    %3774 = vmatpush1.bf16.msra.mxu0 %v3352
    %3775 = vmatprep.subr.bf16.mxu0 %v3349
    %3776 = vmatpush1.bf16.msra.mxu0 %v3348
    %3777 = vmatprep.subr.bf16.mxu0 %v3345
    %3778 = vmatpush1.bf16.msra.mxu0 %v3344
    %3779 = vmatprep.subr.bf16.mxu0 %v3341
    %3780 = vmatpush1.bf16.msra.mxu0 %v3340
    %3781 = vmatprep.subr.bf16.mxu0 %v3337
    %3782 = vmatpush1.bf16.msra.mxu0 %v3336
    %3783 = vmatprep.subr.bf16.mxu0 %v3333
    %3784 = vmatpush1.bf16.msra.mxu0 %v3332
    %3785 = vmatprep.subr.bf16.mxu0 %v3329
    %3786 = vmatpush1.bf16.msra.mxu0 %v3328
    %3787 = vmatprep.subr.bf16.mxu0 %v3389
    %3788 = vmatpush2.bf16.msra.mxu0 %v3388
    %3789 = vmatprep.subr.bf16.mxu0 %v3385
    %3790 = vmatpush2.bf16.msra.mxu0 %v3384
    %3791 = vmatprep.subr.bf16.mxu0 %v3381
    %3792 = vmatpush2.bf16.msra.mxu0 %v3380
    %3793 = vmatprep.subr.bf16.mxu0 %v3377
    %3794 = vmatpush2.bf16.msra.mxu0 %v3376
    %3795 = vmatprep.subr.bf16.mxu0 %v3373
    %3796 = vmatpush2.bf16.msra.mxu0 %v3372
    %3797 = vmatprep.subr.bf16.mxu0 %v3369
    %3798 = vmatpush2.bf16.msra.mxu0 %v3368
    %3799 = vmatprep.subr.bf16.mxu0 %v3365
    %3800 = vmatpush2.bf16.msra.mxu0 %v3364
    %3801 = vmatprep.subr.bf16.mxu0 %v3361
    %3802 = vmatpush2.bf16.msra.mxu0 %v3360
    %3803 = vmatprep.mubr.bf16.mxu0 %v2111
    %3804 = vmatmul.mubr.bf16.gmra.mxu0 %v2110
    %v3805 = vpop.f32.mrf.mxu0
    %v3806 = vadd.f32 %v3765, %v3805
    %v3807 = vpop.f32.mrf.mxu0
    %v3808 = vadd.f32 %v3767, %v3807
    %v3809 = vpop.f32.mrf.mxu0
    %v3810 = vpop.f32.mrf.mxu0
    %3811 = vdwg.mxu0
    %3812 = vmatprep.subr.bf16.mxu0 %v3167
    %3813 = vmatpush1.bf16.msra.mxu0 %v3166
    %3814 = vmatprep.subr.bf16.mxu0 %v3163
    %3815 = vmatpush1.bf16.msra.mxu0 %v3162
    %3816 = vmatprep.subr.bf16.mxu0 %v3159
    %3817 = vmatpush1.bf16.msra.mxu0 %v3158
    %3818 = vmatprep.subr.bf16.mxu0 %v3155
    %3819 = vmatpush1.bf16.msra.mxu0 %v3154
    %3820 = vmatprep.subr.bf16.mxu0 %v3151
    %3821 = vmatpush1.bf16.msra.mxu0 %v3150
    %3822 = vmatprep.subr.bf16.mxu0 %v3147
    %3823 = vmatpush1.bf16.msra.mxu0 %v3146
    %3824 = vmatprep.subr.bf16.mxu0 %v3143
    %3825 = vmatpush1.bf16.msra.mxu0 %v3142
    %3826 = vmatprep.subr.bf16.mxu0 %v3139
    %3827 = vmatpush1.bf16.msra.mxu0 %v3138
    %3828 = vmatprep.subr.bf16.mxu0 %v3199
    %3829 = vmatpush2.bf16.msra.mxu0 %v3198
    %3830 = vmatprep.subr.bf16.mxu0 %v3195
    %3831 = vmatpush2.bf16.msra.mxu0 %v3194
    %3832 = vmatprep.subr.bf16.mxu0 %v3191
    %3833 = vmatpush2.bf16.msra.mxu0 %v3190
    %3834 = vmatprep.subr.bf16.mxu0 %v3187
    %3835 = vmatpush2.bf16.msra.mxu0 %v3186
    %3836 = vmatprep.subr.bf16.mxu0 %v3183
    %3837 = vmatpush2.bf16.msra.mxu0 %v3182
    %3838 = vmatprep.subr.bf16.mxu0 %v3179
    %3839 = vmatpush2.bf16.msra.mxu0 %v3178
    %3840 = vmatprep.subr.bf16.mxu0 %v3175
    %3841 = vmatpush2.bf16.msra.mxu0 %v3174
    %3842 = vmatprep.subr.bf16.mxu0 %v3171
    %3843 = vmatpush2.bf16.msra.mxu0 %v3170
    %3844 = vmatprep.mubr.bf16.mxu0 %v2105
    %3845 = vmatmul.mubr.bf16.gmra.mxu0 %v2104
    %v3846 = vpop.f32.mrf.mxu0
    %v3847 = vadd.f32 0.0, %v3846
    %v3848 = vpop.f32.mrf.mxu0
    %v3849 = vadd.f32 0.0, %v3848
    %v3850 = vpop.f32.mrf.mxu0
    %v3851 = vpop.f32.mrf.mxu0
    %3852 = vdwg.mxu0
    %3853 = vmatprep.subr.bf16.mxu0 %v3231
    %3854 = vmatpush1.bf16.msra.mxu0 %v3230
    %3855 = vmatprep.subr.bf16.mxu0 %v3227
    %3856 = vmatpush1.bf16.msra.mxu0 %v3226
    %3857 = vmatprep.subr.bf16.mxu0 %v3223
    %3858 = vmatpush1.bf16.msra.mxu0 %v3222
    %3859 = vmatprep.subr.bf16.mxu0 %v3219
    %3860 = vmatpush1.bf16.msra.mxu0 %v3218
    %3861 = vmatprep.subr.bf16.mxu0 %v3215
    %3862 = vmatpush1.bf16.msra.mxu0 %v3214
    %3863 = vmatprep.subr.bf16.mxu0 %v3211
    %3864 = vmatpush1.bf16.msra.mxu0 %v3210
    %3865 = vmatprep.subr.bf16.mxu0 %v3207
    %3866 = vmatpush1.bf16.msra.mxu0 %v3206
    %3867 = vmatprep.subr.bf16.mxu0 %v3203
    %3868 = vmatpush1.bf16.msra.mxu0 %v3202
    %3869 = vmatprep.subr.bf16.mxu0 %v3263
    %3870 = vmatpush2.bf16.msra.mxu0 %v3262
    %3871 = vmatprep.subr.bf16.mxu0 %v3259
    %3872 = vmatpush2.bf16.msra.mxu0 %v3258
    %3873 = vmatprep.subr.bf16.mxu0 %v3255
    %3874 = vmatpush2.bf16.msra.mxu0 %v3254
    %3875 = vmatprep.subr.bf16.mxu0 %v3251
    %3876 = vmatpush2.bf16.msra.mxu0 %v3250
    %3877 = vmatprep.subr.bf16.mxu0 %v3247
    %3878 = vmatpush2.bf16.msra.mxu0 %v3246
    %3879 = vmatprep.subr.bf16.mxu0 %v3243
    %3880 = vmatpush2.bf16.msra.mxu0 %v3242
    %3881 = vmatprep.subr.bf16.mxu0 %v3239
    %3882 = vmatpush2.bf16.msra.mxu0 %v3238
    %3883 = vmatprep.subr.bf16.mxu0 %v3235
    %3884 = vmatpush2.bf16.msra.mxu0 %v3234
    %3885 = vmatprep.mubr.bf16.mxu0 %v2107
    %3886 = vmatmul.mubr.bf16.gmra.mxu0 %v2106
    %v3887 = vpop.f32.mrf.mxu0
    %v3888 = vadd.f32 %v3847, %v3887
    %v3889 = vpop.f32.mrf.mxu0
    %v3890 = vadd.f32 %v3849, %v3889
    %v3891 = vpop.f32.mrf.mxu0
    %v3892 = vpop.f32.mrf.mxu0
    %3893 = vdwg.mxu0
    %3894 = vmatprep.subr.bf16.mxu0 %v3295
    %3895 = vmatpush1.bf16.msra.mxu0 %v3294
    %3896 = vmatprep.subr.bf16.mxu0 %v3291
    %3897 = vmatpush1.bf16.msra.mxu0 %v3290
    %3898 = vmatprep.subr.bf16.mxu0 %v3287
    %3899 = vmatpush1.bf16.msra.mxu0 %v3286
    %3900 = vmatprep.subr.bf16.mxu0 %v3283
    %3901 = vmatpush1.bf16.msra.mxu0 %v3282
    %3902 = vmatprep.subr.bf16.mxu0 %v3279
    %3903 = vmatpush1.bf16.msra.mxu0 %v3278
    %3904 = vmatprep.subr.bf16.mxu0 %v3275
    %3905 = vmatpush1.bf16.msra.mxu0 %v3274
    %3906 = vmatprep.subr.bf16.mxu0 %v3271
    %3907 = vmatpush1.bf16.msra.mxu0 %v3270
    %3908 = vmatprep.subr.bf16.mxu0 %v3267
    %3909 = vmatpush1.bf16.msra.mxu0 %v3266
    %3910 = vmatprep.subr.bf16.mxu0 %v3327
    %3911 = vmatpush2.bf16.msra.mxu0 %v3326
    %3912 = vmatprep.subr.bf16.mxu0 %v3323
    %3913 = vmatpush2.bf16.msra.mxu0 %v3322
    %3914 = vmatprep.subr.bf16.mxu0 %v3319
    %3915 = vmatpush2.bf16.msra.mxu0 %v3318
    %3916 = vmatprep.subr.bf16.mxu0 %v3315
    %3917 = vmatpush2.bf16.msra.mxu0 %v3314
    %3918 = vmatprep.subr.bf16.mxu0 %v3311
    %3919 = vmatpush2.bf16.msra.mxu0 %v3310
    %3920 = vmatprep.subr.bf16.mxu0 %v3307
    %3921 = vmatpush2.bf16.msra.mxu0 %v3306
    %3922 = vmatprep.subr.bf16.mxu0 %v3303
    %3923 = vmatpush2.bf16.msra.mxu0 %v3302
    %3924 = vmatprep.subr.bf16.mxu0 %v3299
    %3925 = vmatpush2.bf16.msra.mxu0 %v3298
    %3926 = vmatprep.mubr.bf16.mxu0 %v2109
    %3927 = vmatmul.mubr.bf16.gmra.mxu0 %v2108
    %v3928 = vpop.f32.mrf.mxu0
    %v3929 = vadd.f32 %v3888, %v3928
    %v3930 = vpop.f32.mrf.mxu0
    %v3931 = vadd.f32 %v3890, %v3930
    %v3932 = vpop.f32.mrf.mxu0
    %v3933 = vpop.f32.mrf.mxu0
    %3934 = vdwg.mxu0
    %3935 = vmatprep.subr.bf16.mxu0 %v3359
    %3936 = vmatpush1.bf16.msra.mxu0 %v3358
    %3937 = vmatprep.subr.bf16.mxu0 %v3355
    %3938 = vmatpush1.bf16.msra.mxu0 %v3354
    %3939 = vmatprep.subr.bf16.mxu0 %v3351
    %3940 = vmatpush1.bf16.msra.mxu0 %v3350
    %3941 = vmatprep.subr.bf16.mxu0 %v3347
    %3942 = vmatpush1.bf16.msra.mxu0 %v3346
    %3943 = vmatprep.subr.bf16.mxu0 %v3343
    %3944 = vmatpush1.bf16.msra.mxu0 %v3342
    %3945 = vmatprep.subr.bf16.mxu0 %v3339
    %3946 = vmatpush1.bf16.msra.mxu0 %v3338
    %3947 = vmatprep.subr.bf16.mxu0 %v3335
    %3948 = vmatpush1.bf16.msra.mxu0 %v3334
    %3949 = vmatprep.subr.bf16.mxu0 %v3331
    %3950 = vmatpush1.bf16.msra.mxu0 %v3330
    %3951 = vmatprep.subr.bf16.mxu0 %v3391
    %3952 = vmatpush2.bf16.msra.mxu0 %v3390
    %3953 = vmatprep.subr.bf16.mxu0 %v3387
    %3954 = vmatpush2.bf16.msra.mxu0 %v3386
    %3955 = vmatprep.subr.bf16.mxu0 %v3383
    %3956 = vmatpush2.bf16.msra.mxu0 %v3382
    %3957 = vmatprep.subr.bf16.mxu0 %v3379
    %3958 = vmatpush2.bf16.msra.mxu0 %v3378
    %3959 = vmatprep.subr.bf16.mxu0 %v3375
    %3960 = vmatpush2.bf16.msra.mxu0 %v3374
    %3961 = vmatprep.subr.bf16.mxu0 %v3371
    %3962 = vmatpush2.bf16.msra.mxu0 %v3370
    %3963 = vmatprep.subr.bf16.mxu0 %v3367
    %3964 = vmatpush2.bf16.msra.mxu0 %v3366
    %3965 = vmatprep.subr.bf16.mxu0 %v3363
    %3966 = vmatpush2.bf16.msra.mxu0 %v3362
    %3967 = vmatprep.mubr.bf16.mxu0 %v2111
    %3968 = vmatmul.mubr.bf16.gmra.mxu0 %v2110
    %v3969 = vpop.f32.mrf.mxu0
    %v3970 = vadd.f32 %v3929, %v3969
    %v3971 = vpop.f32.mrf.mxu0
    %v3972 = vadd.f32 %v3931, %v3971
    %v3973 = vpop.f32.mrf.mxu0
    %v3974 = vpop.f32.mrf.mxu0
    %3975 = vdwg.mxu0
    %v3976 = vadd.f32 %v2052, %v3806
    %v3977 = vadd.f32 %v2053, %v3808
    %v3978 = vadd.f32 %v2054, %v3970
    %v3979 = vadd.f32 %v2055, %v3972
    %v3980 = vmax.f32 %v3976, 0.0
    %v3981 = vmax.f32 %v3977, 0.0
    %v3982 = vmax.f32 %v3978, 0.0
    %v3983 = vmax.f32 %v3979, 0.0
    %s3984 = smul.u32 4, 64
    %s3985 = smul.u32 %s3984, 4
    %s3986 = sshll.u32 %s3985, 4
    %3987 = dma.done %s84, %s3986
    %v3988 = vpack.c.bf16 %v3980, %v3980
    %v3989 = vpack.c.bf16 %v3981, %v3981
    %v3990 = vpack.c.bf16 %v3982, %v3982
    %v3991 = vpack.c.bf16 %v3983, %v3983
    %v3992 = vld [vmem:[#allocation4] sm:$0xff]
    %v3993 = vld [vmem:[#allocation4 + $0x8] sm:$0xff]
    %v3994 = vld [vmem:[#allocation4 + $0x10] sm:$0xff]
    %v3995 = vld [vmem:[#allocation4 + $0x18] sm:$0xff]
    %v3996 = vld [vmem:[#allocation4 + $0x20] sm:$0xff]
    %v3997 = vld [vmem:[#allocation4 + $0x28] sm:$0xff]
    %v3998 = vld [vmem:[#allocation4 + $0x30] sm:$0xff]
    %v3999 = vld [vmem:[#allocation4 + $0x38] sm:$0xff]
    %v4000 = vld [vmem:[#allocation4 + $0x40] sm:$0xff]
    %v4001 = vld [vmem:[#allocation4 + $0x48] sm:$0xff]
    %v4002 = vld [vmem:[#allocation4 + $0x50] sm:$0xff]
    %v4003 = vld [vmem:[#allocation4 + $0x58] sm:$0xff]
    %v4004 = vld [vmem:[#allocation4 + $0x60] sm:$0xff]
    %v4005 = vld [vmem:[#allocation4 + $0x68] sm:$0xff]
    %v4006 = vld [vmem:[#allocation4 + $0x70] sm:$0xff]
    %v4007 = vld [vmem:[#allocation4 + $0x78] sm:$0xff]
    %v4008 = vld [vmem:[#allocation4 + $0x80] sm:$0xff]
    %v4009 = vld [vmem:[#allocation4 + $0x88] sm:$0xff]
    %v4010 = vld [vmem:[#allocation4 + $0x90] sm:$0xff]
    %v4011 = vld [vmem:[#allocation4 + $0x98] sm:$0xff]
    %v4012 = vld [vmem:[#allocation4 + $0xa0] sm:$0xff]
    %v4013 = vld [vmem:[#allocation4 + $0xa8] sm:$0xff]
    %v4014 = vld [vmem:[#allocation4 + $0xb0] sm:$0xff]
    %v4015 = vld [vmem:[#allocation4 + $0xb8] sm:$0xff]
    %v4016 = vld [vmem:[#allocation4 + $0xc0] sm:$0xff]
    %v4017 = vld [vmem:[#allocation4 + $0xc8] sm:$0xff]
    %v4018 = vld [vmem:[#allocation4 + $0xd0] sm:$0xff]
    %v4019 = vld [vmem:[#allocation4 + $0xd8] sm:$0xff]
    %v4020 = vld [vmem:[#allocation4 + $0xe0] sm:$0xff]
    %v4021 = vld [vmem:[#allocation4 + $0xe8] sm:$0xff]
    %v4022 = vld [vmem:[#allocation4 + $0xf0] sm:$0xff]
    %v4023 = vld [vmem:[#allocation4 + $0xf8] sm:$0xff]
    %v4024 = vld [vmem:[#allocation4 + $0x100] sm:$0xff]
    %v4025 = vld [vmem:[#allocation4 + $0x108] sm:$0xff]
    %v4026 = vld [vmem:[#allocation4 + $0x110] sm:$0xff]
    %v4027 = vld [vmem:[#allocation4 + $0x118] sm:$0xff]
    %v4028 = vld [vmem:[#allocation4 + $0x120] sm:$0xff]
    %v4029 = vld [vmem:[#allocation4 + $0x128] sm:$0xff]
    %v4030 = vld [vmem:[#allocation4 + $0x130] sm:$0xff]
    %v4031 = vld [vmem:[#allocation4 + $0x138] sm:$0xff]
    %v4032 = vld [vmem:[#allocation4 + $0x140] sm:$0xff]
    %v4033 = vld [vmem:[#allocation4 + $0x148] sm:$0xff]
    %v4034 = vld [vmem:[#allocation4 + $0x150] sm:$0xff]
    %v4035 = vld [vmem:[#allocation4 + $0x158] sm:$0xff]
    %v4036 = vld [vmem:[#allocation4 + $0x160] sm:$0xff]
    %v4037 = vld [vmem:[#allocation4 + $0x168] sm:$0xff]
    %v4038 = vld [vmem:[#allocation4 + $0x170] sm:$0xff]
    %v4039 = vld [vmem:[#allocation4 + $0x178] sm:$0xff]
    %v4040 = vld [vmem:[#allocation4 + $0x180] sm:$0xff]
    %v4041 = vld [vmem:[#allocation4 + $0x188] sm:$0xff]
    %v4042 = vld [vmem:[#allocation4 + $0x190] sm:$0xff]
    %v4043 = vld [vmem:[#allocation4 + $0x198] sm:$0xff]
    %v4044 = vld [vmem:[#allocation4 + $0x1a0] sm:$0xff]
    %v4045 = vld [vmem:[#allocation4 + $0x1a8] sm:$0xff]
    %v4046 = vld [vmem:[#allocation4 + $0x1b0] sm:$0xff]
    %v4047 = vld [vmem:[#allocation4 + $0x1b8] sm:$0xff]
    %v4048 = vld [vmem:[#allocation4 + $0x1c0] sm:$0xff]
    %v4049 = vld [vmem:[#allocation4 + $0x1c8] sm:$0xff]
    %v4050 = vld [vmem:[#allocation4 + $0x1d0] sm:$0xff]
    %v4051 = vld [vmem:[#allocation4 + $0x1d8] sm:$0xff]
    %v4052 = vld [vmem:[#allocation4 + $0x1e0] sm:$0xff]
    %v4053 = vld [vmem:[#allocation4 + $0x1e8] sm:$0xff]
    %v4054 = vld [vmem:[#allocation4 + $0x1f0] sm:$0xff]
    %v4055 = vld [vmem:[#allocation4 + $0x1f8] sm:$0xff]
    %v4056 = vld [vmem:[#allocation4 + $0x200] sm:$0xff]
    %v4057 = vld [vmem:[#allocation4 + $0x208] sm:$0xff]
    %v4058 = vld [vmem:[#allocation4 + $0x210] sm:$0xff]
    %v4059 = vld [vmem:[#allocation4 + $0x218] sm:$0xff]
    %v4060 = vld [vmem:[#allocation4 + $0x220] sm:$0xff]
    %v4061 = vld [vmem:[#allocation4 + $0x228] sm:$0xff]
    %v4062 = vld [vmem:[#allocation4 + $0x230] sm:$0xff]
    %v4063 = vld [vmem:[#allocation4 + $0x238] sm:$0xff]
    %v4064 = vld [vmem:[#allocation4 + $0x240] sm:$0xff]
    %v4065 = vld [vmem:[#allocation4 + $0x248] sm:$0xff]
    %v4066 = vld [vmem:[#allocation4 + $0x250] sm:$0xff]
    %v4067 = vld [vmem:[#allocation4 + $0x258] sm:$0xff]
    %v4068 = vld [vmem:[#allocation4 + $0x260] sm:$0xff]
    %v4069 = vld [vmem:[#allocation4 + $0x268] sm:$0xff]
    %v4070 = vld [vmem:[#allocation4 + $0x270] sm:$0xff]
    %v4071 = vld [vmem:[#allocation4 + $0x278] sm:$0xff]
    %v4072 = vld [vmem:[#allocation4 + $0x280] sm:$0xff]
    %v4073 = vld [vmem:[#allocation4 + $0x288] sm:$0xff]
    %v4074 = vld [vmem:[#allocation4 + $0x290] sm:$0xff]
    %v4075 = vld [vmem:[#allocation4 + $0x298] sm:$0xff]
    %v4076 = vld [vmem:[#allocation4 + $0x2a0] sm:$0xff]
    %v4077 = vld [vmem:[#allocation4 + $0x2a8] sm:$0xff]
    %v4078 = vld [vmem:[#allocation4 + $0x2b0] sm:$0xff]
    %v4079 = vld [vmem:[#allocation4 + $0x2b8] sm:$0xff]
    %v4080 = vld [vmem:[#allocation4 + $0x2c0] sm:$0xff]
    %v4081 = vld [vmem:[#allocation4 + $0x2c8] sm:$0xff]
    %v4082 = vld [vmem:[#allocation4 + $0x2d0] sm:$0xff]
    %v4083 = vld [vmem:[#allocation4 + $0x2d8] sm:$0xff]
    %v4084 = vld [vmem:[#allocation4 + $0x2e0] sm:$0xff]
    %v4085 = vld [vmem:[#allocation4 + $0x2e8] sm:$0xff]
    %v4086 = vld [vmem:[#allocation4 + $0x2f0] sm:$0xff]
    %v4087 = vld [vmem:[#allocation4 + $0x2f8] sm:$0xff]
    %v4088 = vld [vmem:[#allocation4 + $0x300] sm:$0xff]
    %v4089 = vld [vmem:[#allocation4 + $0x308] sm:$0xff]
    %v4090 = vld [vmem:[#allocation4 + $0x310] sm:$0xff]
    %v4091 = vld [vmem:[#allocation4 + $0x318] sm:$0xff]
    %v4092 = vld [vmem:[#allocation4 + $0x320] sm:$0xff]
    %v4093 = vld [vmem:[#allocation4 + $0x328] sm:$0xff]
    %v4094 = vld [vmem:[#allocation4 + $0x330] sm:$0xff]
    %v4095 = vld [vmem:[#allocation4 + $0x338] sm:$0xff]
    %v4096 = vld [vmem:[#allocation4 + $0x340] sm:$0xff]
    %v4097 = vld [vmem:[#allocation4 + $0x348] sm:$0xff]
    %v4098 = vld [vmem:[#allocation4 + $0x350] sm:$0xff]
    %v4099 = vld [vmem:[#allocation4 + $0x358] sm:$0xff]
    %v4100 = vld [vmem:[#allocation4 + $0x360] sm:$0xff]
    %v4101 = vld [vmem:[#allocation4 + $0x368] sm:$0xff]
    %v4102 = vld [vmem:[#allocation4 + $0x370] sm:$0xff]
    %v4103 = vld [vmem:[#allocation4 + $0x378] sm:$0xff]
    %v4104 = vld [vmem:[#allocation4 + $0x380] sm:$0xff]
    %v4105 = vld [vmem:[#allocation4 + $0x388] sm:$0xff]
    %v4106 = vld [vmem:[#allocation4 + $0x390] sm:$0xff]
    %v4107 = vld [vmem:[#allocation4 + $0x398] sm:$0xff]
    %v4108 = vld [vmem:[#allocation4 + $0x3a0] sm:$0xff]
    %v4109 = vld [vmem:[#allocation4 + $0x3a8] sm:$0xff]
    %v4110 = vld [vmem:[#allocation4 + $0x3b0] sm:$0xff]
    %v4111 = vld [vmem:[#allocation4 + $0x3b8] sm:$0xff]
    %v4112 = vld [vmem:[#allocation4 + $0x3c0] sm:$0xff]
    %v4113 = vld [vmem:[#allocation4 + $0x3c8] sm:$0xff]
    %v4114 = vld [vmem:[#allocation4 + $0x3d0] sm:$0xff]
    %v4115 = vld [vmem:[#allocation4 + $0x3d8] sm:$0xff]
    %v4116 = vld [vmem:[#allocation4 + $0x3e0] sm:$0xff]
    %v4117 = vld [vmem:[#allocation4 + $0x3e8] sm:$0xff]
    %v4118 = vld [vmem:[#allocation4 + $0x3f0] sm:$0xff]
    %v4119 = vld [vmem:[#allocation4 + $0x3f8] sm:$0xff]
    %v4120 = vld [vmem:[%s3] sm:$0xf]
    %v4122 = vlaneseq
    %v4123 = vshrl.u32 %v4122, 7
    %v4124 = vsub.s32 0, %v4123
    %v4125 = vrot.slane %v4120, %v4124
    %v4126 = vlaneseq
    %v4127 = vshrl.u32 %v4126, 7
    %v4128 = vsub.s32 1, %v4127
    %v4129 = vrot.slane %v4120, %v4128
    %v4130 = vlaneseq
    %v4131 = vshrl.u32 %v4130, 7
    %v4132 = vsub.s32 2, %v4131
    %v4133 = vrot.slane %v4120, %v4132
    %v4134 = vlaneseq
    %v4135 = vshrl.u32 %v4134, 7
    %v4136 = vsub.s32 3, %v4135
    %v4137 = vrot.slane %v4120, %v4136
    %v4270 = vunpack.c.l.b16 %v3992
    %v4271 = vunpack.c.h.b16 %v3992
    %v4272 = vunpack.c.l.b16 %v3993
    %v4273 = vunpack.c.h.b16 %v3993
    %v4274 = vunpack.c.l.b16 %v3994
    %v4275 = vunpack.c.h.b16 %v3994
    %v4276 = vunpack.c.l.b16 %v3995
    %v4277 = vunpack.c.h.b16 %v3995
    %v4278 = vunpack.c.l.b16 %v3996
    %v4279 = vunpack.c.h.b16 %v3996
    %v4280 = vunpack.c.l.b16 %v3997
    %v4281 = vunpack.c.h.b16 %v3997
    %v4282 = vunpack.c.l.b16 %v3998
    %v4283 = vunpack.c.h.b16 %v3998
    %v4284 = vunpack.c.l.b16 %v3999
    %v4285 = vunpack.c.h.b16 %v3999
    %v4286 = vunpack.c.l.b16 %v4000
    %v4287 = vunpack.c.h.b16 %v4000
    %v4288 = vunpack.c.l.b16 %v4001
    %v4289 = vunpack.c.h.b16 %v4001
    %v4290 = vunpack.c.l.b16 %v4002
    %v4291 = vunpack.c.h.b16 %v4002
    %v4292 = vunpack.c.l.b16 %v4003
    %v4293 = vunpack.c.h.b16 %v4003
    %v4294 = vunpack.c.l.b16 %v4004
    %v4295 = vunpack.c.h.b16 %v4004
    %v4296 = vunpack.c.l.b16 %v4005
    %v4297 = vunpack.c.h.b16 %v4005
    %v4298 = vunpack.c.l.b16 %v4006
    %v4299 = vunpack.c.h.b16 %v4006
    %v4300 = vunpack.c.l.b16 %v4007
    %v4301 = vunpack.c.h.b16 %v4007
    %v4302 = vunpack.c.l.b16 %v4008
    %v4303 = vunpack.c.h.b16 %v4008
    %v4304 = vunpack.c.l.b16 %v4009
    %v4305 = vunpack.c.h.b16 %v4009
    %v4306 = vunpack.c.l.b16 %v4010
    %v4307 = vunpack.c.h.b16 %v4010
    %v4308 = vunpack.c.l.b16 %v4011
    %v4309 = vunpack.c.h.b16 %v4011
    %v4310 = vunpack.c.l.b16 %v4012
    %v4311 = vunpack.c.h.b16 %v4012
    %v4312 = vunpack.c.l.b16 %v4013
    %v4313 = vunpack.c.h.b16 %v4013
    %v4314 = vunpack.c.l.b16 %v4014
    %v4315 = vunpack.c.h.b16 %v4014
    %v4316 = vunpack.c.l.b16 %v4015
    %v4317 = vunpack.c.h.b16 %v4015
    %v4318 = vunpack.c.l.b16 %v4016
    %v4319 = vunpack.c.h.b16 %v4016
    %v4320 = vunpack.c.l.b16 %v4017
    %v4321 = vunpack.c.h.b16 %v4017
    %v4322 = vunpack.c.l.b16 %v4018
    %v4323 = vunpack.c.h.b16 %v4018
    %v4324 = vunpack.c.l.b16 %v4019
    %v4325 = vunpack.c.h.b16 %v4019
    %v4326 = vunpack.c.l.b16 %v4020
    %v4327 = vunpack.c.h.b16 %v4020
    %v4328 = vunpack.c.l.b16 %v4021
    %v4329 = vunpack.c.h.b16 %v4021
    %v4330 = vunpack.c.l.b16 %v4022
    %v4331 = vunpack.c.h.b16 %v4022
    %v4332 = vunpack.c.l.b16 %v4023
    %v4333 = vunpack.c.h.b16 %v4023
    %v4334 = vunpack.c.l.b16 %v4024
    %v4335 = vunpack.c.h.b16 %v4024
    %v4336 = vunpack.c.l.b16 %v4025
    %v4337 = vunpack.c.h.b16 %v4025
    %v4338 = vunpack.c.l.b16 %v4026
    %v4339 = vunpack.c.h.b16 %v4026
    %v4340 = vunpack.c.l.b16 %v4027
    %v4341 = vunpack.c.h.b16 %v4027
    %v4342 = vunpack.c.l.b16 %v4028
    %v4343 = vunpack.c.h.b16 %v4028
    %v4344 = vunpack.c.l.b16 %v4029
    %v4345 = vunpack.c.h.b16 %v4029
    %v4346 = vunpack.c.l.b16 %v4030
    %v4347 = vunpack.c.h.b16 %v4030
    %v4348 = vunpack.c.l.b16 %v4031
    %v4349 = vunpack.c.h.b16 %v4031
    %v4350 = vunpack.c.l.b16 %v4032
    %v4351 = vunpack.c.h.b16 %v4032
    %v4352 = vunpack.c.l.b16 %v4033
    %v4353 = vunpack.c.h.b16 %v4033
    %v4354 = vunpack.c.l.b16 %v4034
    %v4355 = vunpack.c.h.b16 %v4034
    %v4356 = vunpack.c.l.b16 %v4035
    %v4357 = vunpack.c.h.b16 %v4035
    %v4358 = vunpack.c.l.b16 %v4036
    %v4359 = vunpack.c.h.b16 %v4036
    %v4360 = vunpack.c.l.b16 %v4037
    %v4361 = vunpack.c.h.b16 %v4037
    %v4362 = vunpack.c.l.b16 %v4038
    %v4363 = vunpack.c.h.b16 %v4038
    %v4364 = vunpack.c.l.b16 %v4039
    %v4365 = vunpack.c.h.b16 %v4039
    %v4366 = vunpack.c.l.b16 %v4040
    %v4367 = vunpack.c.h.b16 %v4040
    %v4368 = vunpack.c.l.b16 %v4041
    %v4369 = vunpack.c.h.b16 %v4041
    %v4370 = vunpack.c.l.b16 %v4042
    %v4371 = vunpack.c.h.b16 %v4042
    %v4372 = vunpack.c.l.b16 %v4043
    %v4373 = vunpack.c.h.b16 %v4043
    %v4374 = vunpack.c.l.b16 %v4044
    %v4375 = vunpack.c.h.b16 %v4044
    %v4376 = vunpack.c.l.b16 %v4045
    %v4377 = vunpack.c.h.b16 %v4045
    %v4378 = vunpack.c.l.b16 %v4046
    %v4379 = vunpack.c.h.b16 %v4046
    %v4380 = vunpack.c.l.b16 %v4047
    %v4381 = vunpack.c.h.b16 %v4047
    %v4382 = vunpack.c.l.b16 %v4048
    %v4383 = vunpack.c.h.b16 %v4048
    %v4384 = vunpack.c.l.b16 %v4049
    %v4385 = vunpack.c.h.b16 %v4049
    %v4386 = vunpack.c.l.b16 %v4050
    %v4387 = vunpack.c.h.b16 %v4050
    %v4388 = vunpack.c.l.b16 %v4051
    %v4389 = vunpack.c.h.b16 %v4051
    %v4390 = vunpack.c.l.b16 %v4052
    %v4391 = vunpack.c.h.b16 %v4052
    %v4392 = vunpack.c.l.b16 %v4053
    %v4393 = vunpack.c.h.b16 %v4053
    %v4394 = vunpack.c.l.b16 %v4054
    %v4395 = vunpack.c.h.b16 %v4054
    %v4396 = vunpack.c.l.b16 %v4055
    %v4397 = vunpack.c.h.b16 %v4055
    %v4398 = vunpack.c.l.b16 %v4056
    %v4399 = vunpack.c.h.b16 %v4056
    %v4400 = vunpack.c.l.b16 %v4057
    %v4401 = vunpack.c.h.b16 %v4057
    %v4402 = vunpack.c.l.b16 %v4058
    %v4403 = vunpack.c.h.b16 %v4058
    %v4404 = vunpack.c.l.b16 %v4059
    %v4405 = vunpack.c.h.b16 %v4059
    %v4406 = vunpack.c.l.b16 %v4060
    %v4407 = vunpack.c.h.b16 %v4060
    %v4408 = vunpack.c.l.b16 %v4061
    %v4409 = vunpack.c.h.b16 %v4061
    %v4410 = vunpack.c.l.b16 %v4062
    %v4411 = vunpack.c.h.b16 %v4062
    %v4412 = vunpack.c.l.b16 %v4063
    %v4413 = vunpack.c.h.b16 %v4063
    %v4414 = vunpack.c.l.b16 %v4064
    %v4415 = vunpack.c.h.b16 %v4064
    %v4416 = vunpack.c.l.b16 %v4065
    %v4417 = vunpack.c.h.b16 %v4065
    %v4418 = vunpack.c.l.b16 %v4066
    %v4419 = vunpack.c.h.b16 %v4066
    %v4420 = vunpack.c.l.b16 %v4067
    %v4421 = vunpack.c.h.b16 %v4067
    %v4422 = vunpack.c.l.b16 %v4068
    %v4423 = vunpack.c.h.b16 %v4068
    %v4424 = vunpack.c.l.b16 %v4069
    %v4425 = vunpack.c.h.b16 %v4069
    %v4426 = vunpack.c.l.b16 %v4070
    %v4427 = vunpack.c.h.b16 %v4070
    %v4428 = vunpack.c.l.b16 %v4071
    %v4429 = vunpack.c.h.b16 %v4071
    %v4430 = vunpack.c.l.b16 %v4072
    %v4431 = vunpack.c.h.b16 %v4072
    %v4432 = vunpack.c.l.b16 %v4073
    %v4433 = vunpack.c.h.b16 %v4073
    %v4434 = vunpack.c.l.b16 %v4074
    %v4435 = vunpack.c.h.b16 %v4074
    %v4436 = vunpack.c.l.b16 %v4075
    %v4437 = vunpack.c.h.b16 %v4075
    %v4438 = vunpack.c.l.b16 %v4076
    %v4439 = vunpack.c.h.b16 %v4076
    %v4440 = vunpack.c.l.b16 %v4077
    %v4441 = vunpack.c.h.b16 %v4077
    %v4442 = vunpack.c.l.b16 %v4078
    %v4443 = vunpack.c.h.b16 %v4078
    %v4444 = vunpack.c.l.b16 %v4079
    %v4445 = vunpack.c.h.b16 %v4079
    %v4446 = vunpack.c.l.b16 %v4080
    %v4447 = vunpack.c.h.b16 %v4080
    %v4448 = vunpack.c.l.b16 %v4081
    %v4449 = vunpack.c.h.b16 %v4081
    %v4450 = vunpack.c.l.b16 %v4082
    %v4451 = vunpack.c.h.b16 %v4082
    %v4452 = vunpack.c.l.b16 %v4083
    %v4453 = vunpack.c.h.b16 %v4083
    %v4454 = vunpack.c.l.b16 %v4084
    %v4455 = vunpack.c.h.b16 %v4084
    %v4456 = vunpack.c.l.b16 %v4085
    %v4457 = vunpack.c.h.b16 %v4085
    %v4458 = vunpack.c.l.b16 %v4086
    %v4459 = vunpack.c.h.b16 %v4086
    %v4460 = vunpack.c.l.b16 %v4087
    %v4461 = vunpack.c.h.b16 %v4087
    %v4462 = vunpack.c.l.b16 %v4088
    %v4463 = vunpack.c.h.b16 %v4088
    %v4464 = vunpack.c.l.b16 %v4089
    %v4465 = vunpack.c.h.b16 %v4089
    %v4466 = vunpack.c.l.b16 %v4090
    %v4467 = vunpack.c.h.b16 %v4090
    %v4468 = vunpack.c.l.b16 %v4091
    %v4469 = vunpack.c.h.b16 %v4091
    %v4470 = vunpack.c.l.b16 %v4092
    %v4471 = vunpack.c.h.b16 %v4092
    %v4472 = vunpack.c.l.b16 %v4093
    %v4473 = vunpack.c.h.b16 %v4093
    %v4474 = vunpack.c.l.b16 %v4094
    %v4475 = vunpack.c.h.b16 %v4094
    %v4476 = vunpack.c.l.b16 %v4095
    %v4477 = vunpack.c.h.b16 %v4095
    %v4478 = vunpack.c.l.b16 %v4096
    %v4479 = vunpack.c.h.b16 %v4096
    %v4480 = vunpack.c.l.b16 %v4097
    %v4481 = vunpack.c.h.b16 %v4097
    %v4482 = vunpack.c.l.b16 %v4098
    %v4483 = vunpack.c.h.b16 %v4098
    %v4484 = vunpack.c.l.b16 %v4099
    %v4485 = vunpack.c.h.b16 %v4099
    %v4486 = vunpack.c.l.b16 %v4100
    %v4487 = vunpack.c.h.b16 %v4100
    %v4488 = vunpack.c.l.b16 %v4101
    %v4489 = vunpack.c.h.b16 %v4101
    %v4490 = vunpack.c.l.b16 %v4102
    %v4491 = vunpack.c.h.b16 %v4102
    %v4492 = vunpack.c.l.b16 %v4103
    %v4493 = vunpack.c.h.b16 %v4103
    %v4494 = vunpack.c.l.b16 %v4104
    %v4495 = vunpack.c.h.b16 %v4104
    %v4496 = vunpack.c.l.b16 %v4105
    %v4497 = vunpack.c.h.b16 %v4105
    %v4498 = vunpack.c.l.b16 %v4106
    %v4499 = vunpack.c.h.b16 %v4106
    %v4500 = vunpack.c.l.b16 %v4107
    %v4501 = vunpack.c.h.b16 %v4107
    %v4502 = vunpack.c.l.b16 %v4108
    %v4503 = vunpack.c.h.b16 %v4108
    %v4504 = vunpack.c.l.b16 %v4109
    %v4505 = vunpack.c.h.b16 %v4109
    %v4506 = vunpack.c.l.b16 %v4110
    %v4507 = vunpack.c.h.b16 %v4110
    %v4508 = vunpack.c.l.b16 %v4111
    %v4509 = vunpack.c.h.b16 %v4111
    %v4510 = vunpack.c.l.b16 %v4112
    %v4511 = vunpack.c.h.b16 %v4112
    %v4512 = vunpack.c.l.b16 %v4113
    %v4513 = vunpack.c.h.b16 %v4113
    %v4514 = vunpack.c.l.b16 %v4114
    %v4515 = vunpack.c.h.b16 %v4114
    %v4516 = vunpack.c.l.b16 %v4115
    %v4517 = vunpack.c.h.b16 %v4115
    %v4518 = vunpack.c.l.b16 %v4116
    %v4519 = vunpack.c.h.b16 %v4116
    %v4520 = vunpack.c.l.b16 %v4117
    %v4521 = vunpack.c.h.b16 %v4117
    %v4522 = vunpack.c.l.b16 %v4118
    %v4523 = vunpack.c.h.b16 %v4118
    %v4524 = vunpack.c.l.b16 %v4119
    %v4525 = vunpack.c.h.b16 %v4119
    %v4526 = vpack.c.b16 %v4274, %v4270
    %v4527 = vpack.c.b16 %v4275, %v4271
    %v4528 = vpack.c.b16 %v4276, %v4272
    %v4529 = vpack.c.b16 %v4277, %v4273
    %v4530 = vpack.c.b16 %v4282, %v4278
    %v4531 = vpack.c.b16 %v4283, %v4279
    %v4532 = vpack.c.b16 %v4284, %v4280
    %v4533 = vpack.c.b16 %v4285, %v4281
    %v4534 = vpack.c.b16 %v4290, %v4286
    %v4535 = vpack.c.b16 %v4291, %v4287
    %v4536 = vpack.c.b16 %v4292, %v4288
    %v4537 = vpack.c.b16 %v4293, %v4289
    %v4538 = vpack.c.b16 %v4298, %v4294
    %v4539 = vpack.c.b16 %v4299, %v4295
    %v4540 = vpack.c.b16 %v4300, %v4296
    %v4541 = vpack.c.b16 %v4301, %v4297
    %v4542 = vpack.c.b16 %v4306, %v4302
    %v4543 = vpack.c.b16 %v4307, %v4303
    %v4544 = vpack.c.b16 %v4308, %v4304
    %v4545 = vpack.c.b16 %v4309, %v4305
    %v4546 = vpack.c.b16 %v4314, %v4310
    %v4547 = vpack.c.b16 %v4315, %v4311
    %v4548 = vpack.c.b16 %v4316, %v4312
    %v4549 = vpack.c.b16 %v4317, %v4313
    %v4550 = vpack.c.b16 %v4322, %v4318
    %v4551 = vpack.c.b16 %v4323, %v4319
    %v4552 = vpack.c.b16 %v4324, %v4320
    %v4553 = vpack.c.b16 %v4325, %v4321
    %v4554 = vpack.c.b16 %v4330, %v4326
    %v4555 = vpack.c.b16 %v4331, %v4327
    %v4556 = vpack.c.b16 %v4332, %v4328
    %v4557 = vpack.c.b16 %v4333, %v4329
    %v4558 = vpack.c.b16 %v4338, %v4334
    %v4559 = vpack.c.b16 %v4339, %v4335
    %v4560 = vpack.c.b16 %v4340, %v4336
    %v4561 = vpack.c.b16 %v4341, %v4337
    %v4562 = vpack.c.b16 %v4346, %v4342
    %v4563 = vpack.c.b16 %v4347, %v4343
    %v4564 = vpack.c.b16 %v4348, %v4344
    %v4565 = vpack.c.b16 %v4349, %v4345
    %v4566 = vpack.c.b16 %v4354, %v4350
    %v4567 = vpack.c.b16 %v4355, %v4351
    %v4568 = vpack.c.b16 %v4356, %v4352
    %v4569 = vpack.c.b16 %v4357, %v4353
    %v4570 = vpack.c.b16 %v4362, %v4358
    %v4571 = vpack.c.b16 %v4363, %v4359
    %v4572 = vpack.c.b16 %v4364, %v4360
    %v4573 = vpack.c.b16 %v4365, %v4361
    %v4574 = vpack.c.b16 %v4370, %v4366
    %v4575 = vpack.c.b16 %v4371, %v4367
    %v4576 = vpack.c.b16 %v4372, %v4368
    %v4577 = vpack.c.b16 %v4373, %v4369
    %v4578 = vpack.c.b16 %v4378, %v4374
    %v4579 = vpack.c.b16 %v4379, %v4375
    %v4580 = vpack.c.b16 %v4380, %v4376
    %v4581 = vpack.c.b16 %v4381, %v4377
    %v4582 = vpack.c.b16 %v4386, %v4382
    %v4583 = vpack.c.b16 %v4387, %v4383
    %v4584 = vpack.c.b16 %v4388, %v4384
    %v4585 = vpack.c.b16 %v4389, %v4385
    %v4586 = vpack.c.b16 %v4394, %v4390
    %v4587 = vpack.c.b16 %v4395, %v4391
    %v4588 = vpack.c.b16 %v4396, %v4392
    %v4589 = vpack.c.b16 %v4397, %v4393
    %v4590 = vpack.c.b16 %v4402, %v4398
    %v4591 = vpack.c.b16 %v4403, %v4399
    %v4592 = vpack.c.b16 %v4404, %v4400
    %v4593 = vpack.c.b16 %v4405, %v4401
    %v4594 = vpack.c.b16 %v4410, %v4406
    %v4595 = vpack.c.b16 %v4411, %v4407
    %v4596 = vpack.c.b16 %v4412, %v4408
    %v4597 = vpack.c.b16 %v4413, %v4409
    %v4598 = vpack.c.b16 %v4418, %v4414
    %v4599 = vpack.c.b16 %v4419, %v4415
    %v4600 = vpack.c.b16 %v4420, %v4416
    %v4601 = vpack.c.b16 %v4421, %v4417
    %v4602 = vpack.c.b16 %v4426, %v4422
    %v4603 = vpack.c.b16 %v4427, %v4423
    %v4604 = vpack.c.b16 %v4428, %v4424
    %v4605 = vpack.c.b16 %v4429, %v4425
    %v4606 = vpack.c.b16 %v4434, %v4430
    %v4607 = vpack.c.b16 %v4435, %v4431
    %v4608 = vpack.c.b16 %v4436, %v4432
    %v4609 = vpack.c.b16 %v4437, %v4433
    %v4610 = vpack.c.b16 %v4442, %v4438
    %v4611 = vpack.c.b16 %v4443, %v4439
    %v4612 = vpack.c.b16 %v4444, %v4440
    %v4613 = vpack.c.b16 %v4445, %v4441
    %v4614 = vpack.c.b16 %v4450, %v4446
    %v4615 = vpack.c.b16 %v4451, %v4447
    %v4616 = vpack.c.b16 %v4452, %v4448
    %v4617 = vpack.c.b16 %v4453, %v4449
    %v4618 = vpack.c.b16 %v4458, %v4454
    %v4619 = vpack.c.b16 %v4459, %v4455
    %v4620 = vpack.c.b16 %v4460, %v4456
    %v4621 = vpack.c.b16 %v4461, %v4457
    %v4622 = vpack.c.b16 %v4466, %v4462
    %v4623 = vpack.c.b16 %v4467, %v4463
    %v4624 = vpack.c.b16 %v4468, %v4464
    %v4625 = vpack.c.b16 %v4469, %v4465
    %v4626 = vpack.c.b16 %v4474, %v4470
    %v4627 = vpack.c.b16 %v4475, %v4471
    %v4628 = vpack.c.b16 %v4476, %v4472
    %v4629 = vpack.c.b16 %v4477, %v4473
    %v4630 = vpack.c.b16 %v4482, %v4478
    %v4631 = vpack.c.b16 %v4483, %v4479
    %v4632 = vpack.c.b16 %v4484, %v4480
    %v4633 = vpack.c.b16 %v4485, %v4481
    %v4634 = vpack.c.b16 %v4490, %v4486
    %v4635 = vpack.c.b16 %v4491, %v4487
    %v4636 = vpack.c.b16 %v4492, %v4488
    %v4637 = vpack.c.b16 %v4493, %v4489
    %v4638 = vpack.c.b16 %v4498, %v4494
    %v4639 = vpack.c.b16 %v4499, %v4495
    %v4640 = vpack.c.b16 %v4500, %v4496
    %v4641 = vpack.c.b16 %v4501, %v4497
    %v4642 = vpack.c.b16 %v4506, %v4502
    %v4643 = vpack.c.b16 %v4507, %v4503
    %v4644 = vpack.c.b16 %v4508, %v4504
    %v4645 = vpack.c.b16 %v4509, %v4505
    %v4646 = vpack.c.b16 %v4514, %v4510
    %v4647 = vpack.c.b16 %v4515, %v4511
    %v4648 = vpack.c.b16 %v4516, %v4512
    %v4649 = vpack.c.b16 %v4517, %v4513
    %v4650 = vpack.c.b16 %v4522, %v4518
    %v4651 = vpack.c.b16 %v4523, %v4519
    %v4652 = vpack.c.b16 %v4524, %v4520
    %v4653 = vpack.c.b16 %v4525, %v4521
    %4782 = vmatprep.subr.bf16.mxu0 %v4555
    %4783 = vmatpush1.bf16.msra.mxu0 %v4554
    %4784 = vmatprep.subr.bf16.mxu0 %v4551
    %4785 = vmatpush1.bf16.msra.mxu0 %v4550
    %4786 = vmatprep.subr.bf16.mxu0 %v4547
    %4787 = vmatpush1.bf16.msra.mxu0 %v4546
    %4788 = vmatprep.subr.bf16.mxu0 %v4543
    %4789 = vmatpush1.bf16.msra.mxu0 %v4542
    %4790 = vmatprep.subr.bf16.mxu0 %v4539
    %4791 = vmatpush1.bf16.msra.mxu0 %v4538
    %4792 = vmatprep.subr.bf16.mxu0 %v4535
    %4793 = vmatpush1.bf16.msra.mxu0 %v4534
    %4794 = vmatprep.subr.bf16.mxu0 %v4531
    %4795 = vmatpush1.bf16.msra.mxu0 %v4530
    %4796 = vmatprep.subr.bf16.mxu0 %v4527
    %4797 = vmatpush1.bf16.msra.mxu0 %v4526
    %4798 = vmatprep.subr.bf16.mxu0 %v4587
    %4799 = vmatpush2.bf16.msra.mxu0 %v4586
    %4800 = vmatprep.subr.bf16.mxu0 %v4583
    %4801 = vmatpush2.bf16.msra.mxu0 %v4582
    %4802 = vmatprep.subr.bf16.mxu0 %v4579
    %4803 = vmatpush2.bf16.msra.mxu0 %v4578
    %4804 = vmatprep.subr.bf16.mxu0 %v4575
    %4805 = vmatpush2.bf16.msra.mxu0 %v4574
    %4806 = vmatprep.subr.bf16.mxu0 %v4571
    %4807 = vmatpush2.bf16.msra.mxu0 %v4570
    %4808 = vmatprep.subr.bf16.mxu0 %v4567
    %4809 = vmatpush2.bf16.msra.mxu0 %v4566
    %4810 = vmatprep.subr.bf16.mxu0 %v4563
    %4811 = vmatpush2.bf16.msra.mxu0 %v4562
    %4812 = vmatprep.subr.bf16.mxu0 %v4559
    %4813 = vmatpush2.bf16.msra.mxu0 %v4558
    %4814 = vmatprep.mubr.bf16.mxu0 %v3989
    %4815 = vmatmul.mubr.bf16.gmra.mxu0 %v3988
    %v4816 = vpop.f32.mrf.mxu0
    %v4817 = vadd.f32 %v4125, %v4816
    %v4818 = vpop.f32.mrf.mxu0
    %v4819 = vadd.f32 %v4129, %v4818
    %v4820 = vpop.f32.mrf.mxu0
    %v4821 = vpop.f32.mrf.mxu0
    %4822 = vdwg.mxu0
    %4823 = vmatprep.subr.bf16.mxu0 %v4619
    %4824 = vmatpush1.bf16.msra.mxu0 %v4618
    %4825 = vmatprep.subr.bf16.mxu0 %v4615
    %4826 = vmatpush1.bf16.msra.mxu0 %v4614
    %4827 = vmatprep.subr.bf16.mxu0 %v4611
    %4828 = vmatpush1.bf16.msra.mxu0 %v4610
    %4829 = vmatprep.subr.bf16.mxu0 %v4607
    %4830 = vmatpush1.bf16.msra.mxu0 %v4606
    %4831 = vmatprep.subr.bf16.mxu0 %v4603
    %4832 = vmatpush1.bf16.msra.mxu0 %v4602
    %4833 = vmatprep.subr.bf16.mxu0 %v4599
    %4834 = vmatpush1.bf16.msra.mxu0 %v4598
    %4835 = vmatprep.subr.bf16.mxu0 %v4595
    %4836 = vmatpush1.bf16.msra.mxu0 %v4594
    %4837 = vmatprep.subr.bf16.mxu0 %v4591
    %4838 = vmatpush1.bf16.msra.mxu0 %v4590
    %4839 = vmatprep.subr.bf16.mxu0 %v4651
    %4840 = vmatpush2.bf16.msra.mxu0 %v4650
    %4841 = vmatprep.subr.bf16.mxu0 %v4647
    %4842 = vmatpush2.bf16.msra.mxu0 %v4646
    %4843 = vmatprep.subr.bf16.mxu0 %v4643
    %4844 = vmatpush2.bf16.msra.mxu0 %v4642
    %4845 = vmatprep.subr.bf16.mxu0 %v4639
    %4846 = vmatpush2.bf16.msra.mxu0 %v4638
    %4847 = vmatprep.subr.bf16.mxu0 %v4635
    %4848 = vmatpush2.bf16.msra.mxu0 %v4634
    %4849 = vmatprep.subr.bf16.mxu0 %v4631
    %4850 = vmatpush2.bf16.msra.mxu0 %v4630
    %4851 = vmatprep.subr.bf16.mxu0 %v4627
    %4852 = vmatpush2.bf16.msra.mxu0 %v4626
    %4853 = vmatprep.subr.bf16.mxu0 %v4623
    %4854 = vmatpush2.bf16.msra.mxu0 %v4622
    %4855 = vmatprep.mubr.bf16.mxu0 %v3991
    %4856 = vmatmul.mubr.bf16.gmra.mxu0 %v3990
    %v4857 = vpop.f32.mrf.mxu0
    %v4858 = vadd.f32 %v4817, %v4857
    %v4859 = vpop.f32.mrf.mxu0
    %v4860 = vadd.f32 %v4819, %v4859
    %v4861 = vpop.f32.mrf.mxu0
    %v4862 = vpop.f32.mrf.mxu0
    %4863 = vdwg.mxu0
    %4864 = vmatprep.subr.bf16.mxu0 %v4557
    %4865 = vmatpush1.bf16.msra.mxu0 %v4556
    %4866 = vmatprep.subr.bf16.mxu0 %v4553
    %4867 = vmatpush1.bf16.msra.mxu0 %v4552
    %4868 = vmatprep.subr.bf16.mxu0 %v4549
    %4869 = vmatpush1.bf16.msra.mxu0 %v4548
    %4870 = vmatprep.subr.bf16.mxu0 %v4545
    %4871 = vmatpush1.bf16.msra.mxu0 %v4544
    %4872 = vmatprep.subr.bf16.mxu0 %v4541
    %4873 = vmatpush1.bf16.msra.mxu0 %v4540
    %4874 = vmatprep.subr.bf16.mxu0 %v4537
    %4875 = vmatpush1.bf16.msra.mxu0 %v4536
    %4876 = vmatprep.subr.bf16.mxu0 %v4533
    %4877 = vmatpush1.bf16.msra.mxu0 %v4532
    %4878 = vmatprep.subr.bf16.mxu0 %v4529
    %4879 = vmatpush1.bf16.msra.mxu0 %v4528
    %4880 = vmatprep.subr.bf16.mxu0 %v4589
    %4881 = vmatpush2.bf16.msra.mxu0 %v4588
    %4882 = vmatprep.subr.bf16.mxu0 %v4585
    %4883 = vmatpush2.bf16.msra.mxu0 %v4584
    %4884 = vmatprep.subr.bf16.mxu0 %v4581
    %4885 = vmatpush2.bf16.msra.mxu0 %v4580
    %4886 = vmatprep.subr.bf16.mxu0 %v4577
    %4887 = vmatpush2.bf16.msra.mxu0 %v4576
    %4888 = vmatprep.subr.bf16.mxu0 %v4573
    %4889 = vmatpush2.bf16.msra.mxu0 %v4572
    %4890 = vmatprep.subr.bf16.mxu0 %v4569
    %4891 = vmatpush2.bf16.msra.mxu0 %v4568
    %4892 = vmatprep.subr.bf16.mxu0 %v4565
    %4893 = vmatpush2.bf16.msra.mxu0 %v4564
    %4894 = vmatprep.subr.bf16.mxu0 %v4561
    %4895 = vmatpush2.bf16.msra.mxu0 %v4560
    %4896 = vmatprep.mubr.bf16.mxu0 %v3989
    %4897 = vmatmul.mubr.bf16.gmra.mxu0 %v3988
    %v4898 = vpop.f32.mrf.mxu0
    %v4899 = vadd.f32 %v4133, %v4898
    %v4900 = vpop.f32.mrf.mxu0
    %v4901 = vadd.f32 %v4137, %v4900
    %v4902 = vpop.f32.mrf.mxu0
    %v4903 = vpop.f32.mrf.mxu0
    %4904 = vdwg.mxu0
    %4905 = vmatprep.subr.bf16.mxu0 %v4621
    %4906 = vmatpush1.bf16.msra.mxu0 %v4620
    %4907 = vmatprep.subr.bf16.mxu0 %v4617
    %4908 = vmatpush1.bf16.msra.mxu0 %v4616
    %4909 = vmatprep.subr.bf16.mxu0 %v4613
    %4910 = vmatpush1.bf16.msra.mxu0 %v4612
    %4911 = vmatprep.subr.bf16.mxu0 %v4609
    %4912 = vmatpush1.bf16.msra.mxu0 %v4608
    %4913 = vmatprep.subr.bf16.mxu0 %v4605
    %4914 = vmatpush1.bf16.msra.mxu0 %v4604
    %4915 = vmatprep.subr.bf16.mxu0 %v4601
    %4916 = vmatpush1.bf16.msra.mxu0 %v4600
    %4917 = vmatprep.subr.bf16.mxu0 %v4597
    %4918 = vmatpush1.bf16.msra.mxu0 %v4596
    %4919 = vmatprep.subr.bf16.mxu0 %v4593
    %4920 = vmatpush1.bf16.msra.mxu0 %v4592
    %4921 = vmatprep.subr.bf16.mxu0 %v4653
    %4922 = vmatpush2.bf16.msra.mxu0 %v4652
    %4923 = vmatprep.subr.bf16.mxu0 %v4649
    %4924 = vmatpush2.bf16.msra.mxu0 %v4648
    %4925 = vmatprep.subr.bf16.mxu0 %v4645
    %4926 = vmatpush2.bf16.msra.mxu0 %v4644
    %4927 = vmatprep.subr.bf16.mxu0 %v4641
    %4928 = vmatpush2.bf16.msra.mxu0 %v4640
    %4929 = vmatprep.subr.bf16.mxu0 %v4637
    %4930 = vmatpush2.bf16.msra.mxu0 %v4636
    %4931 = vmatprep.subr.bf16.mxu0 %v4633
    %4932 = vmatpush2.bf16.msra.mxu0 %v4632
    %4933 = vmatprep.subr.bf16.mxu0 %v4629
    %4934 = vmatpush2.bf16.msra.mxu0 %v4628
    %4935 = vmatprep.subr.bf16.mxu0 %v4625
    %4936 = vmatpush2.bf16.msra.mxu0 %v4624
    %4937 = vmatprep.mubr.bf16.mxu0 %v3991
    %4938 = vmatmul.mubr.bf16.gmra.mxu0 %v3990
    %v4939 = vpop.f32.mrf.mxu0
    %v4940 = vadd.f32 %v4899, %v4939
    %v4941 = vpop.f32.mrf.mxu0
    %v4942 = vadd.f32 %v4901, %v4941
    %v4943 = vpop.f32.mrf.mxu0
    %v4944 = vpop.f32.mrf.mxu0
    %4945 = vdwg.mxu0
    %v4946 = vmax.f32 %v4858, 0.0
    %v4947 = vmax.f32 %v4860, 0.0
    %v4948 = vmax.f32 %v4940, 0.0
    %v4949 = vmax.f32 %v4942, 0.0
    %s4950 = smul.u32 %s3984, 1
    %s4951 = sshll.u32 %s4950, 4
    %4952 = dma.done %s96, %s4951
    %v4953 = vpack.c.bf16 %v4946, %v4946
    %v4954 = vpack.c.bf16 %v4947, %v4947
    %v4955 = vpack.c.bf16 %v4948, %v4948
    %v4956 = vpack.c.bf16 %v4949, %v4949
    %v4957 = vld [vmem:[#allocation5] sm:$0xf]
    %v4958 = vld [vmem:[#allocation5 + $0x4] sm:$0xf]
    %v4959 = vld [vmem:[#allocation5 + $0x8] sm:$0xf]
    %v4960 = vld [vmem:[#allocation5 + $0xc] sm:$0xf]
    %v4961 = vld [vmem:[#allocation5 + $0x10] sm:$0xf]
    %v4962 = vld [vmem:[#allocation5 + $0x14] sm:$0xf]
    %v4963 = vld [vmem:[#allocation5 + $0x18] sm:$0xf]
    %v4964 = vld [vmem:[#allocation5 + $0x1c] sm:$0xf]
    %v4965 = vld [vmem:[#allocation5 + $0x20] sm:$0xf]
    %v4966 = vld [vmem:[#allocation5 + $0x24] sm:$0xf]
    %v4967 = vld [vmem:[#allocation5 + $0x28] sm:$0xf]
    %v4968 = vld [vmem:[#allocation5 + $0x2c] sm:$0xf]
    %v4969 = vld [vmem:[#allocation5 + $0x30] sm:$0xf]
    %v4970 = vld [vmem:[#allocation5 + $0x34] sm:$0xf]
    %v4971 = vld [vmem:[#allocation5 + $0x38] sm:$0xf]
    %v4972 = vld [vmem:[#allocation5 + $0x3c] sm:$0xf]
    %v4973 = vld [vmem:[#allocation5 + $0x40] sm:$0xf]
    %v4974 = vld [vmem:[#allocation5 + $0x44] sm:$0xf]
    %v4975 = vld [vmem:[#allocation5 + $0x48] sm:$0xf]
    %v4976 = vld [vmem:[#allocation5 + $0x4c] sm:$0xf]
    %v4977 = vld [vmem:[#allocation5 + $0x50] sm:$0xf]
    %v4978 = vld [vmem:[#allocation5 + $0x54] sm:$0xf]
    %v4979 = vld [vmem:[#allocation5 + $0x58] sm:$0xf]
    %v4980 = vld [vmem:[#allocation5 + $0x5c] sm:$0xf]
    %v4981 = vld [vmem:[#allocation5 + $0x60] sm:$0xf]
    %v4982 = vld [vmem:[#allocation5 + $0x64] sm:$0xf]
    %v4983 = vld [vmem:[#allocation5 + $0x68] sm:$0xf]
    %v4984 = vld [vmem:[#allocation5 + $0x6c] sm:$0xf]
    %v4985 = vld [vmem:[#allocation5 + $0x70] sm:$0xf]
    %v4986 = vld [vmem:[#allocation5 + $0x74] sm:$0xf]
    %v4987 = vld [vmem:[#allocation5 + $0x78] sm:$0xf]
    %v4988 = vld [vmem:[#allocation5 + $0x7c] sm:$0xf]
    %v4989 = vld [vmem:[#allocation5 + $0x80] sm:$0xf]
    %v4990 = vld [vmem:[#allocation5 + $0x84] sm:$0xf]
    %v4991 = vld [vmem:[#allocation5 + $0x88] sm:$0xf]
    %v4992 = vld [vmem:[#allocation5 + $0x8c] sm:$0xf]
    %v4993 = vld [vmem:[#allocation5 + $0x90] sm:$0xf]
    %v4994 = vld [vmem:[#allocation5 + $0x94] sm:$0xf]
    %v4995 = vld [vmem:[#allocation5 + $0x98] sm:$0xf]
    %v4996 = vld [vmem:[#allocation5 + $0x9c] sm:$0xf]
    %v4997 = vld [vmem:[#allocation5 + $0xa0] sm:$0xf]
    %v4998 = vld [vmem:[#allocation5 + $0xa4] sm:$0xf]
    %v4999 = vld [vmem:[#allocation5 + $0xa8] sm:$0xf]
    %v5000 = vld [vmem:[#allocation5 + $0xac] sm:$0xf]
    %v5001 = vld [vmem:[#allocation5 + $0xb0] sm:$0xf]
    %v5002 = vld [vmem:[#allocation5 + $0xb4] sm:$0xf]
    %v5003 = vld [vmem:[#allocation5 + $0xb8] sm:$0xf]
    %v5004 = vld [vmem:[#allocation5 + $0xbc] sm:$0xf]
    %v5005 = vld [vmem:[#allocation5 + $0xc0] sm:$0xf]
    %v5006 = vld [vmem:[#allocation5 + $0xc4] sm:$0xf]
    %v5007 = vld [vmem:[#allocation5 + $0xc8] sm:$0xf]
    %v5008 = vld [vmem:[#allocation5 + $0xcc] sm:$0xf]
    %v5009 = vld [vmem:[#allocation5 + $0xd0] sm:$0xf]
    %v5010 = vld [vmem:[#allocation5 + $0xd4] sm:$0xf]
    %v5011 = vld [vmem:[#allocation5 + $0xd8] sm:$0xf]
    %v5012 = vld [vmem:[#allocation5 + $0xdc] sm:$0xf]
    %v5013 = vld [vmem:[#allocation5 + $0xe0] sm:$0xf]
    %v5014 = vld [vmem:[#allocation5 + $0xe4] sm:$0xf]
    %v5015 = vld [vmem:[#allocation5 + $0xe8] sm:$0xf]
    %v5016 = vld [vmem:[#allocation5 + $0xec] sm:$0xf]
    %v5017 = vld [vmem:[#allocation5 + $0xf0] sm:$0xf]
    %v5018 = vld [vmem:[#allocation5 + $0xf4] sm:$0xf]
    %v5019 = vld [vmem:[#allocation5 + $0xf8] sm:$0xf]
    %v5020 = vld [vmem:[#allocation5 + $0xfc] sm:$0xf]
    %v5021 = vld [vmem:[%s4] sm:$0x1]
    %v5023 = vlaneseq
    %v5024 = vshrl.u32 %v5023, 7
    %v5025 = vsub.s32 0, %v5024
    %v5026 = vrot.slane %v5021, %v5025
    %v5092 = vunpack.c.l.b16 %v4957
    %v5093 = vunpack.c.l.b16 %v4958
    %v5094 = vunpack.c.l.b16 %v4959
    %v5095 = vunpack.c.l.b16 %v4960
    %v5096 = vunpack.c.l.b16 %v4961
    %v5097 = vunpack.c.l.b16 %v4962
    %v5098 = vunpack.c.l.b16 %v4963
    %v5099 = vunpack.c.l.b16 %v4964
    %v5100 = vunpack.c.l.b16 %v4965
    %v5101 = vunpack.c.l.b16 %v4966
    %v5102 = vunpack.c.l.b16 %v4967
    %v5103 = vunpack.c.l.b16 %v4968
    %v5104 = vunpack.c.l.b16 %v4969
    %v5105 = vunpack.c.l.b16 %v4970
    %v5106 = vunpack.c.l.b16 %v4971
    %v5107 = vunpack.c.l.b16 %v4972
    %v5108 = vunpack.c.l.b16 %v4973
    %v5109 = vunpack.c.l.b16 %v4974
    %v5110 = vunpack.c.l.b16 %v4975
    %v5111 = vunpack.c.l.b16 %v4976
    %v5112 = vunpack.c.l.b16 %v4977
    %v5113 = vunpack.c.l.b16 %v4978
    %v5114 = vunpack.c.l.b16 %v4979
    %v5115 = vunpack.c.l.b16 %v4980
    %v5116 = vunpack.c.l.b16 %v4981
    %v5117 = vunpack.c.l.b16 %v4982
    %v5118 = vunpack.c.l.b16 %v4983
    %v5119 = vunpack.c.l.b16 %v4984
    %v5120 = vunpack.c.l.b16 %v4985
    %v5121 = vunpack.c.l.b16 %v4986
    %v5122 = vunpack.c.l.b16 %v4987
    %v5123 = vunpack.c.l.b16 %v4988
    %v5124 = vunpack.c.l.b16 %v4989
    %v5125 = vunpack.c.l.b16 %v4990
    %v5126 = vunpack.c.l.b16 %v4991
    %v5127 = vunpack.c.l.b16 %v4992
    %v5128 = vunpack.c.l.b16 %v4993
    %v5129 = vunpack.c.l.b16 %v4994
    %v5130 = vunpack.c.l.b16 %v4995
    %v5131 = vunpack.c.l.b16 %v4996
    %v5132 = vunpack.c.l.b16 %v4997
    %v5133 = vunpack.c.l.b16 %v4998
    %v5134 = vunpack.c.l.b16 %v4999
    %v5135 = vunpack.c.l.b16 %v5000
    %v5136 = vunpack.c.l.b16 %v5001
    %v5137 = vunpack.c.l.b16 %v5002
    %v5138 = vunpack.c.l.b16 %v5003
    %v5139 = vunpack.c.l.b16 %v5004
    %v5140 = vunpack.c.l.b16 %v5005
    %v5141 = vunpack.c.l.b16 %v5006
    %v5142 = vunpack.c.l.b16 %v5007
    %v5143 = vunpack.c.l.b16 %v5008
    %v5144 = vunpack.c.l.b16 %v5009
    %v5145 = vunpack.c.l.b16 %v5010
    %v5146 = vunpack.c.l.b16 %v5011
    %v5147 = vunpack.c.l.b16 %v5012
    %v5148 = vunpack.c.l.b16 %v5013
    %v5149 = vunpack.c.l.b16 %v5014
    %v5150 = vunpack.c.l.b16 %v5015
    %v5151 = vunpack.c.l.b16 %v5016
    %v5152 = vunpack.c.l.b16 %v5017
    %v5153 = vunpack.c.l.b16 %v5018
    %v5154 = vunpack.c.l.b16 %v5019
    %v5155 = vunpack.c.l.b16 %v5020
    %v5156 = vpack.c.b16 %v5093, %v5092
    %v5157 = vpack.c.b16 %v5095, %v5094
    %v5158 = vpack.c.b16 %v5097, %v5096
    %v5159 = vpack.c.b16 %v5099, %v5098
    %v5160 = vpack.c.b16 %v5101, %v5100
    %v5161 = vpack.c.b16 %v5103, %v5102
    %v5162 = vpack.c.b16 %v5105, %v5104
    %v5163 = vpack.c.b16 %v5107, %v5106
    %v5164 = vpack.c.b16 %v5109, %v5108
    %v5165 = vpack.c.b16 %v5111, %v5110
    %v5166 = vpack.c.b16 %v5113, %v5112
    %v5167 = vpack.c.b16 %v5115, %v5114
    %v5168 = vpack.c.b16 %v5117, %v5116
    %v5169 = vpack.c.b16 %v5119, %v5118
    %v5170 = vpack.c.b16 %v5121, %v5120
    %v5171 = vpack.c.b16 %v5123, %v5122
    %v5172 = vpack.c.b16 %v5125, %v5124
    %v5173 = vpack.c.b16 %v5127, %v5126
    %v5174 = vpack.c.b16 %v5129, %v5128
    %v5175 = vpack.c.b16 %v5131, %v5130
    %v5176 = vpack.c.b16 %v5133, %v5132
    %v5177 = vpack.c.b16 %v5135, %v5134
    %v5178 = vpack.c.b16 %v5137, %v5136
    %v5179 = vpack.c.b16 %v5139, %v5138
    %v5180 = vpack.c.b16 %v5141, %v5140
    %v5181 = vpack.c.b16 %v5143, %v5142
    %v5182 = vpack.c.b16 %v5145, %v5144
    %v5183 = vpack.c.b16 %v5147, %v5146
    %v5184 = vpack.c.b16 %v5149, %v5148
    %v5185 = vpack.c.b16 %v5151, %v5150
    %v5186 = vpack.c.b16 %v5153, %v5152
    %v5187 = vpack.c.b16 %v5155, %v5154
    %5220 = vmatprep.subr.bf16.mxu0 0
    %5221 = vmatpush1.bf16.msra.mxu0 %v5163
    %5222 = vmatprep.subr.bf16.mxu0 0
    %5223 = vmatpush1.bf16.msra.mxu0 %v5162
    %5224 = vmatprep.subr.bf16.mxu0 0
    %5225 = vmatpush1.bf16.msra.mxu0 %v5161
    %5226 = vmatprep.subr.bf16.mxu0 0
    %5227 = vmatpush1.bf16.msra.mxu0 %v5160
    %5228 = vmatprep.subr.bf16.mxu0 0
    %5229 = vmatpush1.bf16.msra.mxu0 %v5159
    %5230 = vmatprep.subr.bf16.mxu0 0
    %5231 = vmatpush1.bf16.msra.mxu0 %v5158
    %5232 = vmatprep.subr.bf16.mxu0 0
    %5233 = vmatpush1.bf16.msra.mxu0 %v5157
    %5234 = vmatprep.subr.bf16.mxu0 0
    %5235 = vmatpush1.bf16.msra.mxu0 %v5156
    %5236 = vmatprep.subr.bf16.mxu0 0
    %5237 = vmatpush2.bf16.msra.mxu0 %v5171
    %5238 = vmatprep.subr.bf16.mxu0 0
    %5239 = vmatpush2.bf16.msra.mxu0 %v5170
    %5240 = vmatprep.subr.bf16.mxu0 0
    %5241 = vmatpush2.bf16.msra.mxu0 %v5169
    %5242 = vmatprep.subr.bf16.mxu0 0
    %5243 = vmatpush2.bf16.msra.mxu0 %v5168
    %5244 = vmatprep.subr.bf16.mxu0 0
    %5245 = vmatpush2.bf16.msra.mxu0 %v5167
    %5246 = vmatprep.subr.bf16.mxu0 0
    %5247 = vmatpush2.bf16.msra.mxu0 %v5166
    %5248 = vmatprep.subr.bf16.mxu0 0
    %5249 = vmatpush2.bf16.msra.mxu0 %v5165
    %5250 = vmatprep.subr.bf16.mxu0 0
    %5251 = vmatpush2.bf16.msra.mxu0 %v5164
    %5252 = vmatprep.mubr.bf16.mxu0 %v4954
    %5253 = vmatmul.mubr.bf16.gmra.mxu0 %v4953
    %v5254 = vpop.f32.mrf.mxu0
    %v5255 = vadd.f32 %v5026, %v5254
    %v5256 = vpop.f32.mrf.mxu0
    %v5257 = vpop.f32.mrf.mxu0
    %v5258 = vpop.f32.mrf.mxu0
    %5259 = vdwg.mxu0
    %5260 = vmatprep.subr.bf16.mxu0 0
    %5261 = vmatpush1.bf16.msra.mxu0 %v5179
    %5262 = vmatprep.subr.bf16.mxu0 0
    %5263 = vmatpush1.bf16.msra.mxu0 %v5178
    %5264 = vmatprep.subr.bf16.mxu0 0
    %5265 = vmatpush1.bf16.msra.mxu0 %v5177
    %5266 = vmatprep.subr.bf16.mxu0 0
    %5267 = vmatpush1.bf16.msra.mxu0 %v5176
    %5268 = vmatprep.subr.bf16.mxu0 0
    %5269 = vmatpush1.bf16.msra.mxu0 %v5175
    %5270 = vmatprep.subr.bf16.mxu0 0
    %5271 = vmatpush1.bf16.msra.mxu0 %v5174
    %5272 = vmatprep.subr.bf16.mxu0 0
    %5273 = vmatpush1.bf16.msra.mxu0 %v5173
    %5274 = vmatprep.subr.bf16.mxu0 0
    %5275 = vmatpush1.bf16.msra.mxu0 %v5172
    %5276 = vmatprep.subr.bf16.mxu0 0
    %5277 = vmatpush2.bf16.msra.mxu0 %v5187
    %5278 = vmatprep.subr.bf16.mxu0 0
    %5279 = vmatpush2.bf16.msra.mxu0 %v5186
    %5280 = vmatprep.subr.bf16.mxu0 0
    %5281 = vmatpush2.bf16.msra.mxu0 %v5185
    %5282 = vmatprep.subr.bf16.mxu0 0
    %5283 = vmatpush2.bf16.msra.mxu0 %v5184
    %5284 = vmatprep.subr.bf16.mxu0 0
    %5285 = vmatpush2.bf16.msra.mxu0 %v5183
    %5286 = vmatprep.subr.bf16.mxu0 0
    %5287 = vmatpush2.bf16.msra.mxu0 %v5182
    %5288 = vmatprep.subr.bf16.mxu0 0
    %5289 = vmatpush2.bf16.msra.mxu0 %v5181
    %5290 = vmatprep.subr.bf16.mxu0 0
    %5291 = vmatpush2.bf16.msra.mxu0 %v5180
    %5292 = vmatprep.mubr.bf16.mxu0 %v4956
    %5293 = vmatmul.mubr.bf16.gmra.mxu0 %v4955
    %v5294 = vpop.f32.mrf.mxu0
    %v5295 = vadd.f32 %v5255, %v5294
    %v5296 = vpop.f32.mrf.mxu0
    %v5297 = vpop.f32.mrf.mxu0
    %v5298 = vpop.f32.mrf.mxu0
    %5299 = vdwg.mxu0
    %5300 = vst [vmem:[#allocation13] sm:$0x3] %v5295
    // Predicated region
    $region50: #{tpu_custom_call.1} parent=1 // pred_check
      _
    $region51: #{tpu_custom_call.1} parent=1 // pred_check_branch
      %5302 = sbr.rel (0) target = $region53
    $region52: #{tpu_custom_call.1} parent=1 // pred_region
      %s5304 = ssub.s32 32, 32
      %5305 = vsyncadd [#allocation9], %s5304
      %s5307 = sshll.u32 [#allocation13], 4
      %s5308 = int_to_ptr.vmem [resolvable:$true] %s5307
      %5310 = dma.vmem_to_hbm [thread:$0]  %s5308, 32, %s9, [#allocation9]
    $region53: #{tpu_custom_call.1} parent=1 // pred_fallthru
      _
    // Predicated region
    $region54: #{tpu_custom_call.1} parent=1 // pred_check
      _
    $region55: #{tpu_custom_call.1} parent=1 // pred_check_branch
      %5312 = sbr.rel (0) target = $region57
    $region56: #{tpu_custom_call.1} parent=1 // pred_region
      %5313 = dma.done [#allocation9], 32
    $region57: #{tpu_custom_call.1} parent=1 // pred_fallthru
      _
    %5314 = vsyncpa [#allocation8], 1
    %5315 = vsyncpa [#allocation11], 1
    %5316 = vsyncpa [#allocation9], 1
  %5317 = vsyncmov [#allocation6]
  %s5318 = vpop.sfrf %5317
  %p5319 = scmp.eq.s32.totalorder %s5318, 0
  %p5320 = pneg %p5319
  %5322 = shalt.err (%p5320)
  %s5323 = scalar_lea.sflag [#allocation6], 1
  %5324 = vsyncmov %s5323
  %s5325 = vpop.sfrf %5324
  %p5326 = scmp.eq.s32.totalorder %s5325, 0
  %p5327 = pneg %p5326
  %5329 = shalt.err (%p5327)
  %s5330 = scalar_lea.sflag [#allocation6], 2
  %5331 = vsyncmov %s5330
  %s5332 = vpop.sfrf %5331
  %p5333 = scmp.eq.s32.totalorder %s5332, 0
  %p5334 = pneg %p5333
  %5336 = shalt.err (%p5334)
  %s5337 = scalar_lea.sflag [#allocation6], 3
  %5338 = vsyncmov %s5337
  %s5339 = vpop.sfrf %5338
  %p5340 = scmp.eq.s32.totalorder %s5339, 0
  %p5341 = pneg %p5340
  %5343 = shalt.err (%p5341)

</llo_original>
